<compile_context>
chip_gen: v7x
topology: tpu7x:2x2x1
jax: 0.10.0
libtpu: 0.0.40
codegen_flags: <defaults>
</compile_context>

<pallas_src>
import math
from functools import partial

import jax
import jax.numpy as jnp
from jax.experimental import pallas as pl
from jax.experimental.pallas import tpu as pltpu

# ----------------- small config (consistent with DiffNILMBackbone args) -------
B = 2            # batch
L = 128          # sequence length
C_EMB = 3        # timestamp encoding channels (hour / dow / month)
RES_LAYERS = 4   # residual_layers (small)
RES_CH = 32      # residual_channels (small)
DIL_CYCLE = 2    # dilation_cycle_length
POS_EMB_CH = 32  # pos_emb_channels
POS_EMB_SCALE = 50000.0
POS_EMB_DIM = 64  # pos_emb_dim
MAX_STEP = 1000   # diffusion training steps

DILATIONS = tuple(2 ** (i % DIL_CYCLE) for i in range(RES_LAYERS))
_UNIQ_D = sorted(set(DILATIONS))
# dilation groups: the agg-conditioning conv matmul is shared per unique dilation
GROUPS = [(d, tuple(i for i, dd in enumerate(DILATIONS) if dd == d)) for d in _UNIQ_D]
assert len({len(idx) for _, idx in GROUPS}) == 1, "group packing assumes equal group sizes"
GROUP_SIZE = len(GROUPS[0][1])
LAYER_POS = {}
for _g, (_d, _idx) in enumerate(GROUPS):
    for _j, _i in enumerate(_idx):
        LAYER_POS[_i] = (_g, _j)


def _nonlin_bf16_default():
    # bf16 sigmoid/tanh/SiLU only pays off where the VPU/EUP are bf16-native (v6e/v7x);
    # v5e (and older) have no bf16 elementwise datapath, so keep f32 there.
    try:
        kind = jax.devices()[0].device_kind.lower()
    except Exception:
        return True
    return not any(t in kind for t in ("v2", "v3", "v4", "v5"))


NONLIN_BF16 = _nonlin_bf16_default()


# ----------------------------- fused Pallas kernel -----------------------------
def fused_forward_kernel(nonlin_bf16,
                         x_ref, agg_ref, ts_ref, nl_ref, eps_ref,
                         w_in_ref, b_in_ref, w_agg_ref, b_agg_ref,
                         w_time_ref, b_time_ref,
                         exp_ref, emb_w1_ref, emb_b1_ref, emb_w2t_ref, emb_b2_ref,
                         w_diff_ref, b_diff_ref,
                         w_cy_ref, w_cagg_ref, b_conv_ref,
                         w_out_ref, b_out_ref,
                         w_skip_ref, b_skip_ref, w_last_ref, b_last_ref,
                         loss_ref):
    C = RES_CH
    f32 = jnp.float32
    bf16 = jnp.bfloat16

    def act_silu(v):
        # big (C, L) SiLUs: bf16 EUP/VPU path on v6e/v7x, f32 on v5e; accumulate in f32
        if nonlin_bf16:
            vb = v.astype(bf16)
            return (vb * jax.nn.sigmoid(vb)).astype(f32)
        return v * jax.nn.sigmoid(v)

    # ---- q_sample (training-mode noising), one sequence per grid step ----
    nl = nl_ref[0]                                            # (1, 1)
    x_v = x_ref[0]                                            # (1, L)
    eps_v = eps_ref[0]                                        # (1, L)
    y_noisy = nl * x_v + jnp.sqrt(1.0 - nl * nl) * eps_v      # (1, L)

    # ---- frontend 1x1 convs (channels-first: C on sublanes, L lane-dense) ----
    x0 = act_silu(w_in_ref[...] * y_noisy + b_in_ref[...])    # (C, L)
    ts = ts_ref[0]                                            # (3, L), channels-first
    wt = w_time_ref[...]                                      # (C, 3)
    t_proj = (wt[:, 0:1] * ts[0:1, :] + wt[:, 1:2] * ts[1:2, :]
              + wt[:, 2:3] * ts[2:3, :] + b_time_ref[...])    # (C, L) -- 3 VPU FMAs
    x_agg = act_silu(w_agg_ref[...] * agg_ref[0] + b_agg_ref[...] + t_proj)   # (C, L)

    # ---- diffusion embedding (tiny; multiply+reduce, no N=1 matmuls / transposes) ----
    pe = POS_EMB_SCALE * nl * exp_ref[...]                            # (1, half)
    pe = jnp.concatenate([jnp.sin(pe), jnp.cos(pe)], axis=1)          # (1, POS_EMB_CH)
    e1 = jnp.sum(emb_w1_ref[...] * pe, axis=1, keepdims=True) + emb_b1_ref[...]      # (64, 1)
    e1 = e1 * jax.nn.sigmoid(e1)
    nemb = jnp.sum(emb_w2t_ref[...] * e1, axis=0, keepdims=True) + emb_b2_ref[...]   # (1, 64)
    nemb = nemb * jax.nn.sigmoid(nemb)
    nl_cols = jnp.sum(w_diff_ref[...] * nemb, axis=1, keepdims=True) + b_diff_ref[...]  # (4C, 1)

    # ---- dilated-conv taps: lane roll + (1, L) masks (1 vreg each), sublane concat ----
    idx_l = jax.lax.broadcasted_iota(jnp.int32, (1, L), 1)
    masks = {d: (idx_l >= d, idx_l < (L - d)) for d in _UNIQ_D}

    def taps3(v, d):
        mp, mm = masks[d]
        tp = jnp.where(mp, pltpu.roll(v, shift=d, axis=1), 0.0)        # z[:, l] = v[:, l-d]
        tm = jnp.where(mm, pltpu.roll(v, shift=L - d, axis=1), 0.0)    # z[:, l] = v[:, l+d]
        return jnp.concatenate([tp, v, tm], axis=0)                    # (3C, L), sublane concat

    # ---- agg-conditioning conv halves hoisted off the serial layer chain ----
    # one lane-dense (GS*2C, 3C) @ (3C, L) matmul per unique dilation
    agg_gf = {}
    for g, (d, _idxs) in enumerate(GROUPS):
        slab = taps3(x_agg, d).astype(bf16)                            # (3C, L)
        agg_gf[d] = jnp.dot(w_cagg_ref[g], slab, preferred_element_type=f32)   # (GS*2C, L)

    # ---- residual blocks (unrolled, VMEM resident) ----
    inv_sqrt2 = 1.0 / math.sqrt(2.0)
    xi = x0
    skip_acc = jnp.zeros((C, L), f32)
    for i, d in enumerate(DILATIONS):
        _g, j = LAYER_POS[i]
        y = xi + nl_cols[i * C:(i + 1) * C, :]                         # (C, L)
        y_slab = taps3(y, d).astype(bf16)                              # (3C, L)
        gf = jnp.dot(w_cy_ref[i], y_slab, preferred_element_type=f32)  # (2C, L) = [gate|filt]
        gf = gf + agg_gf[d][2 * C * j:2 * C * (j + 1), :] + b_conv_ref[i]
        if nonlin_bf16:
            gfb = gf.astype(bf16)
            h = jax.nn.sigmoid(gfb[:C, :]) * jnp.tanh(gfb[C:, :])      # bf16 gate
        else:
            h = (jax.nn.sigmoid(gf[:C, :]) * jnp.tanh(gf[C:, :])).astype(bf16)
        rs = jnp.dot(w_out_ref[i], h, preferred_element_type=f32) + b_out_ref[i]   # (2C, L)
        xi = (xi + rs[:C, :]) * inv_sqrt2
        skip_acc = skip_acc + rs[C:, :]

    # ---- tail: skip_projection -> SiLU -> output_projection ----
    s_mm = (skip_acc * (1.0 / math.sqrt(RES_LAYERS))).astype(bf16)
    hs = jnp.dot(w_skip_ref[...], s_mm, preferred_element_type=f32) + b_skip_ref[...]
    hs = act_silu(hs)                                                  # (C, L) f32
    pred = jnp.sum(w_last_ref[...] * hs, axis=0, keepdims=True) + b_last_ref[...]   # (1, L)

    # ---- per-sequence lognorm term; batch mean taken outside ----
    d_abs = jnp.abs(pred - eps_v)
    m = jnp.maximum(jnp.mean(d_abs, axis=1, keepdims=True), 1e-20)
    loss_ref[...] = jnp.log(m).reshape(1, 1, 1)


def _full_spec(shape):
    nd = len(shape)
    return pl.BlockSpec(shape, lambda b, _nd=nd: (0,) * _nd)


def call_fused(p, x, agg, ts, noise_level, eps):
    bf16 = jnp.bfloat16
    batch_ins = [x[:, None, :], agg[:, None, :], ts,
                 noise_level.reshape(B, 1, 1), eps[:, None, :]]
    weight_ins = [
        p['w_in'], p['b_in'], p['w_agg'], p['b_agg'], p['w_time'], p['b_time'],
        p['exponents'], p['emb_w1'], p['emb_b1'], p['emb_w2t'], p['emb_b2'],
        p['w_diff_all'], p['b_diff_all'],
        p['w_conv_y_all'].astype(bf16), p['w_conv_agg_grp'].astype(bf16),
        p['b_conv_all'],
        p['w_out_all'].astype(bf16), p['b_out_all'],
        p['w_skip'].astype(bf16), p['b_skip'],
        p['w_last'], p['b_last'],
    ]
    batch_specs = [
        pl.BlockSpec((1, 1, L), lambda b: (b, 0, 0)),
        pl.BlockSpec((1, 1, L), lambda b: (b, 0, 0)),
        pl.BlockSpec((1, C_EMB, L), lambda b: (b, 0, 0)),
        pl.BlockSpec((1, 1, 1), lambda b: (b, 0, 0)),
        pl.BlockSpec((1, 1, L), lambda b: (b, 0, 0)),
    ]
    weight_specs = [_full_spec(w.shape) for w in weight_ins]
    out = pl.pallas_call(
        partial(fused_forward_kernel, NONLIN_BF16),
        grid=(B,),
        out_shape=jax.ShapeDtypeStruct((B, 1, 1), jnp.float32),
        in_specs=batch_specs + weight_specs,
        out_specs=pl.BlockSpec((1, 1, 1), lambda b: (b, 0, 0)),
        compiler_params=pltpu.CompilerParams(dimension_semantics=("parallel",)),
        cost_estimate=pl.CostEstimate(flops=35_000_000, transcendentals=100_000,
                                      bytes_accessed=250_000),
    )(*batch_ins, *weight_ins)
    return out   # (B, 1, 1) per-sequence log terms


# ----------------------------- model glue (plain JAX) ---------------------------
def _prepare(p, agg_full, x_full, key):
    """DiffNILM.forward (training): batch = (agg, x, status); RNG + noise level."""
    x = x_full[:, 0, :]                                  # (B, L)
    ts = agg_full[:, 1:, :]                              # (B, 3, L) channels-first (no transpose)
    agg = agg_full[:, 0, :]                              # (B, L)
    k_step, k_rand, k_eps = jax.random.split(key, 3)
    step = jax.random.randint(k_step, (B,), 0, MAX_STEP) + 1
    rand = jax.random.uniform(k_rand, (B,), dtype=jnp.float32)
    sacp = p['sqrt_alphas_cumprod_prev']
    noise_level = sacp[step - 1] * rand + sacp[step] * (1.0 - rand)   # (B,)
    eps = jax.random.normal(k_eps, x.shape, dtype=jnp.float32)
    return x, agg, ts, noise_level, eps


def diffnilm_forward_train(p, agg_full, x_full, key):
    x, agg, ts, noise_level, eps = _prepare(p, agg_full, x_full, key)
    per_seq = call_fused(p, x, agg, ts, noise_level, eps)   # (B, 1, 1)
    return jnp.mean(per_seq)


# ----------------------------- pure-JAX reference --------------------------------
def _shift_cl(v, s):
    """z[..., l] = v[..., l - s] with zero padding along the last (time) axis."""
    if s == 0:
        return v
    n = v.shape[-1]
    if s > 0:
        return jnp.pad(v, ((0, 0), (0, 0), (s, 0)))[..., :n]
    return jnp.pad(v, ((0, 0), (0, 0), (0, -s)))[..., -s:]


def reference_forward_train(p, agg_full, x_full, key):
    hp = jax.lax.Precision.HIGHEST
    C = RES_CH
    x, agg, ts, noise_level, eps = _prepare(p, agg_full, x_full, key)
    nl = noise_level[:, None]                                   # (B, 1)
    y_noisy = nl * x + jnp.sqrt(1.0 - nl * nl) * eps            # (B, L)
    x0 = jax.nn.silu(p['w_in'][None] * y_noisy[:, None, :] + p['b_in'][None])      # (B, C, L)
    t_proj = jnp.einsum('ck,bkl->bcl', p['w_time'], ts, precision=hp) + p['b_time'][None]
    x_agg = jax.nn.silu(p['w_agg'][None] * agg[:, None, :] + p['b_agg'][None] + t_proj)

    pe = POS_EMB_SCALE * nl * p['exponents']                    # (B, half)
    pe = jnp.concatenate([jnp.sin(pe), jnp.cos(pe)], axis=-1)   # (B, POS_EMB_CH)
    e1 = jax.nn.silu(jnp.dot(pe, p['emb_w1'].T, precision=hp) + p['emb_b1'][:, 0][None])
    nemb = jax.nn.silu(jnp.dot(e1, p['emb_w2t'], precision=hp) + p['emb_b2'])
    nl_all = jnp.dot(nemb, p['w_diff_all'].T, precision=hp) + p['b_diff_all'][:, 0][None]   # (B, 4C)

    xi = x0
    skip = jnp.zeros_like(x0)
    for i, d in enumerate(DILATIONS):
        nl_i = nl_all[:, i * C:(i + 1) * C]
        y = xi + nl_i[:, :, None]
        taps_y = jnp.concatenate([_shift_cl(y, d), y, _shift_cl(y, -d)], axis=1)
        taps_a = jnp.concatenate([_shift_cl(x_agg, d), x_agg, _shift_cl(x_agg, -d)], axis=1)
        gf = (jnp.einsum('ok,bkl->bol', p['w_conv_y_all'][i], taps_y, precision=hp)
              + jnp.einsum('ok,bkl->bol', p['w_conv_agg_all'][i], taps_a, precision=hp)
              + p['b_conv_all'][i][None])
        h = jax.nn.sigmoid(gf[:, :C]) * jnp.tanh(gf[:, C:])
        rs = jnp.einsum('ok,bkl->bol', p['w_out_all'][i], h, precision=hp) + p['b_out_all'][i][None]
        xi = (xi + rs[:, :C]) / math.sqrt(2.0)
        skip = skip + rs[:, C:]

    s = skip / math.sqrt(RES_LAYERS)
    hs = jax.nn.silu(jnp.einsum('ok,bkl->bol', p['w_skip'], s, precision=hp) + p['b_skip'][None])
    pred = jnp.einsum('c,bcl->bl', p['w_last'][:, 0], hs, precision=hp) + p['b_last'][0, 0]
    d_abs = jnp.abs(pred - eps)
    m = jnp.maximum(jnp.mean(d_abs, axis=-1), 1e-20)
    return jnp.mean(jnp.log(m))


# ----------------------------- parameter init ------------------------------------
def init_params(key):
    keys = iter(jax.random.split(key, 64))
    C = RES_CH

    def nrm(shape, fan_in):
        return jax.random.normal(next(keys), shape, jnp.float32) * math.sqrt(2.0 / fan_in)

    def small(shape):
        return 0.01 * jax.random.normal(next(keys), shape, jnp.float32)

    p = {}
    # frontend 1x1 convs, channels-first (C_out, C_in)
    p['w_in'] = nrm((C, 1), 1)
    p['b_in'] = small((C, 1))
    p['w_agg'] = nrm((C, 1), 1)
    p['b_agg'] = small((C, 1))
    p['w_time'] = nrm((C, C_EMB), C_EMB)
    p['b_time'] = small((C, 1))
    # diffusion embedding
    half = POS_EMB_CH // 2
    p['exponents'] = (0.0001 ** (jnp.arange(half, dtype=jnp.float32) / half)).reshape(1, half)
    p['emb_w1'] = nrm((POS_EMB_DIM, POS_EMB_CH), POS_EMB_CH)        # (out, in)
    p['emb_b1'] = small((POS_EMB_DIM, 1))
    p['emb_w2t'] = nrm((POS_EMB_DIM, POS_EMB_DIM), POS_EMB_DIM)     # stored (in, out)
    p['emb_b2'] = small((1, POS_EMB_DIM))
    # residual blocks -- pre-packed for the fused kernel
    wd, bd, wcy, wca, bc, wo, bo = [], [], [], [], [], [], []
    for _ in range(RES_LAYERS):
        wd.append(nrm((C, POS_EMB_DIM), POS_EMB_DIM))
        bd.append(small((C, 1)))
        # dilated_conv / agg_projection (K=3, C -> 2C), tap-major columns (2C, 3C)
        wcy.append(nrm((2 * C, 3, C), 3 * C).reshape(2 * C, 3 * C))
        wca.append(nrm((2 * C, 3, C), 3 * C).reshape(2 * C, 3 * C))
        bc.append(small((2 * C, 1)) + small((2 * C, 1)))            # bdil + bagg pre-summed
        wo.append(nrm((2 * C, C), C))                               # output_projection (C -> 2C)
        bo.append(small((2 * C, 1)))
    p['w_diff_all'] = jnp.concatenate(wd, axis=0)                   # (RES_LAYERS*C, POS_EMB_DIM)
    p['b_diff_all'] = jnp.concatenate(bd, axis=0)                   # (RES_LAYERS*C, 1)
    p['w_conv_y_all'] = jnp.stack(wcy)                              # (RES_LAYERS, 2C, 3C)
    p['w_conv_agg_all'] = jnp.stack(wca)                            # (RES_LAYERS, 2C, 3C) (reference)
    # agg-conditioning halves re-packed per dilation group (hoisted, lane-dense matmuls)
    p['w_conv_agg_grp'] = jnp.stack(
        [jnp.concatenate([wca[i] for i in idxs], axis=0) for _, idxs in GROUPS])  # (NG, GS*2C, 3C)
    p['b_conv_all'] = jnp.stack(bc)                                 # (RES_LAYERS, 2C, 1)
    p['w_out_all'] = jnp.stack(wo)                                  # (RES_LAYERS, 2C, C)
    p['b_out_all'] = jnp.stack(bo)                                  # (RES_LAYERS, 2C, 1)
    # tail
    p['w_skip'] = nrm((C, C), C)
    p['b_skip'] = small((C, 1))
    p['w_last'] = nrm((C, 1), C)                                    # Conv1d(C, 1, 1) weight, column
    p['b_last'] = small((1, 1))
    # noise schedule buffers (training mode)
    betas = jnp.linspace(1e-6, 0.006, MAX_STEP)
    alphas_cumprod = jnp.cumprod(1.0 - betas)
    p['sqrt_alphas_cumprod_prev'] = jnp.sqrt(
        jnp.concatenate([jnp.ones((1,), jnp.float32), alphas_cumprod]))
    return p


# ----------------------------------- main ----------------------------------------
if __name__ == "__main__":
    root = jax.random.PRNGKey(0)
    k_params, k_agg, k_x, k_fwd = jax.random.split(root, 4)
    params = init_params(k_params)

    # batch layout matches DiffNILM.forward(training): agg_full = (B, 1 + c_embedding, L)
    agg_full = jax.random.normal(k_agg, (B, 1 + C_EMB, L), jnp.float32)
    x_full = jax.random.normal(k_x, (B, 1, L), jnp.float32)

    loss = jax.jit(diffnilm_forward_train)(params, agg_full, x_full, k_fwd)
    jax.block_until_ready(loss)
    assert jnp.isfinite(loss)

    # cross-check the fused Pallas kernel against a pure-JAX f32 reference forward
    ref = jax.jit(reference_forward_train)(params, agg_full, x_full, k_fwd)
    jax.block_until_ready(ref)
    # kernel uses bf16 MXU operands (and bf16 nonlinearities on v6e/v7x) -> loose tolerance
    assert jnp.allclose(loss, ref, rtol=5e-2, atol=5e-2), (float(loss), float(ref))

    print("KERNEL_OK")
</pallas_src>

<mosaic_0001>
module attributes {stable_mosaic.version = 11 : i64} {
  func.func @fused_forward_kernel(%arg0: i32, %arg1: memref<1x1x128xf32, #tpu.memory_space<vmem>>, %arg2: memref<1x1x128xf32, #tpu.memory_space<vmem>>, %arg3: memref<1x3x128xf32, #tpu.memory_space<vmem>>, %arg4: memref<1x1x1xf32, #tpu.memory_space<vmem>>, %arg5: memref<1x1x128xf32, #tpu.memory_space<vmem>>, %arg6: memref<32x1xf32, #tpu.memory_space<vmem>>, %arg7: memref<32x1xf32, #tpu.memory_space<vmem>>, %arg8: memref<32x1xf32, #tpu.memory_space<vmem>>, %arg9: memref<32x1xf32, #tpu.memory_space<vmem>>, %arg10: memref<32x3xf32, #tpu.memory_space<vmem>>, %arg11: memref<32x1xf32, #tpu.memory_space<vmem>>, %arg12: memref<1x16xf32, #tpu.memory_space<vmem>>, %arg13: memref<64x32xf32, #tpu.memory_space<vmem>>, %arg14: memref<64x1xf32, #tpu.memory_space<vmem>>, %arg15: memref<64x64xf32, #tpu.memory_space<vmem>>, %arg16: memref<1x64xf32, #tpu.memory_space<vmem>>, %arg17: memref<128x64xf32, #tpu.memory_space<vmem>>, %arg18: memref<128x1xf32, #tpu.memory_space<vmem>>, %arg19: memref<4x64x96xbf16, #tpu.memory_space<vmem>>, %arg20: memref<2x128x96xbf16, #tpu.memory_space<vmem>>, %arg21: memref<4x64x1xf32, #tpu.memory_space<vmem>>, %arg22: memref<4x64x32xbf16, #tpu.memory_space<vmem>>, %arg23: memref<4x64x1xf32, #tpu.memory_space<vmem>>, %arg24: memref<32x32xbf16, #tpu.memory_space<vmem>>, %arg25: memref<32x1xf32, #tpu.memory_space<vmem>>, %arg26: memref<32x1xf32, #tpu.memory_space<vmem>>, %arg27: memref<1x1xf32, #tpu.memory_space<vmem>>, %arg28: memref<1x1x1xf32, #tpu.memory_space<vmem>>) attributes {dimension_semantics = [#tpu.dimension_semantics<parallel>], iteration_bounds = array<i64: 2>, scalar_prefetch = 0 : i64, scratch_operands = 0 : i64, tpu.core_type = #tpu.core_type<tc>, window_params = [{transform_indices = @transform_0, window_bounds = array<i64: 1, 1, 128>}, {transform_indices = @transform_1, window_bounds = array<i64: 1, 1, 128>}, {transform_indices = @transform_2, window_bounds = array<i64: 1, 3, 128>}, {transform_indices = @transform_3, window_bounds = array<i64: 1, 1, 1>}, {transform_indices = @transform_4, window_bounds = array<i64: 1, 1, 128>}, {pipeline_mode = #tpu.pipeline_mode<synchronous>, transform_indices = @transform_5, window_bounds = array<i64: 32, 1>}, {pipeline_mode = #tpu.pipeline_mode<synchronous>, transform_indices = @transform_6, window_bounds = array<i64: 32, 1>}, {pipeline_mode = #tpu.pipeline_mode<synchronous>, transform_indices = @transform_7, window_bounds = array<i64: 32, 1>}, {pipeline_mode = #tpu.pipeline_mode<synchronous>, transform_indices = @transform_8, window_bounds = array<i64: 32, 1>}, {pipeline_mode = #tpu.pipeline_mode<synchronous>, transform_indices = @transform_9, window_bounds = array<i64: 32, 3>}, {pipeline_mode = #tpu.pipeline_mode<synchronous>, transform_indices = @transform_10, window_bounds = array<i64: 32, 1>}, {pipeline_mode = #tpu.pipeline_mode<synchronous>, transform_indices = @transform_11, window_bounds = array<i64: 1, 16>}, {pipeline_mode = #tpu.pipeline_mode<synchronous>, transform_indices = @transform_12, window_bounds = array<i64: 64, 32>}, {pipeline_mode = #tpu.pipeline_mode<synchronous>, transform_indices = @transform_13, window_bounds = array<i64: 64, 1>}, {pipeline_mode = #tpu.pipeline_mode<synchronous>, transform_indices = @transform_14, window_bounds = array<i64: 64, 64>}, {pipeline_mode = #tpu.pipeline_mode<synchronous>, transform_indices = @transform_15, window_bounds = array<i64: 1, 64>}, {pipeline_mode = #tpu.pipeline_mode<synchronous>, transform_indices = @transform_16, window_bounds = array<i64: 128, 64>}, {pipeline_mode = #tpu.pipeline_mode<synchronous>, transform_indices = @transform_17, window_bounds = array<i64: 128, 1>}, {pipeline_mode = #tpu.pipeline_mode<synchronous>, transform_indices = @transform_18, window_bounds = array<i64: 4, 64, 96>}, {pipeline_mode = #tpu.pipeline_mode<synchronous>, transform_indices = @transform_19, window_bounds = array<i64: 2, 128, 96>}, {pipeline_mode = #tpu.pipeline_mode<synchronous>, transform_indices = @transform_20, window_bounds = array<i64: 4, 64, 1>}, {pipeline_mode = #tpu.pipeline_mode<synchronous>, transform_indices = @transform_21, window_bounds = array<i64: 4, 64, 32>}, {pipeline_mode = #tpu.pipeline_mode<synchronous>, transform_indices = @transform_22, window_bounds = array<i64: 4, 64, 1>}, {pipeline_mode = #tpu.pipeline_mode<synchronous>, transform_indices = @transform_23, window_bounds = array<i64: 32, 32>}, {pipeline_mode = #tpu.pipeline_mode<synchronous>, transform_indices = @transform_24, window_bounds = array<i64: 32, 1>}, {pipeline_mode = #tpu.pipeline_mode<synchronous>, transform_indices = @transform_25, window_bounds = array<i64: 32, 1>}, {pipeline_mode = #tpu.pipeline_mode<synchronous>, transform_indices = @transform_26, window_bounds = array<i64: 1, 1>}, {transform_indices = @transform_27, window_bounds = array<i64: 1, 1, 1>}]} {
    %c0 = arith.constant 0 : index
    %c0_0 = arith.constant 0 : index
    %c0_1 = arith.constant 0 : index
    %0 = vector.load %arg4[%c0, %c0_0, %c0_1] : memref<1x1x1xf32, #tpu.memory_space<vmem>>, vector<1x1x1xf32>
    %1 = vector.shape_cast %0 : vector<1x1x1xf32> to vector<1x1xf32>
    %c0_2 = arith.constant 0 : index
    %c0_3 = arith.constant 0 : index
    %c0_4 = arith.constant 0 : index
    %2 = vector.load %arg1[%c0_2, %c0_3, %c0_4] : memref<1x1x128xf32, #tpu.memory_space<vmem>>, vector<1x1x128xf32>
    %3 = vector.shape_cast %2 : vector<1x1x128xf32> to vector<1x128xf32>
    %c0_5 = arith.constant 0 : index
    %c0_6 = arith.constant 0 : index
    %c0_7 = arith.constant 0 : index
    %4 = vector.load %arg5[%c0_5, %c0_6, %c0_7] : memref<1x1x128xf32, #tpu.memory_space<vmem>>, vector<1x1x128xf32>
    %5 = vector.shape_cast %4 : vector<1x1x128xf32> to vector<1x128xf32>
    %6 = vector.broadcast %1 : vector<1x1xf32> to vector<1x128xf32>
    %7 = arith.mulf %6, %3 : vector<1x128xf32>
    %8 = arith.mulf %1, %1 : vector<1x1xf32>
    %cst = arith.constant 1.000000e+00 : f32
    %9 = vector.broadcast %cst : f32 to vector<1x1xf32>
    %10 = arith.subf %9, %8 : vector<1x1xf32>
    %11 = math.sqrt %10 : vector<1x1xf32>
    %12 = vector.broadcast %11 : vector<1x1xf32> to vector<1x128xf32>
    %13 = arith.mulf %12, %5 : vector<1x128xf32>
    %14 = arith.addf %7, %13 : vector<1x128xf32>
    %c0_8 = arith.constant 0 : index
    %c0_9 = arith.constant 0 : index
    %15 = vector.load %arg6[%c0_8, %c0_9] : memref<32x1xf32, #tpu.memory_space<vmem>>, vector<32x1xf32>
    %16 = vector.broadcast %15 : vector<32x1xf32> to vector<32x128xf32>
    %17 = vector.broadcast %14 : vector<1x128xf32> to vector<32x128xf32>
    %18 = arith.mulf %16, %17 : vector<32x128xf32>
    %c0_10 = arith.constant 0 : index
    %c0_11 = arith.constant 0 : index
    %19 = vector.load %arg7[%c0_10, %c0_11] : memref<32x1xf32, #tpu.memory_space<vmem>>, vector<32x1xf32>
    %20 = vector.broadcast %19 : vector<32x1xf32> to vector<32x128xf32>
    %21 = arith.addf %18, %20 : vector<32x128xf32>
    %22 = arith.truncf %21 : vector<32x128xf32> to vector<32x128xbf16>
    %23 = arith.negf %22 : vector<32x128xbf16>
    %24 = math.exp %23 : vector<32x128xbf16>
    %cst_12 = arith.constant 1.000000e+00 : bf16
    %25 = vector.broadcast %cst_12 : bf16 to vector<32x128xbf16>
    %26 = arith.addf %25, %24 : vector<32x128xbf16>
    %27 = arith.divf %25, %26 : vector<32x128xbf16>
    %28 = arith.mulf %22, %27 : vector<32x128xbf16>
    %29 = arith.extf %28 : vector<32x128xbf16> to vector<32x128xf32>
    %c0_13 = arith.constant 0 : index
    %c0_14 = arith.constant 0 : index
    %c0_15 = arith.constant 0 : index
    %30 = vector.load %arg3[%c0_13, %c0_14, %c0_15] : memref<1x3x128xf32, #tpu.memory_space<vmem>>, vector<1x3x128xf32>
    %31 = vector.shape_cast %30 : vector<1x3x128xf32> to vector<3x128xf32>
    %c0_16 = arith.constant 0 : index
    %c0_17 = arith.constant 0 : index
    %32 = vector.load %arg10[%c0_16, %c0_17] : memref<32x3xf32, #tpu.memory_space<vmem>>, vector<32x3xf32>
    %33 = vector.extract_strided_slice %32 {offsets = [0, 0], sizes = [32, 1], strides = [1, 1]} : vector<32x3xf32> to vector<32x1xf32>
    %34 = vector.extract_strided_slice %31 {offsets = [0, 0], sizes = [1, 128], strides = [1, 1]} : vector<3x128xf32> to vector<1x128xf32>
    %35 = vector.broadcast %33 : vector<32x1xf32> to vector<32x128xf32>
    %36 = vector.broadcast %34 : vector<1x128xf32> to vector<32x128xf32>
    %37 = arith.mulf %35, %36 : vector<32x128xf32>
    %38 = vector.extract_strided_slice %32 {offsets = [0, 1], sizes = [32, 1], strides = [1, 1]} : vector<32x3xf32> to vector<32x1xf32>
    %39 = vector.extract_strided_slice %31 {offsets = [1, 0], sizes = [1, 128], strides = [1, 1]} : vector<3x128xf32> to vector<1x128xf32>
    %40 = vector.broadcast %38 : vector<32x1xf32> to vector<32x128xf32>
    %41 = vector.broadcast %39 : vector<1x128xf32> to vector<32x128xf32>
    %42 = arith.mulf %40, %41 : vector<32x128xf32>
    %43 = arith.addf %37, %42 : vector<32x128xf32>
    %44 = vector.extract_strided_slice %32 {offsets = [0, 2], sizes = [32, 1], strides = [1, 1]} : vector<32x3xf32> to vector<32x1xf32>
    %45 = vector.extract_strided_slice %31 {offsets = [2, 0], sizes = [1, 128], strides = [1, 1]} : vector<3x128xf32> to vector<1x128xf32>
    %46 = vector.broadcast %44 : vector<32x1xf32> to vector<32x128xf32>
    %47 = vector.broadcast %45 : vector<1x128xf32> to vector<32x128xf32>
    %48 = arith.mulf %46, %47 : vector<32x128xf32>
    %49 = arith.addf %43, %48 : vector<32x128xf32>
    %c0_18 = arith.constant 0 : index
    %c0_19 = arith.constant 0 : index
    %50 = vector.load %arg11[%c0_18, %c0_19] : memref<32x1xf32, #tpu.memory_space<vmem>>, vector<32x1xf32>
    %51 = vector.broadcast %50 : vector<32x1xf32> to vector<32x128xf32>
    %52 = arith.addf %49, %51 : vector<32x128xf32>
    %c0_20 = arith.constant 0 : index
    %c0_21 = arith.constant 0 : index
    %53 = vector.load %arg8[%c0_20, %c0_21] : memref<32x1xf32, #tpu.memory_space<vmem>>, vector<32x1xf32>
    %c0_22 = arith.constant 0 : index
    %c0_23 = arith.constant 0 : index
    %c0_24 = arith.constant 0 : index
    %54 = vector.load %arg2[%c0_22, %c0_23, %c0_24] : memref<1x1x128xf32, #tpu.memory_space<vmem>>, vector<1x1x128xf32>
    %55 = vector.shape_cast %54 : vector<1x1x128xf32> to vector<1x128xf32>
    %56 = vector.broadcast %53 : vector<32x1xf32> to vector<32x128xf32>
    %57 = vector.broadcast %55 : vector<1x128xf32> to vector<32x128xf32>
    %58 = arith.mulf %56, %57 : vector<32x128xf32>
    %c0_25 = arith.constant 0 : index
    %c0_26 = arith.constant 0 : index
    %59 = vector.load %arg9[%c0_25, %c0_26] : memref<32x1xf32, #tpu.memory_space<vmem>>, vector<32x1xf32>
    %60 = vector.broadcast %59 : vector<32x1xf32> to vector<32x128xf32>
    %61 = arith.addf %58, %60 : vector<32x128xf32>
    %62 = arith.addf %61, %52 : vector<32x128xf32>
    %63 = arith.truncf %62 : vector<32x128xf32> to vector<32x128xbf16>
    %64 = arith.negf %63 : vector<32x128xbf16>
    %65 = math.exp %64 : vector<32x128xbf16>
    %cst_27 = arith.constant 1.000000e+00 : bf16
    %66 = vector.broadcast %cst_27 : bf16 to vector<32x128xbf16>
    %67 = arith.addf %66, %65 : vector<32x128xbf16>
    %68 = arith.divf %66, %67 : vector<32x128xbf16>
    %69 = arith.mulf %63, %68 : vector<32x128xbf16>
    %70 = arith.extf %69 : vector<32x128xbf16> to vector<32x128xf32>
    %cst_28 = arith.constant 5.000000e+04 : f32
    %71 = vector.broadcast %cst_28 : f32 to vector<1x1xf32>
    %72 = arith.mulf %71, %1 : vector<1x1xf32>
    %c0_29 = arith.constant 0 : index
    %c0_30 = arith.constant 0 : index
    %73 = vector.load %arg12[%c0_29, %c0_30] : memref<1x16xf32, #tpu.memory_space<vmem>>, vector<1x16xf32>
    %74 = vector.broadcast %72 : vector<1x1xf32> to vector<1x16xf32>
    %75 = arith.mulf %74, %73 : vector<1x16xf32>
    %76 = math.sin %75 : vector<1x16xf32>
    %77 = math.cos %75 : vector<1x16xf32>
    %78 = tpu.concatenate %76, %77 in 1 : vector<1x16xf32>, vector<1x16xf32> -> vector<1x32xf32>
    %c0_31 = arith.constant 0 : index
    %c0_32 = arith.constant 0 : index
    %79 = vector.load %arg13[%c0_31, %c0_32] : memref<64x32xf32, #tpu.memory_space<vmem>>, vector<64x32xf32>
    %80 = vector.broadcast %78 : vector<1x32xf32> to vector<64x32xf32>
    %81 = arith.mulf %79, %80 : vector<64x32xf32>
    %cst_33 = arith.constant dense<0.000000e+00> : vector<64xf32>
    %82 = vector.multi_reduction <add>, %81, %cst_33 [1] : vector<64x32xf32> to vector<64xf32>
    %83 = vector.shape_cast %82 : vector<64xf32> to vector<64x1xf32>
    %c0_34 = arith.constant 0 : index
    %c0_35 = arith.constant 0 : index
    %84 = vector.load %arg14[%c0_34, %c0_35] : memref<64x1xf32, #tpu.memory_space<vmem>>, vector<64x1xf32>
    %85 = arith.addf %83, %84 : vector<64x1xf32>
    %86 = arith.negf %85 : vector<64x1xf32>
    %87 = math.exp %86 : vector<64x1xf32>
    %cst_36 = arith.constant 1.000000e+00 : f32
    %88 = vector.broadcast %cst_36 : f32 to vector<64x1xf32>
    %89 = arith.addf %88, %87 : vector<64x1xf32>
    %90 = arith.divf %88, %89 : vector<64x1xf32>
    %91 = arith.mulf %85, %90 : vector<64x1xf32>
    %c0_37 = arith.constant 0 : index
    %c0_38 = arith.constant 0 : index
    %92 = vector.load %arg15[%c0_37, %c0_38] : memref<64x64xf32, #tpu.memory_space<vmem>>, vector<64x64xf32>
    %93 = vector.broadcast %91 : vector<64x1xf32> to vector<64x64xf32>
    %94 = arith.mulf %92, %93 : vector<64x64xf32>
    %cst_39 = arith.constant dense<0.000000e+00> : vector<64xf32>
    %95 = vector.multi_reduction <add>, %94, %cst_39 [0] : vector<64x64xf32> to vector<64xf32>
    %96 = vector.shape_cast %95 : vector<64xf32> to vector<1x64xf32>
    %c0_40 = arith.constant 0 : index
    %c0_41 = arith.constant 0 : index
    %97 = vector.load %arg16[%c0_40, %c0_41] : memref<1x64xf32, #tpu.memory_space<vmem>>, vector<1x64xf32>
    %98 = arith.addf %96, %97 : vector<1x64xf32>
    %99 = arith.negf %98 : vector<1x64xf32>
    %100 = math.exp %99 : vector<1x64xf32>
    %cst_42 = arith.constant 1.000000e+00 : f32
    %101 = vector.broadcast %cst_42 : f32 to vector<1x64xf32>
    %102 = arith.addf %101, %100 : vector<1x64xf32>
    %103 = arith.divf %101, %102 : vector<1x64xf32>
    %104 = arith.mulf %98, %103 : vector<1x64xf32>
    %c0_43 = arith.constant 0 : index
    %c0_44 = arith.constant 0 : index
    %105 = vector.load %arg17[%c0_43, %c0_44] : memref<128x64xf32, #tpu.memory_space<vmem>>, vector<128x64xf32>
    %106 = vector.broadcast %104 : vector<1x64xf32> to vector<128x64xf32>
    %107 = arith.mulf %105, %106 : vector<128x64xf32>
    %cst_45 = arith.constant dense<0.000000e+00> : vector<128xf32>
    %108 = vector.multi_reduction <add>, %107, %cst_45 [1] : vector<128x64xf32> to vector<128xf32>
    %109 = vector.shape_cast %108 : vector<128xf32> to vector<128x1xf32>
    %c0_46 = arith.constant 0 : index
    %c0_47 = arith.constant 0 : index
    %110 = vector.load %arg18[%c0_46, %c0_47] : memref<128x1xf32, #tpu.memory_space<vmem>>, vector<128x1xf32>
    %111 = arith.addf %109, %110 : vector<128x1xf32>
    %112 = tpu.iota {dimensions = array<i32: 1>} : vector<1x128xi32>
    %c1_i32 = arith.constant 1 : i32
    %113 = vector.broadcast %c1_i32 : i32 to vector<1x128xi32>
    %114 = arith.cmpi sge, %112, %113 : vector<1x128xi32>
    %c127_i32 = arith.constant 127 : i32
    %115 = vector.broadcast %c127_i32 : i32 to vector<1x128xi32>
    %116 = arith.cmpi slt, %112, %115 : vector<1x128xi32>
    %c2_i32 = arith.constant 2 : i32
    %117 = vector.broadcast %c2_i32 : i32 to vector<1x128xi32>
    %118 = arith.cmpi sge, %112, %117 : vector<1x128xi32>
    %c126_i32 = arith.constant 126 : i32
    %119 = vector.broadcast %c126_i32 : i32 to vector<1x128xi32>
    %120 = arith.cmpi slt, %112, %119 : vector<1x128xi32>
    %c1_i32_48 = arith.constant 1 : i32
    %121 = tpu.dynamic_rotate %70 by %c1_i32_48 dim 1 : vector<32x128xf32>, i32 -> vector<32x128xf32>
    %cst_49 = arith.constant 0.000000e+00 : f32
    %122 = vector.shape_cast %114 : vector<1x128xi1> to vector<1x128xi1>
    %123 = vector.broadcast %122 : vector<1x128xi1> to vector<32x128xi1>
    %124 = vector.broadcast %cst_49 : f32 to vector<32x128xf32>
    %125 = arith.select %123, %121, %124 : vector<32x128xi1>, vector<32x128xf32>
    %c127_i32_50 = arith.constant 127 : i32
    %126 = tpu.dynamic_rotate %70 by %c127_i32_50 dim 1 : vector<32x128xf32>, i32 -> vector<32x128xf32>
    %cst_51 = arith.constant 0.000000e+00 : f32
    %127 = vector.shape_cast %116 : vector<1x128xi1> to vector<1x128xi1>
    %128 = vector.broadcast %127 : vector<1x128xi1> to vector<32x128xi1>
    %129 = vector.broadcast %cst_51 : f32 to vector<32x128xf32>
    %130 = arith.select %128, %126, %129 : vector<32x128xi1>, vector<32x128xf32>
    %131 = tpu.concatenate %125, %70, %130 in 0 : vector<32x128xf32>, vector<32x128xf32>, vector<32x128xf32> -> vector<96x128xf32>
    %132 = arith.truncf %131 : vector<96x128xf32> to vector<96x128xbf16>
    %c0_52 = arith.constant 0 : index
    %c0_53 = arith.constant 0 : index
    %c0_54 = arith.constant 0 : index
    %133 = vector.load %arg20[%c0_52, %c0_53, %c0_54] : memref<2x128x96xbf16, #tpu.memory_space<vmem>>, vector<1x128x96xbf16>
    %134 = vector.shape_cast %133 : vector<1x128x96xbf16> to vector<128x96xbf16>
    %cst_55 = arith.constant dense<0.000000e+00> : vector<128x128xf32>
    %135 = tpu.matmul %134, %132, %cst_55 {dimension_numbers = #tpu.dot_dimension_numbers<[1], [0], [0], [1], [0, 0, 1, 1], [], []>} : vector<128x96xbf16>, vector<96x128xbf16>, vector<128x128xf32> -> vector<128x128xf32>
    %c2_i32_56 = arith.constant 2 : i32
    %136 = tpu.dynamic_rotate %70 by %c2_i32_56 dim 1 : vector<32x128xf32>, i32 -> vector<32x128xf32>
    %cst_57 = arith.constant 0.000000e+00 : f32
    %137 = vector.shape_cast %118 : vector<1x128xi1> to vector<1x128xi1>
    %138 = vector.broadcast %137 : vector<1x128xi1> to vector<32x128xi1>
    %139 = vector.broadcast %cst_57 : f32 to vector<32x128xf32>
    %140 = arith.select %138, %136, %139 : vector<32x128xi1>, vector<32x128xf32>
    %c126_i32_58 = arith.constant 126 : i32
    %141 = tpu.dynamic_rotate %70 by %c126_i32_58 dim 1 : vector<32x128xf32>, i32 -> vector<32x128xf32>
    %cst_59 = arith.constant 0.000000e+00 : f32
    %142 = vector.shape_cast %120 : vector<1x128xi1> to vector<1x128xi1>
    %143 = vector.broadcast %142 : vector<1x128xi1> to vector<32x128xi1>
    %144 = vector.broadcast %cst_59 : f32 to vector<32x128xf32>
    %145 = arith.select %143, %141, %144 : vector<32x128xi1>, vector<32x128xf32>
    %146 = tpu.concatenate %140, %70, %145 in 0 : vector<32x128xf32>, vector<32x128xf32>, vector<32x128xf32> -> vector<96x128xf32>
    %147 = arith.truncf %146 : vector<96x128xf32> to vector<96x128xbf16>
    %c1 = arith.constant 1 : index
    %c0_60 = arith.constant 0 : index
    %c0_61 = arith.constant 0 : index
    %148 = vector.load %arg20[%c1, %c0_60, %c0_61] : memref<2x128x96xbf16, #tpu.memory_space<vmem>>, vector<1x128x96xbf16>
    %149 = vector.shape_cast %148 : vector<1x128x96xbf16> to vector<128x96xbf16>
    %cst_62 = arith.constant dense<0.000000e+00> : vector<128x128xf32>
    %150 = tpu.matmul %149, %147, %cst_62 {dimension_numbers = #tpu.dot_dimension_numbers<[1], [0], [0], [1], [0, 0, 1, 1], [], []>} : vector<128x96xbf16>, vector<96x128xbf16>, vector<128x128xf32> -> vector<128x128xf32>
    %cst_63 = arith.constant 0.000000e+00 : f32
    %151 = vector.broadcast %cst_63 : f32 to vector<32x128xf32>
    %152 = vector.extract_strided_slice %111 {offsets = [0, 0], sizes = [32, 1], strides = [1, 1]} : vector<128x1xf32> to vector<32x1xf32>
    %153 = vector.broadcast %152 : vector<32x1xf32> to vector<32x128xf32>
    %154 = arith.addf %29, %153 : vector<32x128xf32>
    %c1_i32_64 = arith.constant 1 : i32
    %155 = tpu.dynamic_rotate %154 by %c1_i32_64 dim 1 : vector<32x128xf32>, i32 -> vector<32x128xf32>
    %cst_65 = arith.constant 0.000000e+00 : f32
    %156 = vector.shape_cast %114 : vector<1x128xi1> to vector<1x128xi1>
    %157 = vector.broadcast %156 : vector<1x128xi1> to vector<32x128xi1>
    %158 = vector.broadcast %cst_65 : f32 to vector<32x128xf32>
    %159 = arith.select %157, %155, %158 : vector<32x128xi1>, vector<32x128xf32>
    %c127_i32_66 = arith.constant 127 : i32
    %160 = tpu.dynamic_rotate %154 by %c127_i32_66 dim 1 : vector<32x128xf32>, i32 -> vector<32x128xf32>
    %cst_67 = arith.constant 0.000000e+00 : f32
    %161 = vector.shape_cast %116 : vector<1x128xi1> to vector<1x128xi1>
    %162 = vector.broadcast %161 : vector<1x128xi1> to vector<32x128xi1>
    %163 = vector.broadcast %cst_67 : f32 to vector<32x128xf32>
    %164 = arith.select %162, %160, %163 : vector<32x128xi1>, vector<32x128xf32>
    %165 = tpu.concatenate %159, %154, %164 in 0 : vector<32x128xf32>, vector<32x128xf32>, vector<32x128xf32> -> vector<96x128xf32>
    %166 = arith.truncf %165 : vector<96x128xf32> to vector<96x128xbf16>
    %c0_68 = arith.constant 0 : index
    %c0_69 = arith.constant 0 : index
    %c0_70 = arith.constant 0 : index
    %167 = vector.load %arg19[%c0_68, %c0_69, %c0_70] : memref<4x64x96xbf16, #tpu.memory_space<vmem>>, vector<1x64x96xbf16>
    %168 = vector.shape_cast %167 : vector<1x64x96xbf16> to vector<64x96xbf16>
    %cst_71 = arith.constant dense<0.000000e+00> : vector<64x128xf32>
    %169 = tpu.matmul %168, %166, %cst_71 {dimension_numbers = #tpu.dot_dimension_numbers<[1], [0], [0], [1], [0, 0, 1, 1], [], []>} : vector<64x96xbf16>, vector<96x128xbf16>, vector<64x128xf32> -> vector<64x128xf32>
    %170 = vector.extract_strided_slice %135 {offsets = [0, 0], sizes = [64, 128], strides = [1, 1]} : vector<128x128xf32> to vector<64x128xf32>
    %171 = arith.addf %169, %170 : vector<64x128xf32>
    %c0_72 = arith.constant 0 : index
    %c0_73 = arith.constant 0 : index
    %c0_74 = arith.constant 0 : index
    %172 = vector.load %arg21[%c0_72, %c0_73, %c0_74] : memref<4x64x1xf32, #tpu.memory_space<vmem>>, vector<1x64x1xf32>
    %173 = vector.shape_cast %172 : vector<1x64x1xf32> to vector<64x1xf32>
    %174 = vector.broadcast %173 : vector<64x1xf32> to vector<64x128xf32>
    %175 = arith.addf %171, %174 : vector<64x128xf32>
    %176 = arith.truncf %175 : vector<64x128xf32> to vector<64x128xbf16>
    %177 = vector.extract_strided_slice %176 {offsets = [0, 0], sizes = [32, 128], strides = [1, 1]} : vector<64x128xbf16> to vector<32x128xbf16>
    %178 = arith.negf %177 : vector<32x128xbf16>
    %179 = math.exp %178 : vector<32x128xbf16>
    %cst_75 = arith.constant 1.000000e+00 : bf16
    %180 = vector.broadcast %cst_75 : bf16 to vector<32x128xbf16>
    %181 = arith.addf %180, %179 : vector<32x128xbf16>
    %182 = arith.divf %180, %181 : vector<32x128xbf16>
    %183 = vector.extract_strided_slice %176 {offsets = [32, 0], sizes = [32, 128], strides = [1, 1]} : vector<64x128xbf16> to vector<32x128xbf16>
    %184 = math.tanh %183 : vector<32x128xbf16>
    %185 = arith.mulf %182, %184 : vector<32x128xbf16>
    %c0_76 = arith.constant 0 : index
    %c0_77 = arith.constant 0 : index
    %c0_78 = arith.constant 0 : index
    %186 = vector.load %arg22[%c0_76, %c0_77, %c0_78] : memref<4x64x32xbf16, #tpu.memory_space<vmem>>, vector<1x64x32xbf16>
    %187 = vector.shape_cast %186 : vector<1x64x32xbf16> to vector<64x32xbf16>
    %cst_79 = arith.constant dense<0.000000e+00> : vector<64x128xf32>
    %188 = tpu.matmul %187, %185, %cst_79 {dimension_numbers = #tpu.dot_dimension_numbers<[1], [0], [0], [1], [0, 0, 1, 1], [], []>} : vector<64x32xbf16>, vector<32x128xbf16>, vector<64x128xf32> -> vector<64x128xf32>
    %c0_80 = arith.constant 0 : index
    %c0_81 = arith.constant 0 : index
    %c0_82 = arith.constant 0 : index
    %189 = vector.load %arg23[%c0_80, %c0_81, %c0_82] : memref<4x64x1xf32, #tpu.memory_space<vmem>>, vector<1x64x1xf32>
    %190 = vector.shape_cast %189 : vector<1x64x1xf32> to vector<64x1xf32>
    %191 = vector.broadcast %190 : vector<64x1xf32> to vector<64x128xf32>
    %192 = arith.addf %188, %191 : vector<64x128xf32>
    %193 = vector.extract_strided_slice %192 {offsets = [0, 0], sizes = [32, 128], strides = [1, 1]} : vector<64x128xf32> to vector<32x128xf32>
    %194 = arith.addf %29, %193 : vector<32x128xf32>
    %cst_83 = arith.constant 0.707106769 : f32
    %195 = vector.broadcast %cst_83 : f32 to vector<32x128xf32>
    %196 = arith.mulf %194, %195 : vector<32x128xf32>
    %197 = vector.extract_strided_slice %192 {offsets = [32, 0], sizes = [32, 128], strides = [1, 1]} : vector<64x128xf32> to vector<32x128xf32>
    %198 = arith.addf %151, %197 : vector<32x128xf32>
    %199 = vector.extract_strided_slice %111 {offsets = [32, 0], sizes = [32, 1], strides = [1, 1]} : vector<128x1xf32> to vector<32x1xf32>
    %200 = vector.broadcast %199 : vector<32x1xf32> to vector<32x128xf32>
    %201 = arith.addf %196, %200 : vector<32x128xf32>
    %c2_i32_84 = arith.constant 2 : i32
    %202 = tpu.dynamic_rotate %201 by %c2_i32_84 dim 1 : vector<32x128xf32>, i32 -> vector<32x128xf32>
    %cst_85 = arith.constant 0.000000e+00 : f32
    %203 = vector.shape_cast %118 : vector<1x128xi1> to vector<1x128xi1>
    %204 = vector.broadcast %203 : vector<1x128xi1> to vector<32x128xi1>
    %205 = vector.broadcast %cst_85 : f32 to vector<32x128xf32>
    %206 = arith.select %204, %202, %205 : vector<32x128xi1>, vector<32x128xf32>
    %c126_i32_86 = arith.constant 126 : i32
    %207 = tpu.dynamic_rotate %201 by %c126_i32_86 dim 1 : vector<32x128xf32>, i32 -> vector<32x128xf32>
    %cst_87 = arith.constant 0.000000e+00 : f32
    %208 = vector.shape_cast %120 : vector<1x128xi1> to vector<1x128xi1>
    %209 = vector.broadcast %208 : vector<1x128xi1> to vector<32x128xi1>
    %210 = vector.broadcast %cst_87 : f32 to vector<32x128xf32>
    %211 = arith.select %209, %207, %210 : vector<32x128xi1>, vector<32x128xf32>
    %212 = tpu.concatenate %206, %201, %211 in 0 : vector<32x128xf32>, vector<32x128xf32>, vector<32x128xf32> -> vector<96x128xf32>
    %213 = arith.truncf %212 : vector<96x128xf32> to vector<96x128xbf16>
    %c1_88 = arith.constant 1 : index
    %c0_89 = arith.constant 0 : index
    %c0_90 = arith.constant 0 : index
    %214 = vector.load %arg19[%c1_88, %c0_89, %c0_90] : memref<4x64x96xbf16, #tpu.memory_space<vmem>>, vector<1x64x96xbf16>
    %215 = vector.shape_cast %214 : vector<1x64x96xbf16> to vector<64x96xbf16>
    %cst_91 = arith.constant dense<0.000000e+00> : vector<64x128xf32>
    %216 = tpu.matmul %215, %213, %cst_91 {dimension_numbers = #tpu.dot_dimension_numbers<[1], [0], [0], [1], [0, 0, 1, 1], [], []>} : vector<64x96xbf16>, vector<96x128xbf16>, vector<64x128xf32> -> vector<64x128xf32>
    %217 = vector.extract_strided_slice %150 {offsets = [0, 0], sizes = [64, 128], strides = [1, 1]} : vector<128x128xf32> to vector<64x128xf32>
    %218 = arith.addf %216, %217 : vector<64x128xf32>
    %c1_92 = arith.constant 1 : index
    %c0_93 = arith.constant 0 : index
    %c0_94 = arith.constant 0 : index
    %219 = vector.load %arg21[%c1_92, %c0_93, %c0_94] : memref<4x64x1xf32, #tpu.memory_space<vmem>>, vector<1x64x1xf32>
    %220 = vector.shape_cast %219 : vector<1x64x1xf32> to vector<64x1xf32>
    %221 = vector.broadcast %220 : vector<64x1xf32> to vector<64x128xf32>
    %222 = arith.addf %218, %221 : vector<64x128xf32>
    %223 = arith.truncf %222 : vector<64x128xf32> to vector<64x128xbf16>
    %224 = vector.extract_strided_slice %223 {offsets = [0, 0], sizes = [32, 128], strides = [1, 1]} : vector<64x128xbf16> to vector<32x128xbf16>
    %225 = arith.negf %224 : vector<32x128xbf16>
    %226 = math.exp %225 : vector<32x128xbf16>
    %cst_95 = arith.constant 1.000000e+00 : bf16
    %227 = vector.broadcast %cst_95 : bf16 to vector<32x128xbf16>
    %228 = arith.addf %227, %226 : vector<32x128xbf16>
    %229 = arith.divf %227, %228 : vector<32x128xbf16>
    %230 = vector.extract_strided_slice %223 {offsets = [32, 0], sizes = [32, 128], strides = [1, 1]} : vector<64x128xbf16> to vector<32x128xbf16>
    %231 = math.tanh %230 : vector<32x128xbf16>
    %232 = arith.mulf %229, %231 : vector<32x128xbf16>
    %c1_96 = arith.constant 1 : index
    %c0_97 = arith.constant 0 : index
    %c0_98 = arith.constant 0 : index
    %233 = vector.load %arg22[%c1_96, %c0_97, %c0_98] : memref<4x64x32xbf16, #tpu.memory_space<vmem>>, vector<1x64x32xbf16>
    %234 = vector.shape_cast %233 : vector<1x64x32xbf16> to vector<64x32xbf16>
    %cst_99 = arith.constant dense<0.000000e+00> : vector<64x128xf32>
    %235 = tpu.matmul %234, %232, %cst_99 {dimension_numbers = #tpu.dot_dimension_numbers<[1], [0], [0], [1], [0, 0, 1, 1], [], []>} : vector<64x32xbf16>, vector<32x128xbf16>, vector<64x128xf32> -> vector<64x128xf32>
    %c1_100 = arith.constant 1 : index
    %c0_101 = arith.constant 0 : index
    %c0_102 = arith.constant 0 : index
    %236 = vector.load %arg23[%c1_100, %c0_101, %c0_102] : memref<4x64x1xf32, #tpu.memory_space<vmem>>, vector<1x64x1xf32>
    %237 = vector.shape_cast %236 : vector<1x64x1xf32> to vector<64x1xf32>
    %238 = vector.broadcast %237 : vector<64x1xf32> to vector<64x128xf32>
    %239 = arith.addf %235, %238 : vector<64x128xf32>
    %240 = vector.extract_strided_slice %239 {offsets = [0, 0], sizes = [32, 128], strides = [1, 1]} : vector<64x128xf32> to vector<32x128xf32>
    %241 = arith.addf %196, %240 : vector<32x128xf32>
    %cst_103 = arith.constant 0.707106769 : f32
    %242 = vector.broadcast %cst_103 : f32 to vector<32x128xf32>
    %243 = arith.mulf %241, %242 : vector<32x128xf32>
    %244 = vector.extract_strided_slice %239 {offsets = [32, 0], sizes = [32, 128], strides = [1, 1]} : vector<64x128xf32> to vector<32x128xf32>
    %245 = arith.addf %198, %244 : vector<32x128xf32>
    %246 = vector.extract_strided_slice %111 {offsets = [64, 0], sizes = [32, 1], strides = [1, 1]} : vector<128x1xf32> to vector<32x1xf32>
    %247 = vector.broadcast %246 : vector<32x1xf32> to vector<32x128xf32>
    %248 = arith.addf %243, %247 : vector<32x128xf32>
    %c1_i32_104 = arith.constant 1 : i32
    %249 = tpu.dynamic_rotate %248 by %c1_i32_104 dim 1 : vector<32x128xf32>, i32 -> vector<32x128xf32>
    %cst_105 = arith.constant 0.000000e+00 : f32
    %250 = vector.shape_cast %114 : vector<1x128xi1> to vector<1x128xi1>
    %251 = vector.broadcast %250 : vector<1x128xi1> to vector<32x128xi1>
    %252 = vector.broadcast %cst_105 : f32 to vector<32x128xf32>
    %253 = arith.select %251, %249, %252 : vector<32x128xi1>, vector<32x128xf32>
    %c127_i32_106 = arith.constant 127 : i32
    %254 = tpu.dynamic_rotate %248 by %c127_i32_106 dim 1 : vector<32x128xf32>, i32 -> vector<32x128xf32>
    %cst_107 = arith.constant 0.000000e+00 : f32
    %255 = vector.shape_cast %116 : vector<1x128xi1> to vector<1x128xi1>
    %256 = vector.broadcast %255 : vector<1x128xi1> to vector<32x128xi1>
    %257 = vector.broadcast %cst_107 : f32 to vector<32x128xf32>
    %258 = arith.select %256, %254, %257 : vector<32x128xi1>, vector<32x128xf32>
    %259 = tpu.concatenate %253, %248, %258 in 0 : vector<32x128xf32>, vector<32x128xf32>, vector<32x128xf32> -> vector<96x128xf32>
    %260 = arith.truncf %259 : vector<96x128xf32> to vector<96x128xbf16>
    %c2 = arith.constant 2 : index
    %c0_108 = arith.constant 0 : index
    %c0_109 = arith.constant 0 : index
    %261 = vector.load %arg19[%c2, %c0_108, %c0_109] : memref<4x64x96xbf16, #tpu.memory_space<vmem>>, vector<1x64x96xbf16>
    %262 = vector.shape_cast %261 : vector<1x64x96xbf16> to vector<64x96xbf16>
    %cst_110 = arith.constant dense<0.000000e+00> : vector<64x128xf32>
    %263 = tpu.matmul %262, %260, %cst_110 {dimension_numbers = #tpu.dot_dimension_numbers<[1], [0], [0], [1], [0, 0, 1, 1], [], []>} : vector<64x96xbf16>, vector<96x128xbf16>, vector<64x128xf32> -> vector<64x128xf32>
    %264 = vector.extract_strided_slice %135 {offsets = [64, 0], sizes = [64, 128], strides = [1, 1]} : vector<128x128xf32> to vector<64x128xf32>
    %265 = arith.addf %263, %264 : vector<64x128xf32>
    %c2_111 = arith.constant 2 : index
    %c0_112 = arith.constant 0 : index
    %c0_113 = arith.constant 0 : index
    %266 = vector.load %arg21[%c2_111, %c0_112, %c0_113] : memref<4x64x1xf32, #tpu.memory_space<vmem>>, vector<1x64x1xf32>
    %267 = vector.shape_cast %266 : vector<1x64x1xf32> to vector<64x1xf32>
    %268 = vector.broadcast %267 : vector<64x1xf32> to vector<64x128xf32>
    %269 = arith.addf %265, %268 : vector<64x128xf32>
    %270 = arith.truncf %269 : vector<64x128xf32> to vector<64x128xbf16>
    %271 = vector.extract_strided_slice %270 {offsets = [0, 0], sizes = [32, 128], strides = [1, 1]} : vector<64x128xbf16> to vector<32x128xbf16>
    %272 = arith.negf %271 : vector<32x128xbf16>
    %273 = math.exp %272 : vector<32x128xbf16>
    %cst_114 = arith.constant 1.000000e+00 : bf16
    %274 = vector.broadcast %cst_114 : bf16 to vector<32x128xbf16>
    %275 = arith.addf %274, %273 : vector<32x128xbf16>
    %276 = arith.divf %274, %275 : vector<32x128xbf16>
    %277 = vector.extract_strided_slice %270 {offsets = [32, 0], sizes = [32, 128], strides = [1, 1]} : vector<64x128xbf16> to vector<32x128xbf16>
    %278 = math.tanh %277 : vector<32x128xbf16>
    %279 = arith.mulf %276, %278 : vector<32x128xbf16>
    %c2_115 = arith.constant 2 : index
    %c0_116 = arith.constant 0 : index
    %c0_117 = arith.constant 0 : index
    %280 = vector.load %arg22[%c2_115, %c0_116, %c0_117] : memref<4x64x32xbf16, #tpu.memory_space<vmem>>, vector<1x64x32xbf16>
    %281 = vector.shape_cast %280 : vector<1x64x32xbf16> to vector<64x32xbf16>
    %cst_118 = arith.constant dense<0.000000e+00> : vector<64x128xf32>
    %282 = tpu.matmul %281, %279, %cst_118 {dimension_numbers = #tpu.dot_dimension_numbers<[1], [0], [0], [1], [0, 0, 1, 1], [], []>} : vector<64x32xbf16>, vector<32x128xbf16>, vector<64x128xf32> -> vector<64x128xf32>
    %c2_119 = arith.constant 2 : index
    %c0_120 = arith.constant 0 : index
    %c0_121 = arith.constant 0 : index
    %283 = vector.load %arg23[%c2_119, %c0_120, %c0_121] : memref<4x64x1xf32, #tpu.memory_space<vmem>>, vector<1x64x1xf32>
    %284 = vector.shape_cast %283 : vector<1x64x1xf32> to vector<64x1xf32>
    %285 = vector.broadcast %284 : vector<64x1xf32> to vector<64x128xf32>
    %286 = arith.addf %282, %285 : vector<64x128xf32>
    %287 = vector.extract_strided_slice %286 {offsets = [0, 0], sizes = [32, 128], strides = [1, 1]} : vector<64x128xf32> to vector<32x128xf32>
    %288 = arith.addf %243, %287 : vector<32x128xf32>
    %cst_122 = arith.constant 0.707106769 : f32
    %289 = vector.broadcast %cst_122 : f32 to vector<32x128xf32>
    %290 = arith.mulf %288, %289 : vector<32x128xf32>
    %291 = vector.extract_strided_slice %286 {offsets = [32, 0], sizes = [32, 128], strides = [1, 1]} : vector<64x128xf32> to vector<32x128xf32>
    %292 = arith.addf %245, %291 : vector<32x128xf32>
    %293 = vector.extract_strided_slice %111 {offsets = [96, 0], sizes = [32, 1], strides = [1, 1]} : vector<128x1xf32> to vector<32x1xf32>
    %294 = vector.broadcast %293 : vector<32x1xf32> to vector<32x128xf32>
    %295 = arith.addf %290, %294 : vector<32x128xf32>
    %c2_i32_123 = arith.constant 2 : i32
    %296 = tpu.dynamic_rotate %295 by %c2_i32_123 dim 1 : vector<32x128xf32>, i32 -> vector<32x128xf32>
    %cst_124 = arith.constant 0.000000e+00 : f32
    %297 = vector.shape_cast %118 : vector<1x128xi1> to vector<1x128xi1>
    %298 = vector.broadcast %297 : vector<1x128xi1> to vector<32x128xi1>
    %299 = vector.broadcast %cst_124 : f32 to vector<32x128xf32>
    %300 = arith.select %298, %296, %299 : vector<32x128xi1>, vector<32x128xf32>
    %c126_i32_125 = arith.constant 126 : i32
    %301 = tpu.dynamic_rotate %295 by %c126_i32_125 dim 1 : vector<32x128xf32>, i32 -> vector<32x128xf32>
    %cst_126 = arith.constant 0.000000e+00 : f32
    %302 = vector.shape_cast %120 : vector<1x128xi1> to vector<1x128xi1>
    %303 = vector.broadcast %302 : vector<1x128xi1> to vector<32x128xi1>
    %304 = vector.broadcast %cst_126 : f32 to vector<32x128xf32>
    %305 = arith.select %303, %301, %304 : vector<32x128xi1>, vector<32x128xf32>
    %306 = tpu.concatenate %300, %295, %305 in 0 : vector<32x128xf32>, vector<32x128xf32>, vector<32x128xf32> -> vector<96x128xf32>
    %307 = arith.truncf %306 : vector<96x128xf32> to vector<96x128xbf16>
    %c3 = arith.constant 3 : index
    %c0_127 = arith.constant 0 : index
    %c0_128 = arith.constant 0 : index
    %308 = vector.load %arg19[%c3, %c0_127, %c0_128] : memref<4x64x96xbf16, #tpu.memory_space<vmem>>, vector<1x64x96xbf16>
    %309 = vector.shape_cast %308 : vector<1x64x96xbf16> to vector<64x96xbf16>
    %cst_129 = arith.constant dense<0.000000e+00> : vector<64x128xf32>
    %310 = tpu.matmul %309, %307, %cst_129 {dimension_numbers = #tpu.dot_dimension_numbers<[1], [0], [0], [1], [0, 0, 1, 1], [], []>} : vector<64x96xbf16>, vector<96x128xbf16>, vector<64x128xf32> -> vector<64x128xf32>
    %311 = vector.extract_strided_slice %150 {offsets = [64, 0], sizes = [64, 128], strides = [1, 1]} : vector<128x128xf32> to vector<64x128xf32>
    %312 = arith.addf %310, %311 : vector<64x128xf32>
    %c3_130 = arith.constant 3 : index
    %c0_131 = arith.constant 0 : index
    %c0_132 = arith.constant 0 : index
    %313 = vector.load %arg21[%c3_130, %c0_131, %c0_132] : memref<4x64x1xf32, #tpu.memory_space<vmem>>, vector<1x64x1xf32>
    %314 = vector.shape_cast %313 : vector<1x64x1xf32> to vector<64x1xf32>
    %315 = vector.broadcast %314 : vector<64x1xf32> to vector<64x128xf32>
    %316 = arith.addf %312, %315 : vector<64x128xf32>
    %317 = arith.truncf %316 : vector<64x128xf32> to vector<64x128xbf16>
    %318 = vector.extract_strided_slice %317 {offsets = [0, 0], sizes = [32, 128], strides = [1, 1]} : vector<64x128xbf16> to vector<32x128xbf16>
    %319 = arith.negf %318 : vector<32x128xbf16>
    %320 = math.exp %319 : vector<32x128xbf16>
    %cst_133 = arith.constant 1.000000e+00 : bf16
    %321 = vector.broadcast %cst_133 : bf16 to vector<32x128xbf16>
    %322 = arith.addf %321, %320 : vector<32x128xbf16>
    %323 = arith.divf %321, %322 : vector<32x128xbf16>
    %324 = vector.extract_strided_slice %317 {offsets = [32, 0], sizes = [32, 128], strides = [1, 1]} : vector<64x128xbf16> to vector<32x128xbf16>
    %325 = math.tanh %324 : vector<32x128xbf16>
    %326 = arith.mulf %323, %325 : vector<32x128xbf16>
    %c3_134 = arith.constant 3 : index
    %c0_135 = arith.constant 0 : index
    %c0_136 = arith.constant 0 : index
    %327 = vector.load %arg22[%c3_134, %c0_135, %c0_136] : memref<4x64x32xbf16, #tpu.memory_space<vmem>>, vector<1x64x32xbf16>
    %328 = vector.shape_cast %327 : vector<1x64x32xbf16> to vector<64x32xbf16>
    %cst_137 = arith.constant dense<0.000000e+00> : vector<64x128xf32>
    %329 = tpu.matmul %328, %326, %cst_137 {dimension_numbers = #tpu.dot_dimension_numbers<[1], [0], [0], [1], [0, 0, 1, 1], [], []>} : vector<64x32xbf16>, vector<32x128xbf16>, vector<64x128xf32> -> vector<64x128xf32>
    %c3_138 = arith.constant 3 : index
    %c0_139 = arith.constant 0 : index
    %c0_140 = arith.constant 0 : index
    %330 = vector.load %arg23[%c3_138, %c0_139, %c0_140] : memref<4x64x1xf32, #tpu.memory_space<vmem>>, vector<1x64x1xf32>
    %331 = vector.shape_cast %330 : vector<1x64x1xf32> to vector<64x1xf32>
    %332 = vector.broadcast %331 : vector<64x1xf32> to vector<64x128xf32>
    %333 = arith.addf %329, %332 : vector<64x128xf32>
    %334 = vector.extract_strided_slice %333 {offsets = [32, 0], sizes = [32, 128], strides = [1, 1]} : vector<64x128xf32> to vector<32x128xf32>
    %335 = arith.addf %292, %334 : vector<32x128xf32>
    %cst_141 = arith.constant 5.000000e-01 : f32
    %336 = vector.broadcast %cst_141 : f32 to vector<32x128xf32>
    %337 = arith.mulf %335, %336 : vector<32x128xf32>
    %338 = arith.truncf %337 : vector<32x128xf32> to vector<32x128xbf16>
    %c0_142 = arith.constant 0 : index
    %c0_143 = arith.constant 0 : index
    %339 = vector.load %arg24[%c0_142, %c0_143] : memref<32x32xbf16, #tpu.memory_space<vmem>>, vector<32x32xbf16>
    %cst_144 = arith.constant dense<0.000000e+00> : vector<32x128xf32>
    %340 = tpu.matmul %339, %338, %cst_144 {dimension_numbers = #tpu.dot_dimension_numbers<[1], [0], [0], [1], [0, 0, 1, 1], [], []>} : vector<32x32xbf16>, vector<32x128xbf16>, vector<32x128xf32> -> vector<32x128xf32>
    %c0_145 = arith.constant 0 : index
    %c0_146 = arith.constant 0 : index
    %341 = vector.load %arg25[%c0_145, %c0_146] : memref<32x1xf32, #tpu.memory_space<vmem>>, vector<32x1xf32>
    %342 = vector.broadcast %341 : vector<32x1xf32> to vector<32x128xf32>
    %343 = arith.addf %340, %342 : vector<32x128xf32>
    %344 = arith.truncf %343 : vector<32x128xf32> to vector<32x128xbf16>
    %345 = arith.negf %344 : vector<32x128xbf16>
    %346 = math.exp %345 : vector<32x128xbf16>
    %cst_147 = arith.constant 1.000000e+00 : bf16
    %347 = vector.broadcast %cst_147 : bf16 to vector<32x128xbf16>
    %348 = arith.addf %347, %346 : vector<32x128xbf16>
    %349 = arith.divf %347, %348 : vector<32x128xbf16>
    %350 = arith.mulf %344, %349 : vector<32x128xbf16>
    %351 = arith.extf %350 : vector<32x128xbf16> to vector<32x128xf32>
    %c0_148 = arith.constant 0 : index
    %c0_149 = arith.constant 0 : index
    %352 = vector.load %arg26[%c0_148, %c0_149] : memref<32x1xf32, #tpu.memory_space<vmem>>, vector<32x1xf32>
    %353 = vector.broadcast %352 : vector<32x1xf32> to vector<32x128xf32>
    %354 = arith.mulf %353, %351 : vector<32x128xf32>
    %cst_150 = arith.constant dense<0.000000e+00> : vector<128xf32>
    %355 = vector.multi_reduction <add>, %354, %cst_150 [0] : vector<32x128xf32> to vector<128xf32>
    %356 = vector.shape_cast %355 : vector<128xf32> to vector<1x128xf32>
    %c0_151 = arith.constant 0 : index
    %c0_152 = arith.constant 0 : index
    %357 = vector.load %arg27[%c0_151, %c0_152] : memref<1x1xf32, #tpu.memory_space<vmem>>, vector<1x1xf32>
    %358 = vector.broadcast %357 : vector<1x1xf32> to vector<1x128xf32>
    %359 = arith.addf %356, %358 : vector<1x128xf32>
    %360 = arith.subf %359, %5 : vector<1x128xf32>
    %361 = math.absf %360 : vector<1x128xf32>
    %cst_153 = arith.constant dense<0.000000e+00> : vector<1xf32>
    %362 = vector.multi_reduction <add>, %361, %cst_153 [1] : vector<1x128xf32> to vector<1xf32>
    %363 = vector.shape_cast %362 : vector<1xf32> to vector<1x1xf32>
    %cst_154 = arith.constant 1.280000e+02 : f32
    %364 = vector.broadcast %cst_154 : f32 to vector<1x1xf32>
    %365 = arith.divf %363, %364 : vector<1x1xf32>
    %cst_155 = arith.constant 9.99999968E-21 : f32
    %366 = vector.broadcast %cst_155 : f32 to vector<1x1xf32>
    %367 = arith.maximumf %365, %366 : vector<1x1xf32>
    %368 = math.log %367 : vector<1x1xf32>
    %369 = vector.shape_cast %368 : vector<1x1xf32> to vector<1x1x1xf32>
    %c0_156 = arith.constant 0 : index
    %c0_157 = arith.constant 0 : index
    %c0_158 = arith.constant 0 : index
    %370 = vector.load %arg28[%c0_156, %c0_157, %c0_158] : memref<1x1x1xf32, #tpu.memory_space<vmem>>, vector<1x1x1xf32>
    tpu.vector_store %arg28[%c0_156, %c0_157, %c0_158], %369 {strides = array<i32>} : memref<1x1x1xf32, #tpu.memory_space<vmem>>, vector<1x1x1xf32>,
    return
  }
  func.func @transform_0(%arg0: i32) -> (i32, i32, i32) {
    %c0_i32 = arith.constant 0 : i32
    %c0_i32_0 = arith.constant 0 : i32
    %c0_i32_1 = arith.constant 0 : i32
    return %arg0, %c0_i32, %c0_i32_0 : i32, i32, i32
  }
  func.func @transform_1(%arg0: i32) -> (i32, i32, i32) {
    %c0_i32 = arith.constant 0 : i32
    %c0_i32_0 = arith.constant 0 : i32
    %c0_i32_1 = arith.constant 0 : i32
    return %arg0, %c0_i32, %c0_i32_0 : i32, i32, i32
  }
  func.func @transform_2(%arg0: i32) -> (i32, i32, i32) {
    %c0_i32 = arith.constant 0 : i32
    %c0_i32_0 = arith.constant 0 : i32
    %c0_i32_1 = arith.constant 0 : i32
    return %arg0, %c0_i32, %c0_i32_0 : i32, i32, i32
  }
  func.func @transform_3(%arg0: i32) -> (i32, i32, i32) {
    %c0_i32 = arith.constant 0 : i32
    %c0_i32_0 = arith.constant 0 : i32
    %c0_i32_1 = arith.constant 0 : i32
    return %arg0, %c0_i32, %c0_i32_0 : i32, i32, i32
  }
  func.func @transform_4(%arg0: i32) -> (i32, i32, i32) {
    %c0_i32 = arith.constant 0 : i32
    %c0_i32_0 = arith.constant 0 : i32
    %c0_i32_1 = arith.constant 0 : i32
    return %arg0, %c0_i32, %c0_i32_0 : i32, i32, i32
  }
  func.func @transform_5(%arg0: i32) -> (i32, i32) {
    %c0_i32 = arith.constant 0 : i32
    %c0_i32_0 = arith.constant 0 : i32
    %c0_i32_1 = arith.constant 0 : i32
    return %c0_i32, %c0_i32_0 : i32, i32
  }
  func.func @transform_6(%arg0: i32) -> (i32, i32) {
    %c0_i32 = arith.constant 0 : i32
    %c0_i32_0 = arith.constant 0 : i32
    %c0_i32_1 = arith.constant 0 : i32
    return %c0_i32, %c0_i32_0 : i32, i32
  }
  func.func @transform_7(%arg0: i32) -> (i32, i32) {
    %c0_i32 = arith.constant 0 : i32
    %c0_i32_0 = arith.constant 0 : i32
    %c0_i32_1 = arith.constant 0 : i32
    return %c0_i32, %c0_i32_0 : i32, i32
  }
  func.func @transform_8(%arg0: i32) -> (i32, i32) {
    %c0_i32 = arith.constant 0 : i32
    %c0_i32_0 = arith.constant 0 : i32
    %c0_i32_1 = arith.constant 0 : i32
    return %c0_i32, %c0_i32_0 : i32, i32
  }
  func.func @transform_9(%arg0: i32) -> (i32, i32) {
    %c0_i32 = arith.constant 0 : i32
    %c0_i32_0 = arith.constant 0 : i32
    %c0_i32_1 = arith.constant 0 : i32
    return %c0_i32, %c0_i32_0 : i32, i32
  }
  func.func @transform_10(%arg0: i32) -> (i32, i32) {
    %c0_i32 = arith.constant 0 : i32
    %c0_i32_0 = arith.constant 0 : i32
    %c0_i32_1 = arith.constant 0 : i32
    return %c0_i32, %c0_i32_0 : i32, i32
  }
  func.func @transform_11(%arg0: i32) -> (i32, i32) {
    %c0_i32 = arith.constant 0 : i32
    %c0_i32_0 = arith.constant 0 : i32
    %c0_i32_1 = arith.constant 0 : i32
    return %c0_i32, %c0_i32_0 : i32, i32
  }
  func.func @transform_12(%arg0: i32) -> (i32, i32) {
    %c0_i32 = arith.constant 0 : i32
    %c0_i32_0 = arith.constant 0 : i32
    %c0_i32_1 = arith.constant 0 : i32
    return %c0_i32, %c0_i32_0 : i32, i32
  }
  func.func @transform_13(%arg0: i32) -> (i32, i32) {
    %c0_i32 = arith.constant 0 : i32
    %c0_i32_0 = arith.constant 0 : i32
    %c0_i32_1 = arith.constant 0 : i32
    return %c0_i32, %c0_i32_0 : i32, i32
  }
  func.func @transform_14(%arg0: i32) -> (i32, i32) {
    %c0_i32 = arith.constant 0 : i32
    %c0_i32_0 = arith.constant 0 : i32
    %c0_i32_1 = arith.constant 0 : i32
    return %c0_i32, %c0_i32_0 : i32, i32
  }
  func.func @transform_15(%arg0: i32) -> (i32, i32) {
    %c0_i32 = arith.constant 0 : i32
    %c0_i32_0 = arith.constant 0 : i32
    %c0_i32_1 = arith.constant 0 : i32
    return %c0_i32, %c0_i32_0 : i32, i32
  }
  func.func @transform_16(%arg0: i32) -> (i32, i32) {
    %c0_i32 = arith.constant 0 : i32
    %c0_i32_0 = arith.constant 0 : i32
    %c0_i32_1 = arith.constant 0 : i32
    return %c0_i32, %c0_i32_0 : i32, i32
  }
  func.func @transform_17(%arg0: i32) -> (i32, i32) {
    %c0_i32 = arith.constant 0 : i32
    %c0_i32_0 = arith.constant 0 : i32
    %c0_i32_1 = arith.constant 0 : i32
    return %c0_i32, %c0_i32_0 : i32, i32
  }
  func.func @transform_18(%arg0: i32) -> (i32, i32, i32) {
    %c0_i32 = arith.constant 0 : i32
    %c0_i32_0 = arith.constant 0 : i32
    %c0_i32_1 = arith.constant 0 : i32
    %c0_i32_2 = arith.constant 0 : i32
    return %c0_i32, %c0_i32_0, %c0_i32_1 : i32, i32, i32
  }
  func.func @transform_19(%arg0: i32) -> (i32, i32, i32) {
    %c0_i32 = arith.constant 0 : i32
    %c0_i32_0 = arith.constant 0 : i32
    %c0_i32_1 = arith.constant 0 : i32
    %c0_i32_2 = arith.constant 0 : i32
    return %c0_i32, %c0_i32_0, %c0_i32_1 : i32, i32, i32
  }
  func.func @transform_20(%arg0: i32) -> (i32, i32, i32) {
    %c0_i32 = arith.constant 0 : i32
    %c0_i32_0 = arith.constant 0 : i32
    %c0_i32_1 = arith.constant 0 : i32
    %c0_i32_2 = arith.constant 0 : i32
    return %c0_i32, %c0_i32_0, %c0_i32_1 : i32, i32, i32
  }
  func.func @transform_21(%arg0: i32) -> (i32, i32, i32) {
    %c0_i32 = arith.constant 0 : i32
    %c0_i32_0 = arith.constant 0 : i32
    %c0_i32_1 = arith.constant 0 : i32
    %c0_i32_2 = arith.constant 0 : i32
    return %c0_i32, %c0_i32_0, %c0_i32_1 : i32, i32, i32
  }
  func.func @transform_22(%arg0: i32) -> (i32, i32, i32) {
    %c0_i32 = arith.constant 0 : i32
    %c0_i32_0 = arith.constant 0 : i32
    %c0_i32_1 = arith.constant 0 : i32
    %c0_i32_2 = arith.constant 0 : i32
    return %c0_i32, %c0_i32_0, %c0_i32_1 : i32, i32, i32
  }
  func.func @transform_23(%arg0: i32) -> (i32, i32) {
    %c0_i32 = arith.constant 0 : i32
    %c0_i32_0 = arith.constant 0 : i32
    %c0_i32_1 = arith.constant 0 : i32
    return %c0_i32, %c0_i32_0 : i32, i32
  }
  func.func @transform_24(%arg0: i32) -> (i32, i32) {
    %c0_i32 = arith.constant 0 : i32
    %c0_i32_0 = arith.constant 0 : i32
    %c0_i32_1 = arith.constant 0 : i32
    return %c0_i32, %c0_i32_0 : i32, i32
  }
  func.func @transform_25(%arg0: i32) -> (i32, i32) {
    %c0_i32 = arith.constant 0 : i32
    %c0_i32_0 = arith.constant 0 : i32
    %c0_i32_1 = arith.constant 0 : i32
    return %c0_i32, %c0_i32_0 : i32, i32
  }
  func.func @transform_26(%arg0: i32) -> (i32, i32) {
    %c0_i32 = arith.constant 0 : i32
    %c0_i32_0 = arith.constant 0 : i32
    %c0_i32_1 = arith.constant 0 : i32
    return %c0_i32, %c0_i32_0 : i32, i32
  }
  func.func @transform_27(%arg0: i32) -> (i32, i32, i32) {
    %c0_i32 = arith.constant 0 : i32
    %c0_i32_0 = arith.constant 0 : i32
    %c0_i32_1 = arith.constant 0 : i32
    return %arg0, %c0_i32, %c0_i32_0 : i32, i32, i32
  }
}

</mosaic_0001>

<llo_original>
// kernel: diffnilm_forward_train.1
$region0: #{diffnilm_forward_train.1}
  #allocation0 [shape = 'u32[]', space=smem, size = 0x4, offset = 0x4, fixed_abs, tag = 'smem constant byte address 0x4 - core index']
  #allocation1 [shape = 'u32[144,128]{1,0:T(1,128)}', space=vmem, size = 0x12000, scoped, tag = 'internal scratch']
  #allocation2 [shape = 'f32[1,1]{1,0:T(1,128)S(1)}', space=vmem, size = 0x200, scoped, tag = 'scoped memory for diffnilm_forward_train.1']
  %s0 = inlined_call_operand.vmem [shape: f32[2,1,128], index: 0, kind: input, shape index: {}]
  %s1 = inlined_call_operand.vmem [shape: f32[2,1,128], index: 1, kind: input, shape index: {}]
  %s2 = inlined_call_operand.vmem [shape: f32[2,3,128], index: 2, kind: input, shape index: {}]
  %s3 = inlined_call_operand.vmem [shape: f32[2,1,1], index: 3, kind: input, shape index: {}]
  %s4 = inlined_call_operand.vmem [shape: f32[2,1,128], index: 4, kind: input, shape index: {}]
  %s5 = inlined_call_operand.vmem [shape: f32[32,1], index: 5, kind: input, shape index: {}]
  %s6 = inlined_call_operand.vmem [shape: f32[32,1], index: 6, kind: input, shape index: {}]
  %s7 = inlined_call_operand.vmem [shape: f32[32,1], index: 7, kind: input, shape index: {}]
  %s8 = inlined_call_operand.vmem [shape: f32[32,1], index: 8, kind: input, shape index: {}]
  %s9 = inlined_call_operand.vmem [shape: f32[32,3], index: 9, kind: input, shape index: {}]
  %s10 = inlined_call_operand.vmem [shape: f32[32,1], index: 10, kind: input, shape index: {}]
  %s11 = inlined_call_operand.vmem [shape: f32[1,16], index: 11, kind: input, shape index: {}]
  %s12 = inlined_call_operand.vmem [shape: f32[64,32], index: 12, kind: input, shape index: {}]
  %s13 = inlined_call_operand.vmem [shape: f32[64,1], index: 13, kind: input, shape index: {}]
  %s14 = inlined_call_operand.vmem [shape: f32[64,64], index: 14, kind: input, shape index: {}]
  %s15 = inlined_call_operand.vmem [shape: f32[1,64], index: 15, kind: input, shape index: {}]
  %s16 = inlined_call_operand.vmem [shape: f32[128,64], index: 16, kind: input, shape index: {}]
  %s17 = inlined_call_operand.vmem [shape: f32[128,1], index: 17, kind: input, shape index: {}]
  %s18 = inlined_call_operand.vmem [shape: bf16[4,64,96], index: 18, kind: input, shape index: {}]
  %s19 = inlined_call_operand.vmem [shape: bf16[2,128,96], index: 19, kind: input, shape index: {}]
  %s20 = inlined_call_operand.vmem [shape: f32[4,64,1], index: 20, kind: input, shape index: {}]
  %s21 = inlined_call_operand.vmem [shape: bf16[4,64,32], index: 21, kind: input, shape index: {}]
  %s22 = inlined_call_operand.vmem [shape: f32[4,64,1], index: 22, kind: input, shape index: {}]
  %s23 = inlined_call_operand.vmem [shape: bf16[32,32], index: 23, kind: input, shape index: {}]
  %s24 = inlined_call_operand.vmem [shape: f32[32,1], index: 24, kind: input, shape index: {}]
  %s25 = inlined_call_operand.vmem [shape: f32[32,1], index: 25, kind: input, shape index: {}]
  %s26 = inlined_call_operand.<no memory space> [shape: f32[1,1], index: 26, kind: input, shape index: {}]
  %s27 = inlined_call_operand.vmem [shape: f32[2,1,1], index: 27, kind: output, shape index: {}]
  %s28 = sld [smem:[#allocation0]]
  $region141: #{diffnilm_forward_train.1} parent=0
    _
  %s30 = ssub.s32 1, %s28
  %s31 = scalar_select 0, %s30, %s28
  %v32 = vstv %s26
  %33 = vst [vmem:[#allocation2] sm:$0x1] %v32
  loop: start=0, step=1, limit=4
  $region2: #{diffnilm_forward_train.1} parent=0 // loop_pre_header
    _
  $region3: #{diffnilm_forward_train.1} parent=0 // loop_header
    %s35 = sphi 0, %s39
    %p36 = scmp.ge.s32.totalorder %s35, 4
    %s45 = sphi 0, %s47
    %s48 = sphi 0, %s45
    %s49 = sphi 0, %s48
    %s65 = sphi 0, %s49
    %s71 = sphi 0, %s73
    %s74 = sphi 0, %s71
    %s75 = sphi 0, %s74
    %s91 = sphi 0, %s75
    %s97 = sphi 0, %s99
    %s100 = sphi 0, %s97
    %s101 = sphi 0, %s100
    %s117 = sphi 0, %s101
    %s123 = sphi 0, %s125
    %s126 = sphi 0, %s123
    %s127 = sphi 0, %s126
    %s143 = sphi 0, %s127
    %s149 = sphi 0, %s151
    %s152 = sphi 0, %s149
    %s153 = sphi 0, %s152
    %s169 = sphi 0, %s153
    %s173 = sphi 0, %s173
    %s175 = sphi 0, %s173
    %s176 = sphi 0, %s175
    %s190 = sphi 0, %s176
    %s194 = sphi 0, %s194
    %s196 = sphi 0, %s194
    %s197 = sphi 0, %s196
    %s211 = sphi 0, %s197
    %s215 = sphi 0, %s215
    %s217 = sphi 0, %s215
    %s218 = sphi 0, %s217
    %s232 = sphi 0, %s218
    %s236 = sphi 0, %s236
    %s238 = sphi 0, %s236
    %s239 = sphi 0, %s238
    %s253 = sphi 0, %s239
    %s257 = sphi 0, %s257
    %s259 = sphi 0, %s257
    %s260 = sphi 0, %s259
    %s274 = sphi 0, %s260
    %s278 = sphi 0, %s278
    %s280 = sphi 0, %s278
    %s281 = sphi 0, %s280
    %s295 = sphi 0, %s281
    %s299 = sphi 0, %s299
    %s301 = sphi 0, %s299
    %s302 = sphi 0, %s301
    %s316 = sphi 0, %s302
    %s320 = sphi 0, %s320
    %s322 = sphi 0, %s320
    %s323 = sphi 0, %s322
    %s337 = sphi 0, %s323
    %s341 = sphi 0, %s341
    %s343 = sphi 0, %s341
    %s344 = sphi 0, %s343
    %s358 = sphi 0, %s344
    %s362 = sphi 0, %s362
    %s364 = sphi 0, %s362
    %s365 = sphi 0, %s364
    %s379 = sphi 0, %s365
    %s383 = sphi 0, %s383
    %s385 = sphi 0, %s383
    %s386 = sphi 0, %s385
    %s400 = sphi 0, %s386
    %s404 = sphi 0, %s404
    %s406 = sphi 0, %s404
    %s407 = sphi 0, %s406
    %s421 = sphi 0, %s407
    %s425 = sphi 0, %s425
    %s427 = sphi 0, %s425
    %s428 = sphi 0, %s427
    %s442 = sphi 0, %s428
    %s446 = sphi 0, %s446
    %s448 = sphi 0, %s446
    %s449 = sphi 0, %s448
    %s463 = sphi 0, %s449
    %s467 = sphi 0, %s467
    %s469 = sphi 0, %s467
    %s470 = sphi 0, %s469
    %s484 = sphi 0, %s470
    %s488 = sphi 0, %s488
    %s490 = sphi 0, %s488
    %s491 = sphi 0, %s490
    %s505 = sphi 0, %s491
    %s509 = sphi 0, %s509
    %s511 = sphi 0, %s509
    %s512 = sphi 0, %s511
    %s526 = sphi 0, %s512
    %s530 = sphi 0, %s530
    %s532 = sphi 0, %s530
    %s533 = sphi 0, %s532
    %s547 = sphi 0, %s533
    %s551 = sphi 0, %s551
    %s553 = sphi 0, %s551
    %s554 = sphi 0, %s553
    %s568 = sphi 0, %s554
    %s572 = sphi 0, %s572
    %s574 = sphi 0, %s572
    %s575 = sphi 0, %s574
    %s589 = sphi 0, %s575
    %s593 = sphi 0, %s593
    %s595 = sphi 0, %s593
    %s596 = sphi 0, %s595
    %s610 = sphi 0, %s596
    %s614 = sphi 0, %s614
    %s616 = sphi 0, %s614
    %s617 = sphi 0, %s616
    %s631 = sphi 0, %s617
    %s637 = sphi 0, %s639
    %s640 = sphi 0, %s637
    %s641 = sphi 0, %s640
    %s657 = sphi 0, %s641
  $region4: #{diffnilm_forward_train.1} parent=0 // loop_header_branch
    %38 = sbr.rel (%p36) target = $region8
  $region5: #{diffnilm_forward_train.1} parent=0 // loop_body
    %s40 = ssub.s32 %s35, 1
    %s41 = ssub.s32 %s35, 2
    %s42 = sadd.s32 %s35, 1
    %s43 = ssub.s32 %s35, %s42
    %p44 = scmp.eq.s32.totalorder %s43, 0
    %s46 = sadd.s32 %s45, 1
    %s47 = scalar_select %p44, %s45, %s46
    %p50 = pneg %p44
    %p51 = scmp.eq.s32.totalorder %s35, 1
    %p52 = por %p50, %p51
    %p53 = scmp.ne.s32.totalorder %s45, %s48
    %p54 = scmp.eq.s32.totalorder %s35, 0
    %p55 = por %p53, %p54
    %p56 = scmp.ne.s32.totalorder %s45, %s48
    %p57 = scmp.eq.s32.totalorder %s40, 1
    %p58 = por %p56, %p57
    %p59 = scmp.ne.s32.totalorder %s48, %s49
    %p60 = scmp.eq.s32.totalorder %s40, 0
    %p61 = por %p59, %p60
    %p62 = scmp.ne.s32.totalorder %s48, %s49
    %p63 = scmp.eq.s32.totalorder %s41, 1
    %p64 = por %p62, %p63
    %p66 = scmp.ne.s32.totalorder %s49, %s65
    %p67 = scmp.eq.s32.totalorder %s41, 0
    %p68 = por %p66, %p67
    %s69 = ssub.s32 %s35, %s42
    %p70 = scmp.eq.s32.totalorder %s69, 0
    %s72 = sadd.s32 %s71, 1
    %s73 = scalar_select %p70, %s71, %s72
    %p76 = pneg %p70
    %p77 = scmp.eq.s32.totalorder %s35, 1
    %p78 = por %p76, %p77
    %p79 = scmp.ne.s32.totalorder %s71, %s74
    %p80 = scmp.eq.s32.totalorder %s35, 0
    %p81 = por %p79, %p80
    %p82 = scmp.ne.s32.totalorder %s71, %s74
    %p83 = scmp.eq.s32.totalorder %s40, 1
    %p84 = por %p82, %p83
    %p85 = scmp.ne.s32.totalorder %s74, %s75
    %p86 = scmp.eq.s32.totalorder %s40, 0
    %p87 = por %p85, %p86
    %p88 = scmp.ne.s32.totalorder %s74, %s75
    %p89 = scmp.eq.s32.totalorder %s41, 1
    %p90 = por %p88, %p89
    %p92 = scmp.ne.s32.totalorder %s75, %s91
    %p93 = scmp.eq.s32.totalorder %s41, 0
    %p94 = por %p92, %p93
    %s95 = ssub.s32 %s35, %s42
    %p96 = scmp.eq.s32.totalorder %s95, 0
    %s98 = sadd.s32 %s97, 1
    %s99 = scalar_select %p96, %s97, %s98
    %p102 = pneg %p96
    %p103 = scmp.eq.s32.totalorder %s35, 1
    %p104 = por %p102, %p103
    %p105 = scmp.ne.s32.totalorder %s97, %s100
    %p106 = scmp.eq.s32.totalorder %s35, 0
    %p107 = por %p105, %p106
    %p108 = scmp.ne.s32.totalorder %s97, %s100
    %p109 = scmp.eq.s32.totalorder %s40, 1
    %p110 = por %p108, %p109
    %p111 = scmp.ne.s32.totalorder %s100, %s101
    %p112 = scmp.eq.s32.totalorder %s40, 0
    %p113 = por %p111, %p112
    %p114 = scmp.ne.s32.totalorder %s100, %s101
    %p115 = scmp.eq.s32.totalorder %s41, 1
    %p116 = por %p114, %p115
    %p118 = scmp.ne.s32.totalorder %s101, %s117
    %p119 = scmp.eq.s32.totalorder %s41, 0
    %p120 = por %p118, %p119
    %s121 = ssub.s32 %s35, %s42
    %p122 = scmp.eq.s32.totalorder %s121, 0
    %s124 = sadd.s32 %s123, 1
    %s125 = scalar_select %p122, %s123, %s124
    %p128 = pneg %p122
    %p129 = scmp.eq.s32.totalorder %s35, 1
    %p130 = por %p128, %p129
    %p131 = scmp.ne.s32.totalorder %s123, %s126
    %p132 = scmp.eq.s32.totalorder %s35, 0
    %p133 = por %p131, %p132
    %p134 = scmp.ne.s32.totalorder %s123, %s126
    %p135 = scmp.eq.s32.totalorder %s40, 1
    %p136 = por %p134, %p135
    %p137 = scmp.ne.s32.totalorder %s126, %s127
    %p138 = scmp.eq.s32.totalorder %s40, 0
    %p139 = por %p137, %p138
    %p140 = scmp.ne.s32.totalorder %s126, %s127
    %p141 = scmp.eq.s32.totalorder %s41, 1
    %p142 = por %p140, %p141
    %p144 = scmp.ne.s32.totalorder %s127, %s143
    %p145 = scmp.eq.s32.totalorder %s41, 0
    %p146 = por %p144, %p145
    %s147 = ssub.s32 %s35, %s42
    %p148 = scmp.eq.s32.totalorder %s147, 0
    %s150 = sadd.s32 %s149, 1
    %s151 = scalar_select %p148, %s149, %s150
    %p154 = pneg %p148
    %p155 = scmp.eq.s32.totalorder %s35, 1
    %p156 = por %p154, %p155
    %p157 = scmp.ne.s32.totalorder %s149, %s152
    %p158 = scmp.eq.s32.totalorder %s35, 0
    %p159 = por %p157, %p158
    %p160 = scmp.ne.s32.totalorder %s149, %s152
    %p161 = scmp.eq.s32.totalorder %s40, 1
    %p162 = por %p160, %p161
    %p163 = scmp.ne.s32.totalorder %s152, %s153
    %p164 = scmp.eq.s32.totalorder %s40, 0
    %p165 = por %p163, %p164
    %p166 = scmp.ne.s32.totalorder %s152, %s153
    %p167 = scmp.eq.s32.totalorder %s41, 1
    %p168 = por %p166, %p167
    %p170 = scmp.ne.s32.totalorder %s153, %s169
    %p171 = scmp.eq.s32.totalorder %s41, 0
    %p172 = por %p170, %p171
    %s174 = sadd.s32 %s173, 1
    %p177 = scmp.eq.s32.totalorder %s35, 1
    %p178 = scmp.ne.s32.totalorder %s173, %s175
    %p179 = scmp.eq.s32.totalorder %s35, 0
    %p180 = por %p178, %p179
    %p181 = scmp.ne.s32.totalorder %s173, %s175
    %p182 = scmp.eq.s32.totalorder %s40, 1
    %p183 = por %p181, %p182
    %p184 = scmp.ne.s32.totalorder %s175, %s176
    %p185 = scmp.eq.s32.totalorder %s40, 0
    %p186 = por %p184, %p185
    %p187 = scmp.ne.s32.totalorder %s175, %s176
    %p188 = scmp.eq.s32.totalorder %s41, 1
    %p189 = por %p187, %p188
    %p191 = scmp.ne.s32.totalorder %s176, %s190
    %p192 = scmp.eq.s32.totalorder %s41, 0
    %p193 = por %p191, %p192
    %s195 = sadd.s32 %s194, 1
    %p198 = scmp.eq.s32.totalorder %s35, 1
    %p199 = scmp.ne.s32.totalorder %s194, %s196
    %p200 = scmp.eq.s32.totalorder %s35, 0
    %p201 = por %p199, %p200
    %p202 = scmp.ne.s32.totalorder %s194, %s196
    %p203 = scmp.eq.s32.totalorder %s40, 1
    %p204 = por %p202, %p203
    %p205 = scmp.ne.s32.totalorder %s196, %s197
    %p206 = scmp.eq.s32.totalorder %s40, 0
    %p207 = por %p205, %p206
    %p208 = scmp.ne.s32.totalorder %s196, %s197
    %p209 = scmp.eq.s32.totalorder %s41, 1
    %p210 = por %p208, %p209
    %p212 = scmp.ne.s32.totalorder %s197, %s211
    %p213 = scmp.eq.s32.totalorder %s41, 0
    %p214 = por %p212, %p213
    %s216 = sadd.s32 %s215, 1
    %p219 = scmp.eq.s32.totalorder %s35, 1
    %p220 = scmp.ne.s32.totalorder %s215, %s217
    %p221 = scmp.eq.s32.totalorder %s35, 0
    %p222 = por %p220, %p221
    %p223 = scmp.ne.s32.totalorder %s215, %s217
    %p224 = scmp.eq.s32.totalorder %s40, 1
    %p225 = por %p223, %p224
    %p226 = scmp.ne.s32.totalorder %s217, %s218
    %p227 = scmp.eq.s32.totalorder %s40, 0
    %p228 = por %p226, %p227
    %p229 = scmp.ne.s32.totalorder %s217, %s218
    %p230 = scmp.eq.s32.totalorder %s41, 1
    %p231 = por %p229, %p230
    %p233 = scmp.ne.s32.totalorder %s218, %s232
    %p234 = scmp.eq.s32.totalorder %s41, 0
    %p235 = por %p233, %p234
    %s237 = sadd.s32 %s236, 1
    %p240 = scmp.eq.s32.totalorder %s35, 1
    %p241 = scmp.ne.s32.totalorder %s236, %s238
    %p242 = scmp.eq.s32.totalorder %s35, 0
    %p243 = por %p241, %p242
    %p244 = scmp.ne.s32.totalorder %s236, %s238
    %p245 = scmp.eq.s32.totalorder %s40, 1
    %p246 = por %p244, %p245
    %p247 = scmp.ne.s32.totalorder %s238, %s239
    %p248 = scmp.eq.s32.totalorder %s40, 0
    %p249 = por %p247, %p248
    %p250 = scmp.ne.s32.totalorder %s238, %s239
    %p251 = scmp.eq.s32.totalorder %s41, 1
    %p252 = por %p250, %p251
    %p254 = scmp.ne.s32.totalorder %s239, %s253
    %p255 = scmp.eq.s32.totalorder %s41, 0
    %p256 = por %p254, %p255
    %s258 = sadd.s32 %s257, 1
    %p261 = scmp.eq.s32.totalorder %s35, 1
    %p262 = scmp.ne.s32.totalorder %s257, %s259
    %p263 = scmp.eq.s32.totalorder %s35, 0
    %p264 = por %p262, %p263
    %p265 = scmp.ne.s32.totalorder %s257, %s259
    %p266 = scmp.eq.s32.totalorder %s40, 1
    %p267 = por %p265, %p266
    %p268 = scmp.ne.s32.totalorder %s259, %s260
    %p269 = scmp.eq.s32.totalorder %s40, 0
    %p270 = por %p268, %p269
    %p271 = scmp.ne.s32.totalorder %s259, %s260
    %p272 = scmp.eq.s32.totalorder %s41, 1
    %p273 = por %p271, %p272
    %p275 = scmp.ne.s32.totalorder %s260, %s274
    %p276 = scmp.eq.s32.totalorder %s41, 0
    %p277 = por %p275, %p276
    %s279 = sadd.s32 %s278, 1
    %p282 = scmp.eq.s32.totalorder %s35, 1
    %p283 = scmp.ne.s32.totalorder %s278, %s280
    %p284 = scmp.eq.s32.totalorder %s35, 0
    %p285 = por %p283, %p284
    %p286 = scmp.ne.s32.totalorder %s278, %s280
    %p287 = scmp.eq.s32.totalorder %s40, 1
    %p288 = por %p286, %p287
    %p289 = scmp.ne.s32.totalorder %s280, %s281
    %p290 = scmp.eq.s32.totalorder %s40, 0
    %p291 = por %p289, %p290
    %p292 = scmp.ne.s32.totalorder %s280, %s281
    %p293 = scmp.eq.s32.totalorder %s41, 1
    %p294 = por %p292, %p293
    %p296 = scmp.ne.s32.totalorder %s281, %s295
    %p297 = scmp.eq.s32.totalorder %s41, 0
    %p298 = por %p296, %p297
    %s300 = sadd.s32 %s299, 1
    %p303 = scmp.eq.s32.totalorder %s35, 1
    %p304 = scmp.ne.s32.totalorder %s299, %s301
    %p305 = scmp.eq.s32.totalorder %s35, 0
    %p306 = por %p304, %p305
    %p307 = scmp.ne.s32.totalorder %s299, %s301
    %p308 = scmp.eq.s32.totalorder %s40, 1
    %p309 = por %p307, %p308
    %p310 = scmp.ne.s32.totalorder %s301, %s302
    %p311 = scmp.eq.s32.totalorder %s40, 0
    %p312 = por %p310, %p311
    %p313 = scmp.ne.s32.totalorder %s301, %s302
    %p314 = scmp.eq.s32.totalorder %s41, 1
    %p315 = por %p313, %p314
    %p317 = scmp.ne.s32.totalorder %s302, %s316
    %p318 = scmp.eq.s32.totalorder %s41, 0
    %p319 = por %p317, %p318
    %s321 = sadd.s32 %s320, 1
    %p324 = scmp.eq.s32.totalorder %s35, 1
    %p325 = scmp.ne.s32.totalorder %s320, %s322
    %p326 = scmp.eq.s32.totalorder %s35, 0
    %p327 = por %p325, %p326
    %p328 = scmp.ne.s32.totalorder %s320, %s322
    %p329 = scmp.eq.s32.totalorder %s40, 1
    %p330 = por %p328, %p329
    %p331 = scmp.ne.s32.totalorder %s322, %s323
    %p332 = scmp.eq.s32.totalorder %s40, 0
    %p333 = por %p331, %p332
    %p334 = scmp.ne.s32.totalorder %s322, %s323
    %p335 = scmp.eq.s32.totalorder %s41, 1
    %p336 = por %p334, %p335
    %p338 = scmp.ne.s32.totalorder %s323, %s337
    %p339 = scmp.eq.s32.totalorder %s41, 0
    %p340 = por %p338, %p339
    %s342 = sadd.s32 %s341, 1
    %p345 = scmp.eq.s32.totalorder %s35, 1
    %p346 = scmp.ne.s32.totalorder %s341, %s343
    %p347 = scmp.eq.s32.totalorder %s35, 0
    %p348 = por %p346, %p347
    %p349 = scmp.ne.s32.totalorder %s341, %s343
    %p350 = scmp.eq.s32.totalorder %s40, 1
    %p351 = por %p349, %p350
    %p352 = scmp.ne.s32.totalorder %s343, %s344
    %p353 = scmp.eq.s32.totalorder %s40, 0
    %p354 = por %p352, %p353
    %p355 = scmp.ne.s32.totalorder %s343, %s344
    %p356 = scmp.eq.s32.totalorder %s41, 1
    %p357 = por %p355, %p356
    %p359 = scmp.ne.s32.totalorder %s344, %s358
    %p360 = scmp.eq.s32.totalorder %s41, 0
    %p361 = por %p359, %p360
    %s363 = sadd.s32 %s362, 1
    %p366 = scmp.eq.s32.totalorder %s35, 1
    %p367 = scmp.ne.s32.totalorder %s362, %s364
    %p368 = scmp.eq.s32.totalorder %s35, 0
    %p369 = por %p367, %p368
    %p370 = scmp.ne.s32.totalorder %s362, %s364
    %p371 = scmp.eq.s32.totalorder %s40, 1
    %p372 = por %p370, %p371
    %p373 = scmp.ne.s32.totalorder %s364, %s365
    %p374 = scmp.eq.s32.totalorder %s40, 0
    %p375 = por %p373, %p374
    %p376 = scmp.ne.s32.totalorder %s364, %s365
    %p377 = scmp.eq.s32.totalorder %s41, 1
    %p378 = por %p376, %p377
    %p380 = scmp.ne.s32.totalorder %s365, %s379
    %p381 = scmp.eq.s32.totalorder %s41, 0
    %p382 = por %p380, %p381
    %s384 = sadd.s32 %s383, 1
    %p387 = scmp.eq.s32.totalorder %s35, 1
    %p388 = scmp.ne.s32.totalorder %s383, %s385
    %p389 = scmp.eq.s32.totalorder %s35, 0
    %p390 = por %p388, %p389
    %p391 = scmp.ne.s32.totalorder %s383, %s385
    %p392 = scmp.eq.s32.totalorder %s40, 1
    %p393 = por %p391, %p392
    %p394 = scmp.ne.s32.totalorder %s385, %s386
    %p395 = scmp.eq.s32.totalorder %s40, 0
    %p396 = por %p394, %p395
    %p397 = scmp.ne.s32.totalorder %s385, %s386
    %p398 = scmp.eq.s32.totalorder %s41, 1
    %p399 = por %p397, %p398
    %p401 = scmp.ne.s32.totalorder %s386, %s400
    %p402 = scmp.eq.s32.totalorder %s41, 0
    %p403 = por %p401, %p402
    %s405 = sadd.s32 %s404, 1
    %p408 = scmp.eq.s32.totalorder %s35, 1
    %p409 = scmp.ne.s32.totalorder %s404, %s406
    %p410 = scmp.eq.s32.totalorder %s35, 0
    %p411 = por %p409, %p410
    %p412 = scmp.ne.s32.totalorder %s404, %s406
    %p413 = scmp.eq.s32.totalorder %s40, 1
    %p414 = por %p412, %p413
    %p415 = scmp.ne.s32.totalorder %s406, %s407
    %p416 = scmp.eq.s32.totalorder %s40, 0
    %p417 = por %p415, %p416
    %p418 = scmp.ne.s32.totalorder %s406, %s407
    %p419 = scmp.eq.s32.totalorder %s41, 1
    %p420 = por %p418, %p419
    %p422 = scmp.ne.s32.totalorder %s407, %s421
    %p423 = scmp.eq.s32.totalorder %s41, 0
    %p424 = por %p422, %p423
    %s426 = sadd.s32 %s425, 1
    %p429 = scmp.eq.s32.totalorder %s35, 1
    %p430 = scmp.ne.s32.totalorder %s425, %s427
    %p431 = scmp.eq.s32.totalorder %s35, 0
    %p432 = por %p430, %p431
    %p433 = scmp.ne.s32.totalorder %s425, %s427
    %p434 = scmp.eq.s32.totalorder %s40, 1
    %p435 = por %p433, %p434
    %p436 = scmp.ne.s32.totalorder %s427, %s428
    %p437 = scmp.eq.s32.totalorder %s40, 0
    %p438 = por %p436, %p437
    %p439 = scmp.ne.s32.totalorder %s427, %s428
    %p440 = scmp.eq.s32.totalorder %s41, 1
    %p441 = por %p439, %p440
    %p443 = scmp.ne.s32.totalorder %s428, %s442
    %p444 = scmp.eq.s32.totalorder %s41, 0
    %p445 = por %p443, %p444
    %s447 = sadd.s32 %s446, 1
    %p450 = scmp.eq.s32.totalorder %s35, 1
    %p451 = scmp.ne.s32.totalorder %s446, %s448
    %p452 = scmp.eq.s32.totalorder %s35, 0
    %p453 = por %p451, %p452
    %p454 = scmp.ne.s32.totalorder %s446, %s448
    %p455 = scmp.eq.s32.totalorder %s40, 1
    %p456 = por %p454, %p455
    %p457 = scmp.ne.s32.totalorder %s448, %s449
    %p458 = scmp.eq.s32.totalorder %s40, 0
    %p459 = por %p457, %p458
    %p460 = scmp.ne.s32.totalorder %s448, %s449
    %p461 = scmp.eq.s32.totalorder %s41, 1
    %p462 = por %p460, %p461
    %p464 = scmp.ne.s32.totalorder %s449, %s463
    %p465 = scmp.eq.s32.totalorder %s41, 0
    %p466 = por %p464, %p465
    %s468 = sadd.s32 %s467, 1
    %p471 = scmp.eq.s32.totalorder %s35, 1
    %p472 = scmp.ne.s32.totalorder %s467, %s469
    %p473 = scmp.eq.s32.totalorder %s35, 0
    %p474 = por %p472, %p473
    %p475 = scmp.ne.s32.totalorder %s467, %s469
    %p476 = scmp.eq.s32.totalorder %s40, 1
    %p477 = por %p475, %p476
    %p478 = scmp.ne.s32.totalorder %s469, %s470
    %p479 = scmp.eq.s32.totalorder %s40, 0
    %p480 = por %p478, %p479
    %p481 = scmp.ne.s32.totalorder %s469, %s470
    %p482 = scmp.eq.s32.totalorder %s41, 1
    %p483 = por %p481, %p482
    %p485 = scmp.ne.s32.totalorder %s470, %s484
    %p486 = scmp.eq.s32.totalorder %s41, 0
    %p487 = por %p485, %p486
    %s489 = sadd.s32 %s488, 1
    %p492 = scmp.eq.s32.totalorder %s35, 1
    %p493 = scmp.ne.s32.totalorder %s488, %s490
    %p494 = scmp.eq.s32.totalorder %s35, 0
    %p495 = por %p493, %p494
    %p496 = scmp.ne.s32.totalorder %s488, %s490
    %p497 = scmp.eq.s32.totalorder %s40, 1
    %p498 = por %p496, %p497
    %p499 = scmp.ne.s32.totalorder %s490, %s491
    %p500 = scmp.eq.s32.totalorder %s40, 0
    %p501 = por %p499, %p500
    %p502 = scmp.ne.s32.totalorder %s490, %s491
    %p503 = scmp.eq.s32.totalorder %s41, 1
    %p504 = por %p502, %p503
    %p506 = scmp.ne.s32.totalorder %s491, %s505
    %p507 = scmp.eq.s32.totalorder %s41, 0
    %p508 = por %p506, %p507
    %s510 = sadd.s32 %s509, 1
    %p513 = scmp.eq.s32.totalorder %s35, 1
    %p514 = scmp.ne.s32.totalorder %s509, %s511
    %p515 = scmp.eq.s32.totalorder %s35, 0
    %p516 = por %p514, %p515
    %p517 = scmp.ne.s32.totalorder %s509, %s511
    %p518 = scmp.eq.s32.totalorder %s40, 1
    %p519 = por %p517, %p518
    %p520 = scmp.ne.s32.totalorder %s511, %s512
    %p521 = scmp.eq.s32.totalorder %s40, 0
    %p522 = por %p520, %p521
    %p523 = scmp.ne.s32.totalorder %s511, %s512
    %p524 = scmp.eq.s32.totalorder %s41, 1
    %p525 = por %p523, %p524
    %p527 = scmp.ne.s32.totalorder %s512, %s526
    %p528 = scmp.eq.s32.totalorder %s41, 0
    %p529 = por %p527, %p528
    %s531 = sadd.s32 %s530, 1
    %p534 = scmp.eq.s32.totalorder %s35, 1
    %p535 = scmp.ne.s32.totalorder %s530, %s532
    %p536 = scmp.eq.s32.totalorder %s35, 0
    %p537 = por %p535, %p536
    %p538 = scmp.ne.s32.totalorder %s530, %s532
    %p539 = scmp.eq.s32.totalorder %s40, 1
    %p540 = por %p538, %p539
    %p541 = scmp.ne.s32.totalorder %s532, %s533
    %p542 = scmp.eq.s32.totalorder %s40, 0
    %p543 = por %p541, %p542
    %p544 = scmp.ne.s32.totalorder %s532, %s533
    %p545 = scmp.eq.s32.totalorder %s41, 1
    %p546 = por %p544, %p545
    %p548 = scmp.ne.s32.totalorder %s533, %s547
    %p549 = scmp.eq.s32.totalorder %s41, 0
    %p550 = por %p548, %p549
    %s552 = sadd.s32 %s551, 1
    %p555 = scmp.eq.s32.totalorder %s35, 1
    %p556 = scmp.ne.s32.totalorder %s551, %s553
    %p557 = scmp.eq.s32.totalorder %s35, 0
    %p558 = por %p556, %p557
    %p559 = scmp.ne.s32.totalorder %s551, %s553
    %p560 = scmp.eq.s32.totalorder %s40, 1
    %p561 = por %p559, %p560
    %p562 = scmp.ne.s32.totalorder %s553, %s554
    %p563 = scmp.eq.s32.totalorder %s40, 0
    %p564 = por %p562, %p563
    %p565 = scmp.ne.s32.totalorder %s553, %s554
    %p566 = scmp.eq.s32.totalorder %s41, 1
    %p567 = por %p565, %p566
    %p569 = scmp.ne.s32.totalorder %s554, %s568
    %p570 = scmp.eq.s32.totalorder %s41, 0
    %p571 = por %p569, %p570
    %s573 = sadd.s32 %s572, 1
    %p576 = scmp.eq.s32.totalorder %s35, 1
    %p577 = scmp.ne.s32.totalorder %s572, %s574
    %p578 = scmp.eq.s32.totalorder %s35, 0
    %p579 = por %p577, %p578
    %p580 = scmp.ne.s32.totalorder %s572, %s574
    %p581 = scmp.eq.s32.totalorder %s40, 1
    %p582 = por %p580, %p581
    %p583 = scmp.ne.s32.totalorder %s574, %s575
    %p584 = scmp.eq.s32.totalorder %s40, 0
    %p585 = por %p583, %p584
    %p586 = scmp.ne.s32.totalorder %s574, %s575
    %p587 = scmp.eq.s32.totalorder %s41, 1
    %p588 = por %p586, %p587
    %p590 = scmp.ne.s32.totalorder %s575, %s589
    %p591 = scmp.eq.s32.totalorder %s41, 0
    %p592 = por %p590, %p591
    %s594 = sadd.s32 %s593, 1
    %p597 = scmp.eq.s32.totalorder %s35, 1
    %p598 = scmp.ne.s32.totalorder %s593, %s595
    %p599 = scmp.eq.s32.totalorder %s35, 0
    %p600 = por %p598, %p599
    %p601 = scmp.ne.s32.totalorder %s593, %s595
    %p602 = scmp.eq.s32.totalorder %s40, 1
    %p603 = por %p601, %p602
    %p604 = scmp.ne.s32.totalorder %s595, %s596
    %p605 = scmp.eq.s32.totalorder %s40, 0
    %p606 = por %p604, %p605
    %p607 = scmp.ne.s32.totalorder %s595, %s596
    %p608 = scmp.eq.s32.totalorder %s41, 1
    %p609 = por %p607, %p608
    %p611 = scmp.ne.s32.totalorder %s596, %s610
    %p612 = scmp.eq.s32.totalorder %s41, 0
    %p613 = por %p611, %p612
    %s615 = sadd.s32 %s614, 1
    %p618 = scmp.eq.s32.totalorder %s35, 1
    %p619 = scmp.ne.s32.totalorder %s614, %s616
    %p620 = scmp.eq.s32.totalorder %s35, 0
    %p621 = por %p619, %p620
    %p622 = scmp.ne.s32.totalorder %s614, %s616
    %p623 = scmp.eq.s32.totalorder %s40, 1
    %p624 = por %p622, %p623
    %p625 = scmp.ne.s32.totalorder %s616, %s617
    %p626 = scmp.eq.s32.totalorder %s40, 0
    %p627 = por %p625, %p626
    %p628 = scmp.ne.s32.totalorder %s616, %s617
    %p629 = scmp.eq.s32.totalorder %s41, 1
    %p630 = por %p628, %p629
    %p632 = scmp.ne.s32.totalorder %s617, %s631
    %p633 = scmp.eq.s32.totalorder %s41, 0
    %p634 = por %p632, %p633
    %s635 = ssub.s32 %s35, %s42
    %p636 = scmp.eq.s32.totalorder %s635, 0
    %s638 = sadd.s32 %s637, 1
    %s639 = scalar_select %p636, %s637, %s638
    %p642 = pneg %p636
    %p643 = scmp.eq.s32.totalorder %s35, 1
    %p644 = por %p642, %p643
    %p645 = scmp.ne.s32.totalorder %s637, %s640
    %p646 = scmp.eq.s32.totalorder %s35, 0
    %p647 = por %p645, %p646
    %p648 = scmp.ne.s32.totalorder %s637, %s640
    %p649 = scmp.eq.s32.totalorder %s40, 1
    %p650 = por %p648, %p649
    %p651 = scmp.ne.s32.totalorder %s640, %s641
    %p652 = scmp.eq.s32.totalorder %s40, 0
    %p653 = por %p651, %p652
    %p654 = scmp.ne.s32.totalorder %s640, %s641
    %p655 = scmp.eq.s32.totalorder %s41, 1
    %p656 = por %p654, %p655
    %p658 = scmp.ne.s32.totalorder %s641, %s657
    %p659 = scmp.eq.s32.totalorder %s41, 0
    %p660 = por %p658, %p659
    %p661 = scmp.le.s32.totalorder 1, %s35
    %p662 = scmp.lt.s32.totalorder %s35, 3
    %p663 = pnand %p661, %p662
    %p664 = pneg %p663
    // Predicated region
    $region9: #{diffnilm_forward_train.1} parent=5 // pred_check
      _
    $region10: #{diffnilm_forward_train.1} parent=5 // pred_check_branch
      %666 = sbr.rel (%p663) target = $region12
    $region11: #{diffnilm_forward_train.1} parent=5 // pred_region
      %s667 = ssub.s32 %s35, 1
      // Predicated region
      $region13: #{diffnilm_forward_train.1} parent=11 // pred_check
        %p668 = pneg %p186
      $region14: #{diffnilm_forward_train.1} parent=11 // pred_check_branch
        %670 = sbr.rel (%p668) target = $region16
      $region15: #{diffnilm_forward_train.1} parent=11 // pred_region
        _
      $region16: #{diffnilm_forward_train.1} parent=11 // pred_fallthru
        _
      // Predicated region
      $region17: #{diffnilm_forward_train.1} parent=11 // pred_check
        %p671 = pneg %p207
      $region18: #{diffnilm_forward_train.1} parent=11 // pred_check_branch
        %673 = sbr.rel (%p671) target = $region20
      $region19: #{diffnilm_forward_train.1} parent=11 // pred_region
        _
      $region20: #{diffnilm_forward_train.1} parent=11 // pred_fallthru
        _
      // Predicated region
      $region21: #{diffnilm_forward_train.1} parent=11 // pred_check
        %p674 = pneg %p228
      $region22: #{diffnilm_forward_train.1} parent=11 // pred_check_branch
        %676 = sbr.rel (%p674) target = $region24
      $region23: #{diffnilm_forward_train.1} parent=11 // pred_region
        _
      $region24: #{diffnilm_forward_train.1} parent=11 // pred_fallthru
        _
      // Predicated region
      $region25: #{diffnilm_forward_train.1} parent=11 // pred_check
        %p677 = pneg %p249
      $region26: #{diffnilm_forward_train.1} parent=11 // pred_check_branch
        %679 = sbr.rel (%p677) target = $region28
      $region27: #{diffnilm_forward_train.1} parent=11 // pred_region
        _
      $region28: #{diffnilm_forward_train.1} parent=11 // pred_fallthru
        _
      // Predicated region
      $region29: #{diffnilm_forward_train.1} parent=11 // pred_check
        %p680 = pneg %p270
      $region30: #{diffnilm_forward_train.1} parent=11 // pred_check_branch
        %682 = sbr.rel (%p680) target = $region32
      $region31: #{diffnilm_forward_train.1} parent=11 // pred_region
        _
      $region32: #{diffnilm_forward_train.1} parent=11 // pred_fallthru
        _
      // Predicated region
      $region33: #{diffnilm_forward_train.1} parent=11 // pred_check
        %p683 = pneg %p291
      $region34: #{diffnilm_forward_train.1} parent=11 // pred_check_branch
        %685 = sbr.rel (%p683) target = $region36
      $region35: #{diffnilm_forward_train.1} parent=11 // pred_region
        _
      $region36: #{diffnilm_forward_train.1} parent=11 // pred_fallthru
        _
      // Predicated region
      $region37: #{diffnilm_forward_train.1} parent=11 // pred_check
        %p686 = pneg %p312
      $region38: #{diffnilm_forward_train.1} parent=11 // pred_check_branch
        %688 = sbr.rel (%p686) target = $region40
      $region39: #{diffnilm_forward_train.1} parent=11 // pred_region
        _
      $region40: #{diffnilm_forward_train.1} parent=11 // pred_fallthru
        _
      // Predicated region
      $region41: #{diffnilm_forward_train.1} parent=11 // pred_check
        %p689 = pneg %p333
      $region42: #{diffnilm_forward_train.1} parent=11 // pred_check_branch
        %691 = sbr.rel (%p689) target = $region44
      $region43: #{diffnilm_forward_train.1} parent=11 // pred_region
        _
      $region44: #{diffnilm_forward_train.1} parent=11 // pred_fallthru
        _
      // Predicated region
      $region45: #{diffnilm_forward_train.1} parent=11 // pred_check
        %p692 = pneg %p354
      $region46: #{diffnilm_forward_train.1} parent=11 // pred_check_branch
        %694 = sbr.rel (%p692) target = $region48
      $region47: #{diffnilm_forward_train.1} parent=11 // pred_region
        _
      $region48: #{diffnilm_forward_train.1} parent=11 // pred_fallthru
        _
      // Predicated region
      $region49: #{diffnilm_forward_train.1} parent=11 // pred_check
        %p695 = pneg %p375
      $region50: #{diffnilm_forward_train.1} parent=11 // pred_check_branch
        %697 = sbr.rel (%p695) target = $region52
      $region51: #{diffnilm_forward_train.1} parent=11 // pred_region
        _
      $region52: #{diffnilm_forward_train.1} parent=11 // pred_fallthru
        _
      // Predicated region
      $region53: #{diffnilm_forward_train.1} parent=11 // pred_check
        %p698 = pneg %p396
      $region54: #{diffnilm_forward_train.1} parent=11 // pred_check_branch
        %700 = sbr.rel (%p698) target = $region56
      $region55: #{diffnilm_forward_train.1} parent=11 // pred_region
        _
      $region56: #{diffnilm_forward_train.1} parent=11 // pred_fallthru
        _
      // Predicated region
      $region57: #{diffnilm_forward_train.1} parent=11 // pred_check
        %p701 = pneg %p417
      $region58: #{diffnilm_forward_train.1} parent=11 // pred_check_branch
        %703 = sbr.rel (%p701) target = $region60
      $region59: #{diffnilm_forward_train.1} parent=11 // pred_region
        _
      $region60: #{diffnilm_forward_train.1} parent=11 // pred_fallthru
        _
      // Predicated region
      $region61: #{diffnilm_forward_train.1} parent=11 // pred_check
        %p704 = pneg %p438
      $region62: #{diffnilm_forward_train.1} parent=11 // pred_check_branch
        %706 = sbr.rel (%p704) target = $region64
      $region63: #{diffnilm_forward_train.1} parent=11 // pred_region
        _
      $region64: #{diffnilm_forward_train.1} parent=11 // pred_fallthru
        _
      // Predicated region
      $region65: #{diffnilm_forward_train.1} parent=11 // pred_check
        %p707 = pneg %p459
      $region66: #{diffnilm_forward_train.1} parent=11 // pred_check_branch
        %709 = sbr.rel (%p707) target = $region68
      $region67: #{diffnilm_forward_train.1} parent=11 // pred_region
        _
      $region68: #{diffnilm_forward_train.1} parent=11 // pred_fallthru
        _
      // Predicated region
      $region69: #{diffnilm_forward_train.1} parent=11 // pred_check
        %p710 = pneg %p480
      $region70: #{diffnilm_forward_train.1} parent=11 // pred_check_branch
        %712 = sbr.rel (%p710) target = $region72
      $region71: #{diffnilm_forward_train.1} parent=11 // pred_region
        _
      $region72: #{diffnilm_forward_train.1} parent=11 // pred_fallthru
        _
      // Predicated region
      $region73: #{diffnilm_forward_train.1} parent=11 // pred_check
        %p713 = pneg %p501
      $region74: #{diffnilm_forward_train.1} parent=11 // pred_check_branch
        %715 = sbr.rel (%p713) target = $region76
      $region75: #{diffnilm_forward_train.1} parent=11 // pred_region
        _
      $region76: #{diffnilm_forward_train.1} parent=11 // pred_fallthru
        _
      // Predicated region
      $region77: #{diffnilm_forward_train.1} parent=11 // pred_check
        %p716 = pneg %p522
      $region78: #{diffnilm_forward_train.1} parent=11 // pred_check_branch
        %718 = sbr.rel (%p716) target = $region80
      $region79: #{diffnilm_forward_train.1} parent=11 // pred_region
        _
      $region80: #{diffnilm_forward_train.1} parent=11 // pred_fallthru
        _
      // Predicated region
      $region81: #{diffnilm_forward_train.1} parent=11 // pred_check
        %p719 = pneg %p543
      $region82: #{diffnilm_forward_train.1} parent=11 // pred_check_branch
        %721 = sbr.rel (%p719) target = $region84
      $region83: #{diffnilm_forward_train.1} parent=11 // pred_region
        _
      $region84: #{diffnilm_forward_train.1} parent=11 // pred_fallthru
        _
      // Predicated region
      $region85: #{diffnilm_forward_train.1} parent=11 // pred_check
        %p722 = pneg %p564
      $region86: #{diffnilm_forward_train.1} parent=11 // pred_check_branch
        %724 = sbr.rel (%p722) target = $region88
      $region87: #{diffnilm_forward_train.1} parent=11 // pred_region
        _
      $region88: #{diffnilm_forward_train.1} parent=11 // pred_fallthru
        _
      // Predicated region
      $region89: #{diffnilm_forward_train.1} parent=11 // pred_check
        %p725 = pneg %p585
      $region90: #{diffnilm_forward_train.1} parent=11 // pred_check_branch
        %727 = sbr.rel (%p725) target = $region92
      $region91: #{diffnilm_forward_train.1} parent=11 // pred_region
        _
      $region92: #{diffnilm_forward_train.1} parent=11 // pred_fallthru
        _
      // Predicated region
      $region93: #{diffnilm_forward_train.1} parent=11 // pred_check
        %p728 = pneg %p606
      $region94: #{diffnilm_forward_train.1} parent=11 // pred_check_branch
        %730 = sbr.rel (%p728) target = $region96
      $region95: #{diffnilm_forward_train.1} parent=11 // pred_region
        _
      $region96: #{diffnilm_forward_train.1} parent=11 // pred_fallthru
        _
      // Predicated region
      $region97: #{diffnilm_forward_train.1} parent=11 // pred_check
        %p731 = pneg %p627
      $region98: #{diffnilm_forward_train.1} parent=11 // pred_check_branch
        %733 = sbr.rel (%p731) target = $region100
      $region99: #{diffnilm_forward_train.1} parent=11 // pred_region
        _
      $region100: #{diffnilm_forward_train.1} parent=11 // pred_fallthru
        _
    $region12: #{diffnilm_forward_train.1} parent=5 // pred_fallthru
      _
    %p734 = scmp.lt.s32.totalorder %s35, 2
    // Predicated region
    $region101: #{diffnilm_forward_train.1} parent=5 // pred_check
      %p735 = pneg %p734
    $region102: #{diffnilm_forward_train.1} parent=5 // pred_check_branch
      %737 = sbr.rel (%p735) target = $region104
    $region103: #{diffnilm_forward_train.1} parent=5 // pred_region
      // Predicated region
      $region105: #{diffnilm_forward_train.1} parent=103 // pred_check
        %p738 = pneg %p55
      $region106: #{diffnilm_forward_train.1} parent=103 // pred_check_branch
        %740 = sbr.rel (%p738) target = $region108
      $region107: #{diffnilm_forward_train.1} parent=103 // pred_region
        %p741 = scmp.lt.s32.totalorder %s35, 1
        %s742 = scalar_select %p741, %s35, 1
        %s743 = scalar_lea.vmem %s0, %s742
      $region108: #{diffnilm_forward_train.1} parent=103 // pred_fallthru
        _
      // Predicated region
      $region109: #{diffnilm_forward_train.1} parent=103 // pred_check
        %p744 = pneg %p81
      $region110: #{diffnilm_forward_train.1} parent=103 // pred_check_branch
        %746 = sbr.rel (%p744) target = $region112
      $region111: #{diffnilm_forward_train.1} parent=103 // pred_region
        %p747 = scmp.lt.s32.totalorder %s35, 1
        %s748 = scalar_select %p747, %s35, 1
        %s749 = scalar_lea.vmem %s1, %s748
      $region112: #{diffnilm_forward_train.1} parent=103 // pred_fallthru
        _
      // Predicated region
      $region113: #{diffnilm_forward_train.1} parent=103 // pred_check
        %p750 = pneg %p107
      $region114: #{diffnilm_forward_train.1} parent=103 // pred_check_branch
        %752 = sbr.rel (%p750) target = $region116
      $region115: #{diffnilm_forward_train.1} parent=103 // pred_region
        %p753 = scmp.lt.s32.totalorder %s35, 1
        %s754 = scalar_select %p753, %s35, 1
        %s755 = smul.addr %s754, 4
        %s756 = scalar_lea.vmem %s2, %s755
      $region116: #{diffnilm_forward_train.1} parent=103 // pred_fallthru
        _
      // Predicated region
      $region117: #{diffnilm_forward_train.1} parent=103 // pred_check
        %p757 = pneg %p133
      $region118: #{diffnilm_forward_train.1} parent=103 // pred_check_branch
        %759 = sbr.rel (%p757) target = $region120
      $region119: #{diffnilm_forward_train.1} parent=103 // pred_region
        %p760 = scmp.lt.s32.totalorder %s35, 1
        %s761 = scalar_select %p760, %s35, 1
        %s762 = scalar_lea.vmem %s3, %s761
      $region120: #{diffnilm_forward_train.1} parent=103 // pred_fallthru
        _
      // Predicated region
      $region121: #{diffnilm_forward_train.1} parent=103 // pred_check
        %p763 = pneg %p159
      $region122: #{diffnilm_forward_train.1} parent=103 // pred_check_branch
        %765 = sbr.rel (%p763) target = $region124
      $region123: #{diffnilm_forward_train.1} parent=103 // pred_region
        %p766 = scmp.lt.s32.totalorder %s35, 1
        %s767 = scalar_select %p766, %s35, 1
        %s768 = scalar_lea.vmem %s4, %s767
      $region124: #{diffnilm_forward_train.1} parent=103 // pred_fallthru
        _
    $region104: #{diffnilm_forward_train.1} parent=5 // pred_fallthru
      _
    %p769 = scmp.le.s32.totalorder 1, %s35
    %p770 = scmp.lt.s32.totalorder %s35, 3
    %p771 = pnand %p769, %p770
    %p772 = pneg %p771
    // Predicated region
    $region125: #{diffnilm_forward_train.1} parent=5 // pred_check
      _
    $region126: #{diffnilm_forward_train.1} parent=5 // pred_check_branch
      %774 = sbr.rel (%p771) target = $region128
    $region127: #{diffnilm_forward_train.1} parent=5 // pred_region
      %s775 = ssub.s32 %s35, 1
      %p776 = scmp.lt.s32.totalorder %s40, 1
      %s777 = scalar_select %p776, %s40, 1
      %s778 = scalar_lea.vmem %s0, %s777
      %p779 = pneg %p61
      %p780 = pneg %p58
      %p781 = scmp.lt.s32.totalorder %s40, 1
      %s782 = scalar_select %p781, %s40, 1
      %s783 = scalar_lea.vmem %s1, %s782
      %p784 = pneg %p87
      %p785 = pneg %p84
      %p786 = scmp.lt.s32.totalorder %s40, 1
      %s787 = scalar_select %p786, %s40, 1
      %s788 = smul.addr %s787, 4
      %s789 = scalar_lea.vmem %s2, %s788
      %p790 = pneg %p113
      %p791 = pneg %p110
      %p792 = scmp.lt.s32.totalorder %s40, 1
      %s793 = scalar_select %p792, %s40, 1
      %s794 = scalar_lea.vmem %s3, %s793
      %p795 = pneg %p139
      %p796 = pneg %p136
      %p797 = scmp.lt.s32.totalorder %s40, 1
      %s798 = scalar_select %p797, %s40, 1
      %s799 = scalar_lea.vmem %s4, %s798
      %p800 = pneg %p165
      %p801 = pneg %p162
      %p802 = pneg %p186
      %p803 = pneg %p183
      %p804 = pneg %p207
      %p805 = pneg %p204
      %p806 = pneg %p228
      %p807 = pneg %p225
      %p808 = pneg %p249
      %p809 = pneg %p246
      %p810 = pneg %p270
      %p811 = pneg %p267
      %p812 = pneg %p291
      %p813 = pneg %p288
      %p814 = pneg %p312
      %p815 = pneg %p309
      %p816 = pneg %p333
      %p817 = pneg %p330
      %p818 = pneg %p354
      %p819 = pneg %p351
      %p820 = pneg %p375
      %p821 = pneg %p372
      %p822 = pneg %p396
      %p823 = pneg %p393
      %p824 = pneg %p417
      %p825 = pneg %p414
      %p826 = pneg %p438
      %p827 = pneg %p435
      %p828 = pneg %p459
      %p829 = pneg %p456
      %p830 = pneg %p480
      %p831 = pneg %p477
      %p832 = pneg %p501
      %p833 = pneg %p498
      %p834 = pneg %p522
      %p835 = pneg %p519
      %p836 = pneg %p543
      %p837 = pneg %p540
      %p838 = pneg %p564
      %p839 = pneg %p561
      %p840 = pneg %p585
      %p841 = pneg %p582
      %p842 = pneg %p606
      %p843 = pneg %p603
      %p844 = pneg %p627
      %p845 = pneg %p624
      %p846 = pneg %p653
      %p847 = pneg %p650
      %p848 = scmp.lt.s32.totalorder %s40, 1
      %s849 = scalar_select %p848, %s40, 1
      %s850 = scalar_lea.vmem %s27, %s849
      %p851 = scmp.lt.s32.totalorder %s40, 1
      %s852 = scalar_select %p851, %s40, 1
      %s853 = scalar_lea.vmem %s0, %s852
      %p854 = scmp.lt.s32.totalorder %s40, 1
      %s855 = scalar_select %p854, %s40, 1
      %s856 = scalar_lea.vmem %s1, %s855
      %p857 = scmp.lt.s32.totalorder %s40, 1
      %s858 = scalar_select %p857, %s40, 1
      %s859 = smul.addr %s858, 4
      %s860 = scalar_lea.vmem %s2, %s859
      %p861 = scmp.lt.s32.totalorder %s40, 1
      %s862 = scalar_select %p861, %s40, 1
      %s863 = scalar_lea.vmem %s3, %s862
      %p864 = scmp.lt.s32.totalorder %s40, 1
      %s865 = scalar_select %p864, %s40, 1
      %s866 = scalar_lea.vmem %s4, %s865
      %p867 = scmp.lt.s32.totalorder %s40, 1
      %s868 = scalar_select %p867, %s40, 1
      %s869 = scalar_lea.vmem %s27, %s868
      %v872 = vld [vmem:[%s863] sm:$0x1]
      %v873 = vld [vmem:[%s853] sm:$0x1]
      %v874 = vld [vmem:[%s866] sm:$0x1]
      %876 = vset.pattern.permute.xlu0 0
      %877 = vperm.xlu0 %876, %v872
      %v878 = vpop.permute.xlu0 %877
      %v880 = vlaneseq
      %v881 = vshrl.u32 %v880, 7
      %v882 = vsub.s32 0, %v881
      %v883 = vrot.slane %v878, %v882
      %v884 = vmul.f32 %v883, %v873
      %v885 = vmul.f32 %v872, %v872
      %v886 = vsub.f32 1.0, %v885
      %v887 = vrsqrt.pop %v886
      %v888 = vmul.f32 %v886, %v887
      %vm889 = vcmp.eq.f32.partialorder %v886, inf
      %v890 = vsel %vm889, %v886, %v888
      %vm891 = vcmp.eq.f32.partialorder %v886, 0.0
      %v892 = vand.u32 %v886, 2147483648
      %v893 = vsel %vm891, %v892, %v890
      %895 = vset.pattern.permute.xlu0 0
      %896 = vperm.xlu0 %895, %v893
      %v897 = vpop.permute.xlu0 %896
      %v899 = vlaneseq
      %v900 = vshrl.u32 %v899, 7
      %v901 = vsub.s32 0, %v900
      %v902 = vrot.slane %v897, %v901
      %v903 = vmul.f32 %v902, %v874
      %v904 = vadd.f32 %v884, %v903
      %v905 = vld [vmem:[%s5] sm:$0xff]
      %v906 = vld [vmem:[%s5 + $0x8] sm:$0xff]
      %v907 = vld [vmem:[%s5 + $0x10] sm:$0xff]
      %v908 = vld [vmem:[%s5 + $0x18] sm:$0xff]
      %910 = vset.pattern.permute.xlu0 0
      %911 = vperm.xlu0 %910, %v905
      %v912 = vpop.permute.xlu0 %911
      %915 = vset.pattern.permute.xlu0 0
      %916 = vperm.xlu0 %915, %v906
      %v917 = vpop.permute.xlu0 %916
      %920 = vset.pattern.permute.xlu0 0
      %921 = vperm.xlu0 %920, %v907
      %v922 = vpop.permute.xlu0 %921
      %925 = vset.pattern.permute.xlu0 0
      %926 = vperm.xlu0 %925, %v908
      %v927 = vpop.permute.xlu0 %926
      %v930 = vlaneseq
      %v931 = vshrl.u32 %v930, 7
      %v932 = vsub.s32 0, %v931
      %v933 = vrot.slane %v904, %v932
      %v935 = vmul.f32 %v912, %v933
      %v936 = vmul.f32 %v917, %v933
      %v937 = vmul.f32 %v922, %v933
      %v938 = vmul.f32 %v927, %v933
      %v939 = vld [vmem:[%s6] sm:$0xff]
      %v940 = vld [vmem:[%s6 + $0x8] sm:$0xff]
      %v941 = vld [vmem:[%s6 + $0x10] sm:$0xff]
      %v942 = vld [vmem:[%s6 + $0x18] sm:$0xff]
      %944 = vset.pattern.permute.xlu0 0
      %945 = vperm.xlu0 %944, %v939
      %v946 = vpop.permute.xlu0 %945
      %949 = vset.pattern.permute.xlu0 0
      %950 = vperm.xlu0 %949, %v940
      %v951 = vpop.permute.xlu0 %950
      %954 = vset.pattern.permute.xlu0 0
      %955 = vperm.xlu0 %954, %v941
      %v956 = vpop.permute.xlu0 %955
      %959 = vset.pattern.permute.xlu0 0
      %960 = vperm.xlu0 %959, %v942
      %v961 = vpop.permute.xlu0 %960
      %v963 = vadd.f32 %v935, %v946
      %v964 = vadd.f32 %v936, %v951
      %v965 = vadd.f32 %v937, %v956
      %v966 = vadd.f32 %v938, %v961
      %v967 = vpack.c.bf16 %v964, %v963
      %v968 = vpack.c.bf16 %v966, %v965
      %v969 = vxor.u32 %v967, 2147516416
      %v970 = vxor.u32 %v968, 2147516416
      %v972 = vmul.bf16 %v969, 1069105081
      %v973 = vpow.bf16.pop %v972
      %v975 = vmul.bf16 %v970, 1069105081
      %v976 = vpow.bf16.pop %v975
      %v977 = vadd.bf16 %v973, 1065369472
      %v978 = vadd.bf16 %v976, 1065369472
      %v979 = vrcp.bf16.pop %v977
      %v980 = vmul.bf16 1065369472, %v979
      %v981 = vrcp.bf16.pop %v978
      %v982 = vmul.bf16 1065369472, %v981
      %v983 = vmul.bf16 %v967, %v980
      %v984 = vmul.bf16 %v968, %v982
      %v985 = vunpack.c.l.bf16 %v983
      %v986 = vunpack.c.h.bf16 %v983
      %v987 = vunpack.c.l.bf16 %v984
      %v988 = vunpack.c.h.bf16 %v984
      %v989 = vld [vmem:[%s860] sm:$0x7]
      %v990 = vld [vmem:[%s9] sm:$0xff]
      %v991 = vld [vmem:[%s9 + $0x8] sm:$0xff]
      %v992 = vld [vmem:[%s9 + $0x10] sm:$0xff]
      %v993 = vld [vmem:[%s9 + $0x18] sm:$0xff]
      %995 = vset.pattern.permute.xlu0 0
      %996 = vperm.xlu0 %995, %v990
      %v997 = vpop.permute.xlu0 %996
      %1000 = vset.pattern.permute.xlu0 0
      %1001 = vperm.xlu0 %1000, %v991
      %v1002 = vpop.permute.xlu0 %1001
      %1005 = vset.pattern.permute.xlu0 0
      %1006 = vperm.xlu0 %1005, %v992
      %v1007 = vpop.permute.xlu0 %1006
      %1010 = vset.pattern.permute.xlu0 0
      %1011 = vperm.xlu0 %1010, %v993
      %v1012 = vpop.permute.xlu0 %1011
      %v1014 = vlaneseq
      %v1015 = vshrl.u32 %v1014, 7
      %v1016 = vsub.s32 0, %v1015
      %v1017 = vrot.slane %v989, %v1016
      %v1018 = vmul.f32 %v997, %v1017
      %v1019 = vmul.f32 %v1002, %v1017
      %v1020 = vmul.f32 %v1007, %v1017
      %v1021 = vmul.f32 %v1012, %v1017
      %1022 = vset.pattern.permute.xlu0 1
      %1023 = vperm.xlu0 %1022, %v990
      %v1024 = vpop.permute.xlu0 %1023
      %1026 = vset.pattern.permute.xlu0 1
      %1027 = vperm.xlu0 %1026, %v991
      %v1028 = vpop.permute.xlu0 %1027
      %1030 = vset.pattern.permute.xlu0 1
      %1031 = vperm.xlu0 %1030, %v992
      %v1032 = vpop.permute.xlu0 %1031
      %1034 = vset.pattern.permute.xlu0 1
      %1035 = vperm.xlu0 %1034, %v993
      %v1036 = vpop.permute.xlu0 %1035
      %v1038 = vlaneseq
      %v1039 = vshrl.u32 %v1038, 7
      %v1040 = vsub.s32 1, %v1039
      %v1041 = vrot.slane %v989, %v1040
      %v1042 = vmul.f32 %v1024, %v1041
      %v1043 = vmul.f32 %v1028, %v1041
      %v1044 = vmul.f32 %v1032, %v1041
      %v1045 = vmul.f32 %v1036, %v1041
      %v1046 = vadd.f32 %v1018, %v1042
      %v1047 = vadd.f32 %v1019, %v1043
      %v1048 = vadd.f32 %v1020, %v1044
      %v1049 = vadd.f32 %v1021, %v1045
      %1050 = vset.pattern.permute.xlu0 2
      %1051 = vperm.xlu0 %1050, %v990
      %v1052 = vpop.permute.xlu0 %1051
      %1054 = vset.pattern.permute.xlu0 2
      %1055 = vperm.xlu0 %1054, %v991
      %v1056 = vpop.permute.xlu0 %1055
      %1058 = vset.pattern.permute.xlu0 2
      %1059 = vperm.xlu0 %1058, %v992
      %v1060 = vpop.permute.xlu0 %1059
      %1062 = vset.pattern.permute.xlu0 2
      %1063 = vperm.xlu0 %1062, %v993
      %v1064 = vpop.permute.xlu0 %1063
      %v1066 = vlaneseq
      %v1067 = vshrl.u32 %v1066, 7
      %v1068 = vsub.s32 2, %v1067
      %v1069 = vrot.slane %v989, %v1068
      %v1070 = vmul.f32 %v1052, %v1069
      %v1071 = vmul.f32 %v1056, %v1069
      %v1072 = vmul.f32 %v1060, %v1069
      %v1073 = vmul.f32 %v1064, %v1069
      %v1074 = vadd.f32 %v1046, %v1070
      %v1075 = vadd.f32 %v1047, %v1071
      %v1076 = vadd.f32 %v1048, %v1072
      %v1077 = vadd.f32 %v1049, %v1073
      %v1078 = vld [vmem:[%s10] sm:$0xff]
      %v1079 = vld [vmem:[%s10 + $0x8] sm:$0xff]
      %v1080 = vld [vmem:[%s10 + $0x10] sm:$0xff]
      %v1081 = vld [vmem:[%s10 + $0x18] sm:$0xff]
      %1083 = vset.pattern.permute.xlu0 0
      %1084 = vperm.xlu0 %1083, %v1078
      %v1085 = vpop.permute.xlu0 %1084
      %1088 = vset.pattern.permute.xlu0 0
      %1089 = vperm.xlu0 %1088, %v1079
      %v1090 = vpop.permute.xlu0 %1089
      %1093 = vset.pattern.permute.xlu0 0
      %1094 = vperm.xlu0 %1093, %v1080
      %v1095 = vpop.permute.xlu0 %1094
      %1098 = vset.pattern.permute.xlu0 0
      %1099 = vperm.xlu0 %1098, %v1081
      %v1100 = vpop.permute.xlu0 %1099
      %v1102 = vadd.f32 %v1074, %v1085
      %v1103 = vadd.f32 %v1075, %v1090
      %v1104 = vadd.f32 %v1076, %v1095
      %v1105 = vadd.f32 %v1077, %v1100
      %v1106 = vld [vmem:[%s7] sm:$0xff]
      %v1107 = vld [vmem:[%s7 + $0x8] sm:$0xff]
      %v1108 = vld [vmem:[%s7 + $0x10] sm:$0xff]
      %v1109 = vld [vmem:[%s7 + $0x18] sm:$0xff]
      %v1110 = vld [vmem:[%s856] sm:$0x1]
      %1112 = vset.pattern.permute.xlu0 0
      %1113 = vperm.xlu0 %1112, %v1106
      %v1114 = vpop.permute.xlu0 %1113
      %1117 = vset.pattern.permute.xlu0 0
      %1118 = vperm.xlu0 %1117, %v1107
      %v1119 = vpop.permute.xlu0 %1118
      %1122 = vset.pattern.permute.xlu0 0
      %1123 = vperm.xlu0 %1122, %v1108
      %v1124 = vpop.permute.xlu0 %1123
      %1127 = vset.pattern.permute.xlu0 0
      %1128 = vperm.xlu0 %1127, %v1109
      %v1129 = vpop.permute.xlu0 %1128
      %v1132 = vlaneseq
      %v1133 = vshrl.u32 %v1132, 7
      %v1134 = vsub.s32 0, %v1133
      %v1135 = vrot.slane %v1110, %v1134
      %v1137 = vmul.f32 %v1114, %v1135
      %v1138 = vmul.f32 %v1119, %v1135
      %v1139 = vmul.f32 %v1124, %v1135
      %v1140 = vmul.f32 %v1129, %v1135
      %v1141 = vld [vmem:[%s8] sm:$0xff]
      %v1142 = vld [vmem:[%s8 + $0x8] sm:$0xff]
      %v1143 = vld [vmem:[%s8 + $0x10] sm:$0xff]
      %v1144 = vld [vmem:[%s8 + $0x18] sm:$0xff]
      %1146 = vset.pattern.permute.xlu0 0
      %1147 = vperm.xlu0 %1146, %v1141
      %v1148 = vpop.permute.xlu0 %1147
      %1151 = vset.pattern.permute.xlu0 0
      %1152 = vperm.xlu0 %1151, %v1142
      %v1153 = vpop.permute.xlu0 %1152
      %1156 = vset.pattern.permute.xlu0 0
      %1157 = vperm.xlu0 %1156, %v1143
      %v1158 = vpop.permute.xlu0 %1157
      %1161 = vset.pattern.permute.xlu0 0
      %1162 = vperm.xlu0 %1161, %v1144
      %v1163 = vpop.permute.xlu0 %1162
      %v1165 = vadd.f32 %v1137, %v1148
      %v1166 = vadd.f32 %v1138, %v1153
      %v1167 = vadd.f32 %v1139, %v1158
      %v1168 = vadd.f32 %v1140, %v1163
      %v1169 = vadd.f32 %v1165, %v1102
      %v1170 = vadd.f32 %v1166, %v1103
      %v1171 = vadd.f32 %v1167, %v1104
      %v1172 = vadd.f32 %v1168, %v1105
      %v1173 = vpack.c.bf16 %v1170, %v1169
      %v1174 = vpack.c.bf16 %v1172, %v1171
      %v1175 = vxor.u32 %v1173, 2147516416
      %v1176 = vxor.u32 %v1174, 2147516416
      %v1178 = vmul.bf16 %v1175, 1069105081
      %v1179 = vpow.bf16.pop %v1178
      %v1181 = vmul.bf16 %v1176, 1069105081
      %v1182 = vpow.bf16.pop %v1181
      %v1183 = vadd.bf16 %v1179, 1065369472
      %v1184 = vadd.bf16 %v1182, 1065369472
      %v1185 = vrcp.bf16.pop %v1183
      %v1186 = vmul.bf16 1065369472, %v1185
      %v1187 = vrcp.bf16.pop %v1184
      %v1188 = vmul.bf16 1065369472, %v1187
      %v1189 = vmul.bf16 %v1173, %v1186
      %v1190 = vmul.bf16 %v1174, %v1188
      %v1191 = vunpack.c.l.bf16 %v1189
      %v1192 = vunpack.c.h.bf16 %v1189
      %v1193 = vunpack.c.l.bf16 %v1190
      %v1194 = vunpack.c.h.bf16 %v1190
      %v1195 = vmul.f32 %v872, 50000.0
      %v1196 = vld [vmem:[%s11] sm:$0x1]
      %1198 = vset.pattern.permute.xlu0 0
      %1199 = vperm.xlu0 %1198, %v1195
      %v1200 = vpop.permute.xlu0 %1199
      %v1202 = vlaneseq
      %v1203 = vshrl.u32 %v1202, 7
      %v1204 = vsub.s32 0, %v1203
      %v1205 = vrot.slane %v1200, %v1204
      %v1206 = vmul.f32 %v1205, %v1196
      %v1207 = vand.u32 2147483647, %v1206
      %vm1208 = vcmp.le.f32.partialorder %v1207, 0.7853982
      %vm1209 = vcmp.lt.s32.totalorder %v1206, 0
      %v1210 = vand.u32 %v1206, 2139095040
      %v1211 = vshrl.u32 %v1210, 23
      %v1212 = vsub.s32 %v1211, 127
      %v1213 = vand.u32 2147483647, %v1206
      %v1214 = vand.u32 %v1213, 8388607
      %v1215 = vor.u32 %v1214, 8388608
      %v1216 = vsub.s32 0, %v1215
      %v1217 = vadd.s32 %v1212, 1
      %vm1218 = vcmp.gt.s32.totalorder %v1217, 0
      %v1219 = vsel %vm1218, %v1217, 0
      %v1220 = vshrl.u32 %v1219, 5
      %v1221 = vand.u32 %v1219, 31
      %v1222 = vsub.s32 32, %v1221
      %v1223 = vshrl.u32 683565275, %v1222
      %v1224 = vshll.u32 683565275, %v1221
      %v1225 = vshrl.u32 2475754826, %v1222
      %v1226 = vor.u32 %v1224, %v1225
      %v1227 = vshll.u32 2475754826, %v1221
      %v1228 = vshrl.u32 2131351028, %v1222
      %v1229 = vor.u32 %v1227, %v1228
      %v1230 = vshll.u32 2131351028, %v1221
      %v1231 = vshrl.u32 2102212464, %v1222
      %v1232 = vor.u32 %v1230, %v1231
      %v1233 = vshll.u32 2102212464, %v1221
      %v1234 = vshrl.u32 920167782, %v1222
      %v1235 = vor.u32 %v1233, %v1234
      %v1236 = vshll.u32 920167782, %v1221
      %v1237 = vshrl.u32 1326507024, %v1222
      %v1238 = vor.u32 %v1236, %v1237
      %vm1239 = vcmp.lt.s32.totalorder %v1220, 1
      %vm1240 = vcmp.lt.s32.totalorder %v1220, 2
      %vm1241 = vcmp.lt.s32.totalorder %v1220, 3
      %vm1242 = vcmp.lt.s32.totalorder %v1220, 4
      %v1243 = vsel %vm1239, %v1223, %v1226
      %v1244 = vsel %vm1242, %v1232, 2102212464
      %v1245 = vsel %vm1241, %v1229, %v1244
      %v1246 = vsel %vm1240, %v1243, %v1245
      %v1247 = vsel %vm1239, %v1226, %v1229
      %v1248 = vsel %vm1242, %v1235, 920167782
      %v1249 = vsel %vm1241, %v1232, %v1248
      %v1250 = vsel %vm1240, %v1247, %v1249
      %v1251 = vsel %vm1239, %v1229, %v1232
      %v1252 = vsel %vm1242, %v1238, 1326507024
      %v1253 = vsel %vm1241, %v1235, %v1252
      %v1254 = vsel %vm1240, %v1251, %v1253
      %v1255 = vshll.u32 %v1215, 8
      %v1256 = vmul.u32.u64.compose %v1255, %v1254
      %v1257 = vextract.low.u32 %v1256
      %v1258 = vextract.high.u32 %v1256
      %v1259 = vmul.u32.u64.compose %v1255, %v1250
      %v1260 = vextract.low.u32 %v1259
      %v1261 = vextract.high.u32 %v1259
      %v1262 = vmul.u32 %v1255, %v1246
      %v1263 = vadd.s32 %v1258, %v1260
      %vm1264 = vc.u32 %v1258, %v1260
      %v1265 = vadd.s32 %v1261, 1
      %v1266 = vsel %vm1264, %v1265, %v1261
      %v1267 = vadd.s32 %v1262, %v1266
      %v1268 = vadd.s32 %v1267, 536870912
      %v1269 = vshrl.u32 %v1268, 30
      %v1270 = vshll.u32 %v1269, 30
      %v1271 = vsub.s32 %v1267, %v1270
      %vm1272 = vcmp.lt.s32.totalorder %v1271, 0
      %v1273 = vsub.s32 0, %v1271
      %v1274 = vsel %vm1272, %v1273, %v1271
      %v1275 = vclz %v1274
      %v1276 = vsub.s32 %v1275, 2
      %vm1277 = vcmp.gt.s32.totalorder 0, %v1276
      %v1278 = vsel %vm1277, 0, %v1276
      %v1279 = vsub.s32 32, %v1278
      %v1280 = vshll.u32 %v1271, %v1278
      %v1281 = vshrl.u32 %v1263, %v1279
      %v1282 = vor.u32 %v1280, %v1281
      %v1283 = vsub.s32 4294967266, %v1278
      %v1284 = vadd.s32 %v1283, 127
      %v1285 = vshll.u32 %v1284, 23
      %v1286 = vor.u32 4788187, %v1285
      %v1287 = vand.u32 2147483647, %v1286
      %v1289 = vcvt.s32.f32 %v1282
      %v1290 = vmul.f32 %v1289, %v1287
      %v1291 = vxor.u32 %v1290, 2147483648
      %v1292 = vsel %vm1209, %v1291, %v1290
      %v1293 = vsub.s32 4, %v1269
      %v1294 = vsel %vm1209, %v1293, %v1269
      %v1295 = vsel %vm1208, %v1206, %v1292
      %v1296 = vsel %vm1208, 0, %v1294
      %v1297 = vcosq.f32.pop %v1295
      %v1298 = vsinq.f32.pop %v1295
      %vm1299 = vweird.f32 %v1206
      %v1300 = vadd.s32 %v1296, 3
      %v1301 = vand.u32 %v1300, 3
      %vm1302 = vcmp.lt.s32.totalorder %v1301, 2
      %vm1303 = vcmp.eq.s32.totalorder %v1301, 0
      %v1304 = vxor.u32 %v1298, 2147483648
      %v1305 = vsel %vm1303, %v1297, %v1304
      %vm1306 = vcmp.eq.s32.totalorder %v1301, 2
      %v1307 = vxor.u32 %v1297, 2147483648
      %v1308 = vsel %vm1306, %v1307, %v1298
      %v1309 = vsel %vm1302, %v1305, %v1308
      %v1310 = vsel %vm1299, nan, %v1309
      %v1311 = vand.u32 2147483647, %v1206
      %vm1312 = vcmp.le.f32.partialorder %v1311, 0.7853982
      %vm1313 = vcmp.lt.s32.totalorder %v1206, 0
      %v1314 = vand.u32 %v1206, 2139095040
      %v1315 = vshrl.u32 %v1314, 23
      %v1316 = vsub.s32 %v1315, 127
      %v1317 = vand.u32 2147483647, %v1206
      %v1318 = vand.u32 %v1317, 8388607
      %v1319 = vor.u32 %v1318, 8388608
      %v1320 = vsub.s32 0, %v1319
      %v1321 = vadd.s32 %v1316, 1
      %vm1322 = vcmp.gt.s32.totalorder %v1321, 0
      %v1323 = vsel %vm1322, %v1321, 0
      %v1324 = vshrl.u32 %v1323, 5
      %v1325 = vand.u32 %v1323, 31
      %v1326 = vsub.s32 32, %v1325
      %v1327 = vshrl.u32 683565275, %v1326
      %v1328 = vshll.u32 683565275, %v1325
      %v1329 = vshrl.u32 2475754826, %v1326
      %v1330 = vor.u32 %v1328, %v1329
      %v1331 = vshll.u32 2475754826, %v1325
      %v1332 = vshrl.u32 2131351028, %v1326
      %v1333 = vor.u32 %v1331, %v1332
      %v1334 = vshll.u32 2131351028, %v1325
      %v1335 = vshrl.u32 2102212464, %v1326
      %v1336 = vor.u32 %v1334, %v1335
      %v1337 = vshll.u32 2102212464, %v1325
      %v1338 = vshrl.u32 920167782, %v1326
      %v1339 = vor.u32 %v1337, %v1338
      %v1340 = vshll.u32 920167782, %v1325
      %v1341 = vshrl.u32 1326507024, %v1326
      %v1342 = vor.u32 %v1340, %v1341
      %vm1343 = vcmp.lt.s32.totalorder %v1324, 1
      %vm1344 = vcmp.lt.s32.totalorder %v1324, 2
      %vm1345 = vcmp.lt.s32.totalorder %v1324, 3
      %vm1346 = vcmp.lt.s32.totalorder %v1324, 4
      %v1347 = vsel %vm1343, %v1327, %v1330
      %v1348 = vsel %vm1346, %v1336, 2102212464
      %v1349 = vsel %vm1345, %v1333, %v1348
      %v1350 = vsel %vm1344, %v1347, %v1349
      %v1351 = vsel %vm1343, %v1330, %v1333
      %v1352 = vsel %vm1346, %v1339, 920167782
      %v1353 = vsel %vm1345, %v1336, %v1352
      %v1354 = vsel %vm1344, %v1351, %v1353
      %v1355 = vsel %vm1343, %v1333, %v1336
      %v1356 = vsel %vm1346, %v1342, 1326507024
      %v1357 = vsel %vm1345, %v1339, %v1356
      %v1358 = vsel %vm1344, %v1355, %v1357
      %v1359 = vshll.u32 %v1319, 8
      %v1360 = vmul.u32.u64.compose %v1359, %v1358
      %v1361 = vextract.low.u32 %v1360
      %v1362 = vextract.high.u32 %v1360
      %v1363 = vmul.u32.u64.compose %v1359, %v1354
      %v1364 = vextract.low.u32 %v1363
      %v1365 = vextract.high.u32 %v1363
      %v1366 = vmul.u32 %v1359, %v1350
      %v1367 = vadd.s32 %v1362, %v1364
      %vm1368 = vc.u32 %v1362, %v1364
      %v1369 = vadd.s32 %v1365, 1
      %v1370 = vsel %vm1368, %v1369, %v1365
      %v1371 = vadd.s32 %v1366, %v1370
      %v1372 = vadd.s32 %v1371, 536870912
      %v1373 = vshrl.u32 %v1372, 30
      %v1374 = vshll.u32 %v1373, 30
      %v1375 = vsub.s32 %v1371, %v1374
      %vm1376 = vcmp.lt.s32.totalorder %v1375, 0
      %v1377 = vsub.s32 0, %v1375
      %v1378 = vsel %vm1376, %v1377, %v1375
      %v1379 = vclz %v1378
      %v1380 = vsub.s32 %v1379, 2
      %vm1381 = vcmp.gt.s32.totalorder 0, %v1380
      %v1382 = vsel %vm1381, 0, %v1380
      %v1383 = vsub.s32 32, %v1382
      %v1384 = vshll.u32 %v1375, %v1382
      %v1385 = vshrl.u32 %v1367, %v1383
      %v1386 = vor.u32 %v1384, %v1385
      %v1387 = vsub.s32 4294967266, %v1382
      %v1388 = vadd.s32 %v1387, 127
      %v1389 = vshll.u32 %v1388, 23
      %v1390 = vor.u32 4788187, %v1389
      %v1391 = vand.u32 2147483647, %v1390
      %v1393 = vcvt.s32.f32 %v1386
      %v1394 = vmul.f32 %v1393, %v1391
      %v1395 = vxor.u32 %v1394, 2147483648
      %v1396 = vsel %vm1313, %v1395, %v1394
      %v1397 = vsub.s32 4, %v1373
      %v1398 = vsel %vm1313, %v1397, %v1373
      %v1399 = vsel %vm1312, %v1206, %v1396
      %v1400 = vsel %vm1312, 0, %v1398
      %v1401 = vcosq.f32.pop %v1399
      %v1402 = vsinq.f32.pop %v1399
      %vm1403 = vweird.f32 %v1206
      %v1404 = vand.u32 %v1400, 3
      %vm1405 = vcmp.lt.s32.totalorder %v1404, 2
      %vm1406 = vcmp.eq.s32.totalorder %v1404, 0
      %v1407 = vxor.u32 %v1402, 2147483648
      %v1408 = vsel %vm1406, %v1401, %v1407
      %vm1409 = vcmp.eq.s32.totalorder %v1404, 2
      %v1410 = vxor.u32 %v1401, 2147483648
      %v1411 = vsel %vm1409, %v1410, %v1402
      %v1412 = vsel %vm1405, %v1408, %v1411
      %v1413 = vsel %vm1403, nan, %v1412
      %v1415 = vlaneseq
      %v1416 = vshrl.u32 %v1415, 7
      %v1417 = vsub.s32 0, %v1416
      %v1418 = vrot.slane %v1413, %v1417
      %1419 = vrot.lane.b32.xlu0 %v1418, 16
      %v1420 = vpop.permute.xlu0 %1419
      %vm1422 = vcmask 130048
      %v1423 = vsel %vm1422, %v1310, %v1420
      %v1424 = vld [vmem:[%s12] sm:$0xff]
      %v1425 = vld [vmem:[%s12 + $0x8] sm:$0xff]
      %v1426 = vld [vmem:[%s12 + $0x10] sm:$0xff]
      %v1427 = vld [vmem:[%s12 + $0x18] sm:$0xff]
      %v1428 = vld [vmem:[%s12 + $0x20] sm:$0xff]
      %v1429 = vld [vmem:[%s12 + $0x28] sm:$0xff]
      %v1430 = vld [vmem:[%s12 + $0x30] sm:$0xff]
      %v1431 = vld [vmem:[%s12 + $0x38] sm:$0xff]
      %v1432 = vlaneseq
      %v1433 = vshrl.u32 %v1432, 7
      %v1434 = vsub.s32 0, %v1433
      %v1435 = vrot.slane %v1423, %v1434
      %v1436 = vmul.f32 %v1424, %v1435
      %v1437 = vmul.f32 %v1425, %v1435
      %v1438 = vmul.f32 %v1426, %v1435
      %v1439 = vmul.f32 %v1427, %v1435
      %v1440 = vmul.f32 %v1428, %v1435
      %v1441 = vmul.f32 %v1429, %v1435
      %v1442 = vmul.f32 %v1430, %v1435
      %v1443 = vmul.f32 %v1431, %v1435
      %vm1444 = vcmask 261120
      %v1445 = vsel %vm1444, %v1436, 0.0
      %1446 = vadd.xlane.f32.xlu0 %v1445
      %v1447 = vpop.xlane.xlu0 %1446
      %v1448 = vsel %vm1444, %v1437, 0.0
      %1449 = vadd.xlane.f32.xlu0 %v1448
      %v1450 = vpop.xlane.xlu0 %1449
      %v1451 = vsel %vm1444, %v1438, 0.0
      %1452 = vadd.xlane.f32.xlu0 %v1451
      %v1453 = vpop.xlane.xlu0 %1452
      %v1454 = vsel %vm1444, %v1439, 0.0
      %1455 = vadd.xlane.f32.xlu0 %v1454
      %v1456 = vpop.xlane.xlu0 %1455
      %v1457 = vsel %vm1444, %v1440, 0.0
      %1458 = vadd.xlane.f32.xlu0 %v1457
      %v1459 = vpop.xlane.xlu0 %1458
      %v1460 = vsel %vm1444, %v1441, 0.0
      %1461 = vadd.xlane.f32.xlu0 %v1460
      %v1462 = vpop.xlane.xlu0 %1461
      %v1463 = vsel %vm1444, %v1442, 0.0
      %1464 = vadd.xlane.f32.xlu0 %v1463
      %v1465 = vpop.xlane.xlu0 %1464
      %v1466 = vsel %vm1444, %v1443, 0.0
      %1467 = vadd.xlane.f32.xlu0 %v1466
      %v1468 = vpop.xlane.xlu0 %1467
      %v1469 = vld [vmem:[%s13] sm:$0xff]
      %v1470 = vld [vmem:[%s13 + $0x8] sm:$0xff]
      %v1471 = vld [vmem:[%s13 + $0x10] sm:$0xff]
      %v1472 = vld [vmem:[%s13 + $0x18] sm:$0xff]
      %v1473 = vld [vmem:[%s13 + $0x20] sm:$0xff]
      %v1474 = vld [vmem:[%s13 + $0x28] sm:$0xff]
      %v1475 = vld [vmem:[%s13 + $0x30] sm:$0xff]
      %v1476 = vld [vmem:[%s13 + $0x38] sm:$0xff]
      %v1477 = vadd.f32 %v1447, %v1469
      %v1478 = vadd.f32 %v1450, %v1470
      %v1479 = vadd.f32 %v1453, %v1471
      %v1480 = vadd.f32 %v1456, %v1472
      %v1481 = vadd.f32 %v1459, %v1473
      %v1482 = vadd.f32 %v1462, %v1474
      %v1483 = vadd.f32 %v1465, %v1475
      %v1484 = vadd.f32 %v1468, %v1476
      %v1485 = vxor.u32 %v1477, 2147483648
      %v1486 = vxor.u32 %v1478, 2147483648
      %v1487 = vxor.u32 %v1479, 2147483648
      %v1488 = vxor.u32 %v1480, 2147483648
      %v1489 = vxor.u32 %v1481, 2147483648
      %v1490 = vxor.u32 %v1482, 2147483648
      %v1491 = vxor.u32 %v1483, 2147483648
      %v1492 = vxor.u32 %v1484, 2147483648
      %v1493 = vmul.f32 %v1485, 1.442695
      %v1494 = vpow.pop %v1493
      %v1495 = vmul.f32 %v1486, 1.442695
      %v1496 = vpow.pop %v1495
      %v1497 = vmul.f32 %v1487, 1.442695
      %v1498 = vpow.pop %v1497
      %v1499 = vmul.f32 %v1488, 1.442695
      %v1500 = vpow.pop %v1499
      %v1501 = vmul.f32 %v1489, 1.442695
      %v1502 = vpow.pop %v1501
      %v1503 = vmul.f32 %v1490, 1.442695
      %v1504 = vpow.pop %v1503
      %v1505 = vmul.f32 %v1491, 1.442695
      %v1506 = vpow.pop %v1505
      %v1507 = vmul.f32 %v1492, 1.442695
      %v1508 = vpow.pop %v1507
      %v1509 = vadd.f32 %v1494, 1.0
      %v1510 = vadd.f32 %v1496, 1.0
      %v1511 = vadd.f32 %v1498, 1.0
      %v1512 = vadd.f32 %v1500, 1.0
      %v1513 = vadd.f32 %v1502, 1.0
      %v1514 = vadd.f32 %v1504, 1.0
      %v1515 = vadd.f32 %v1506, 1.0
      %v1516 = vadd.f32 %v1508, 1.0
      %v1517 = vrcp.pop %v1509
      %v1518 = vmul.f32 1.0, %v1517
      %v1519 = vrcp.pop %v1510
      %v1520 = vmul.f32 1.0, %v1519
      %v1521 = vrcp.pop %v1511
      %v1522 = vmul.f32 1.0, %v1521
      %v1523 = vrcp.pop %v1512
      %v1524 = vmul.f32 1.0, %v1523
      %v1525 = vrcp.pop %v1513
      %v1526 = vmul.f32 1.0, %v1525
      %v1527 = vrcp.pop %v1514
      %v1528 = vmul.f32 1.0, %v1527
      %v1529 = vrcp.pop %v1515
      %v1530 = vmul.f32 1.0, %v1529
      %v1531 = vrcp.pop %v1516
      %v1532 = vmul.f32 1.0, %v1531
      %v1533 = vmul.f32 %v1477, %v1518
      %v1534 = vmul.f32 %v1478, %v1520
      %v1535 = vmul.f32 %v1479, %v1522
      %v1536 = vmul.f32 %v1480, %v1524
      %v1537 = vmul.f32 %v1481, %v1526
      %v1538 = vmul.f32 %v1482, %v1528
      %v1539 = vmul.f32 %v1483, %v1530
      %v1540 = vmul.f32 %v1484, %v1532
      %v1541 = vld [vmem:[%s14] sm:$0xff]
      %v1542 = vld [vmem:[%s14 + $0x8] sm:$0xff]
      %v1543 = vld [vmem:[%s14 + $0x10] sm:$0xff]
      %v1544 = vld [vmem:[%s14 + $0x18] sm:$0xff]
      %v1545 = vld [vmem:[%s14 + $0x20] sm:$0xff]
      %v1546 = vld [vmem:[%s14 + $0x28] sm:$0xff]
      %v1547 = vld [vmem:[%s14 + $0x30] sm:$0xff]
      %v1548 = vld [vmem:[%s14 + $0x38] sm:$0xff]
      %1550 = vset.pattern.permute.xlu0 0
      %1551 = vperm.xlu0 %1550, %v1533
      %v1552 = vpop.permute.xlu0 %1551
      %1555 = vset.pattern.permute.xlu0 0
      %1556 = vperm.xlu0 %1555, %v1534
      %v1557 = vpop.permute.xlu0 %1556
      %1560 = vset.pattern.permute.xlu0 0
      %1561 = vperm.xlu0 %1560, %v1535
      %v1562 = vpop.permute.xlu0 %1561
      %1565 = vset.pattern.permute.xlu0 0
      %1566 = vperm.xlu0 %1565, %v1536
      %v1567 = vpop.permute.xlu0 %1566
      %1570 = vset.pattern.permute.xlu0 0
      %1571 = vperm.xlu0 %1570, %v1537
      %v1572 = vpop.permute.xlu0 %1571
      %1575 = vset.pattern.permute.xlu0 0
      %1576 = vperm.xlu0 %1575, %v1538
      %v1577 = vpop.permute.xlu0 %1576
      %1580 = vset.pattern.permute.xlu0 0
      %1581 = vperm.xlu0 %1580, %v1539
      %v1582 = vpop.permute.xlu0 %1581
      %1585 = vset.pattern.permute.xlu0 0
      %1586 = vperm.xlu0 %1585, %v1540
      %v1587 = vpop.permute.xlu0 %1586
      %v1589 = vmul.f32 %v1541, %v1552
      %v1590 = vmul.f32 %v1542, %v1557
      %v1591 = vmul.f32 %v1543, %v1562
      %v1592 = vmul.f32 %v1544, %v1567
      %v1593 = vmul.f32 %v1545, %v1572
      %v1594 = vmul.f32 %v1546, %v1577
      %v1595 = vmul.f32 %v1547, %v1582
      %v1596 = vmul.f32 %v1548, %v1587
      %vm1597 = vcmask 523264
      %v1598 = vsel %vm1597, %v1589, 0.0
      %v1599 = vsel %vm1597, %v1590, 0.0
      %v1600 = vadd.f32 %v1598, %v1599
      %v1601 = vsel %vm1597, %v1591, 0.0
      %v1602 = vadd.f32 %v1600, %v1601
      %v1603 = vsel %vm1597, %v1592, 0.0
      %v1604 = vadd.f32 %v1602, %v1603
      %v1605 = vsel %vm1597, %v1593, 0.0
      %v1606 = vadd.f32 %v1604, %v1605
      %v1607 = vsel %vm1597, %v1594, 0.0
      %v1608 = vadd.f32 %v1606, %v1607
      %v1609 = vsel %vm1597, %v1595, 0.0
      %v1610 = vadd.f32 %v1608, %v1609
      %v1611 = vsel %vm1597, %v1596, 0.0
      %v1612 = vadd.f32 %v1610, %v1611
      %v1613 = vrot.slane %v1612, 4
      %v1614 = vadd.f32 %v1612, %v1613
      %v1615 = vrot.slane %v1614, 2
      %v1616 = vadd.f32 %v1614, %v1615
      %v1617 = vrot.slane %v1616, 1
      %v1618 = vadd.f32 %v1616, %v1617
      %v1619 = vld [vmem:[%s15] sm:$0x1]
      %v1620 = vadd.f32 %v1618, %v1619
      %v1621 = vxor.u32 %v1620, 2147483648
      %v1622 = vmul.f32 %v1621, 1.442695
      %v1623 = vpow.pop %v1622
      %v1624 = vadd.f32 %v1623, 1.0
      %v1625 = vrcp.pop %v1624
      %v1626 = vmul.f32 1.0, %v1625
      %v1627 = vmul.f32 %v1620, %v1626
      %v1628 = vld [vmem:[%s16] sm:$0xff]
      %v1629 = vld [vmem:[%s16 + $0x8] sm:$0xff]
      %v1630 = vld [vmem:[%s16 + $0x10] sm:$0xff]
      %v1631 = vld [vmem:[%s16 + $0x18] sm:$0xff]
      %v1632 = vld [vmem:[%s16 + $0x20] sm:$0xff]
      %v1633 = vld [vmem:[%s16 + $0x28] sm:$0xff]
      %v1634 = vld [vmem:[%s16 + $0x30] sm:$0xff]
      %v1635 = vld [vmem:[%s16 + $0x38] sm:$0xff]
      %v1636 = vld [vmem:[%s16 + $0x40] sm:$0xff]
      %v1637 = vld [vmem:[%s16 + $0x48] sm:$0xff]
      %v1638 = vld [vmem:[%s16 + $0x50] sm:$0xff]
      %v1639 = vld [vmem:[%s16 + $0x58] sm:$0xff]
      %v1640 = vld [vmem:[%s16 + $0x60] sm:$0xff]
      %v1641 = vld [vmem:[%s16 + $0x68] sm:$0xff]
      %v1642 = vld [vmem:[%s16 + $0x70] sm:$0xff]
      %v1643 = vld [vmem:[%s16 + $0x78] sm:$0xff]
      %v1644 = vlaneseq
      %v1645 = vshrl.u32 %v1644, 7
      %v1646 = vsub.s32 0, %v1645
      %v1647 = vrot.slane %v1627, %v1646
      %v1648 = vmul.f32 %v1628, %v1647
      %v1649 = vmul.f32 %v1629, %v1647
      %v1650 = vmul.f32 %v1630, %v1647
      %v1651 = vmul.f32 %v1631, %v1647
      %v1652 = vmul.f32 %v1632, %v1647
      %v1653 = vmul.f32 %v1633, %v1647
      %v1654 = vmul.f32 %v1634, %v1647
      %v1655 = vmul.f32 %v1635, %v1647
      %v1656 = vmul.f32 %v1636, %v1647
      %v1657 = vmul.f32 %v1637, %v1647
      %v1658 = vmul.f32 %v1638, %v1647
      %v1659 = vmul.f32 %v1639, %v1647
      %v1660 = vmul.f32 %v1640, %v1647
      %v1661 = vmul.f32 %v1641, %v1647
      %v1662 = vmul.f32 %v1642, %v1647
      %v1663 = vmul.f32 %v1643, %v1647
      %v1664 = vsel %vm1597, %v1648, 0.0
      %1665 = vadd.xlane.f32.xlu0 %v1664
      %v1666 = vpop.xlane.xlu0 %1665
      %v1667 = vsel %vm1597, %v1649, 0.0
      %1668 = vadd.xlane.f32.xlu0 %v1667
      %v1669 = vpop.xlane.xlu0 %1668
      %v1670 = vsel %vm1597, %v1650, 0.0
      %1671 = vadd.xlane.f32.xlu0 %v1670
      %v1672 = vpop.xlane.xlu0 %1671
      %v1673 = vsel %vm1597, %v1651, 0.0
      %1674 = vadd.xlane.f32.xlu0 %v1673
      %v1675 = vpop.xlane.xlu0 %1674
      %v1676 = vsel %vm1597, %v1652, 0.0
      %1677 = vadd.xlane.f32.xlu0 %v1676
      %v1678 = vpop.xlane.xlu0 %1677
      %v1679 = vsel %vm1597, %v1653, 0.0
      %1680 = vadd.xlane.f32.xlu0 %v1679
      %v1681 = vpop.xlane.xlu0 %1680
      %v1682 = vsel %vm1597, %v1654, 0.0
      %1683 = vadd.xlane.f32.xlu0 %v1682
      %v1684 = vpop.xlane.xlu0 %1683
      %v1685 = vsel %vm1597, %v1655, 0.0
      %1686 = vadd.xlane.f32.xlu0 %v1685
      %v1687 = vpop.xlane.xlu0 %1686
      %v1688 = vsel %vm1597, %v1656, 0.0
      %1689 = vadd.xlane.f32.xlu0 %v1688
      %v1690 = vpop.xlane.xlu0 %1689
      %v1691 = vsel %vm1597, %v1657, 0.0
      %1692 = vadd.xlane.f32.xlu0 %v1691
      %v1693 = vpop.xlane.xlu0 %1692
      %v1694 = vsel %vm1597, %v1658, 0.0
      %1695 = vadd.xlane.f32.xlu0 %v1694
      %v1696 = vpop.xlane.xlu0 %1695
      %v1697 = vsel %vm1597, %v1659, 0.0
      %1698 = vadd.xlane.f32.xlu0 %v1697
      %v1699 = vpop.xlane.xlu0 %1698
      %v1700 = vsel %vm1597, %v1660, 0.0
      %1701 = vadd.xlane.f32.xlu0 %v1700
      %v1702 = vpop.xlane.xlu0 %1701
      %v1703 = vsel %vm1597, %v1661, 0.0
      %1704 = vadd.xlane.f32.xlu0 %v1703
      %v1705 = vpop.xlane.xlu0 %1704
      %v1706 = vsel %vm1597, %v1662, 0.0
      %1707 = vadd.xlane.f32.xlu0 %v1706
      %v1708 = vpop.xlane.xlu0 %1707
      %v1709 = vsel %vm1597, %v1663, 0.0
      %1710 = vadd.xlane.f32.xlu0 %v1709
      %v1711 = vpop.xlane.xlu0 %1710
      %v1712 = vld [vmem:[%s17] sm:$0xff]
      %v1713 = vld [vmem:[%s17 + $0x8] sm:$0xff]
      %v1714 = vld [vmem:[%s17 + $0x10] sm:$0xff]
      %v1715 = vld [vmem:[%s17 + $0x18] sm:$0xff]
      %v1716 = vld [vmem:[%s17 + $0x20] sm:$0xff]
      %v1717 = vld [vmem:[%s17 + $0x28] sm:$0xff]
      %v1718 = vld [vmem:[%s17 + $0x30] sm:$0xff]
      %v1719 = vld [vmem:[%s17 + $0x38] sm:$0xff]
      %v1720 = vld [vmem:[%s17 + $0x40] sm:$0xff]
      %v1721 = vld [vmem:[%s17 + $0x48] sm:$0xff]
      %v1722 = vld [vmem:[%s17 + $0x50] sm:$0xff]
      %v1723 = vld [vmem:[%s17 + $0x58] sm:$0xff]
      %v1724 = vld [vmem:[%s17 + $0x60] sm:$0xff]
      %v1725 = vld [vmem:[%s17 + $0x68] sm:$0xff]
      %v1726 = vld [vmem:[%s17 + $0x70] sm:$0xff]
      %v1727 = vld [vmem:[%s17 + $0x78] sm:$0xff]
      %v1728 = vadd.f32 %v1666, %v1712
      %v1729 = vadd.f32 %v1669, %v1713
      %v1730 = vadd.f32 %v1672, %v1714
      %v1731 = vadd.f32 %v1675, %v1715
      %v1732 = vadd.f32 %v1678, %v1716
      %v1733 = vadd.f32 %v1681, %v1717
      %v1734 = vadd.f32 %v1684, %v1718
      %v1735 = vadd.f32 %v1687, %v1719
      %v1736 = vadd.f32 %v1690, %v1720
      %v1737 = vadd.f32 %v1693, %v1721
      %v1738 = vadd.f32 %v1696, %v1722
      %v1739 = vadd.f32 %v1699, %v1723
      %v1740 = vadd.f32 %v1702, %v1724
      %v1741 = vadd.f32 %v1705, %v1725
      %v1742 = vadd.f32 %v1708, %v1726
      %v1743 = vadd.f32 %v1711, %v1727
      %v1744 = vlaneseq
      %v1745 = vand.u32 %v1744, 127
      %vm1746 = vcmp.ge.s32.totalorder %v1745, 1
      %vm1747 = vcmp.lt.s32.totalorder %v1745, 127
      %vm1748 = vcmp.ge.s32.totalorder %v1745, 2
      %vm1749 = vcmp.lt.s32.totalorder %v1745, 126
      %1750 = vrot.lane.b32.xlu0 %v1191, 1
      %v1751 = vpop.permute.xlu0 %1750
      %1752 = vrot.lane.b32.xlu0 %v1192, 1
      %v1753 = vpop.permute.xlu0 %1752
      %1754 = vrot.lane.b32.xlu0 %v1193, 1
      %v1755 = vpop.permute.xlu0 %1754
      %1756 = vrot.lane.b32.xlu0 %v1194, 1
      %v1757 = vpop.permute.xlu0 %1756
      %v1758 = vsel %vm1746, 1, 0
      %vm1759 = vcmp.eq.s32.totalorder %v1758, 1
      %v1760 = vsel %vm1759, %v1751, 0.0
      %v1761 = vsel %vm1759, %v1753, 0.0
      %v1762 = vsel %vm1759, %v1755, 0.0
      %v1763 = vsel %vm1759, %v1757, 0.0
      %1764 = vrot.lane.b32.xlu0 %v1191, 127
      %v1765 = vpop.permute.xlu0 %1764
      %1766 = vrot.lane.b32.xlu0 %v1192, 127
      %v1767 = vpop.permute.xlu0 %1766
      %1768 = vrot.lane.b32.xlu0 %v1193, 127
      %v1769 = vpop.permute.xlu0 %1768
      %1770 = vrot.lane.b32.xlu0 %v1194, 127
      %v1771 = vpop.permute.xlu0 %1770
      %v1772 = vsel %vm1747, 1, 0
      %vm1773 = vcmp.eq.s32.totalorder %v1772, 1
      %v1774 = vsel %vm1773, %v1765, 0.0
      %v1775 = vsel %vm1773, %v1767, 0.0
      %v1776 = vsel %vm1773, %v1769, 0.0
      %v1777 = vsel %vm1773, %v1771, 0.0
      %v1778 = vpack.c.bf16 %v1761, %v1760
      %v1779 = vpack.c.bf16 %v1763, %v1762
      %v1780 = vpack.c.bf16 %v1192, %v1191
      %v1781 = vpack.c.bf16 %v1194, %v1193
      %v1782 = vpack.c.bf16 %v1775, %v1774
      %v1783 = vpack.c.bf16 %v1777, %v1776
      %v1784 = vld [vmem:[%s19] sm:$0xf]
      %v1785 = vld [vmem:[%s19 + $0x4] sm:$0xf]
      %v1786 = vld [vmem:[%s19 + $0x8] sm:$0xf]
      %v1787 = vld [vmem:[%s19 + $0xc] sm:$0xf]
      %v1788 = vld [vmem:[%s19 + $0x10] sm:$0xf]
      %v1789 = vld [vmem:[%s19 + $0x14] sm:$0xf]
      %v1790 = vld [vmem:[%s19 + $0x18] sm:$0xf]
      %v1791 = vld [vmem:[%s19 + $0x1c] sm:$0xf]
      %v1792 = vld [vmem:[%s19 + $0x20] sm:$0xf]
      %v1793 = vld [vmem:[%s19 + $0x24] sm:$0xf]
      %v1794 = vld [vmem:[%s19 + $0x28] sm:$0xf]
      %v1795 = vld [vmem:[%s19 + $0x2c] sm:$0xf]
      %v1796 = vld [vmem:[%s19 + $0x30] sm:$0xf]
      %v1797 = vld [vmem:[%s19 + $0x34] sm:$0xf]
      %v1798 = vld [vmem:[%s19 + $0x38] sm:$0xf]
      %v1799 = vld [vmem:[%s19 + $0x3c] sm:$0xf]
      %v1816 = vunpack.c.l.b16 %v1784
      %v1817 = vunpack.c.l.b16 %v1785
      %v1818 = vunpack.c.l.b16 %v1786
      %v1819 = vunpack.c.l.b16 %v1787
      %v1820 = vunpack.c.l.b16 %v1788
      %v1821 = vunpack.c.l.b16 %v1789
      %v1822 = vunpack.c.l.b16 %v1790
      %v1823 = vunpack.c.l.b16 %v1791
      %v1824 = vunpack.c.l.b16 %v1792
      %v1825 = vunpack.c.l.b16 %v1793
      %v1826 = vunpack.c.l.b16 %v1794
      %v1827 = vunpack.c.l.b16 %v1795
      %v1828 = vunpack.c.l.b16 %v1796
      %v1829 = vunpack.c.l.b16 %v1797
      %v1830 = vunpack.c.l.b16 %v1798
      %v1831 = vunpack.c.l.b16 %v1799
      %v1832 = vpack.c.b16 %v1817, %v1816
      %v1833 = vpack.c.b16 %v1819, %v1818
      %v1834 = vpack.c.b16 %v1821, %v1820
      %v1835 = vpack.c.b16 %v1823, %v1822
      %v1836 = vpack.c.b16 %v1825, %v1824
      %v1837 = vpack.c.b16 %v1827, %v1826
      %v1838 = vpack.c.b16 %v1829, %v1828
      %v1839 = vpack.c.b16 %v1831, %v1830
      %vm1840 = vcmask 785408
      %v1842 = vsel %vm1840, %v1832, 0
      %v1845 = vsel %vm1840, %v1833, 0
      %v1848 = vsel %vm1840, %v1834, 0
      %v1851 = vsel %vm1840, %v1835, 0
      %v1854 = vsel %vm1840, %v1836, 0
      %v1857 = vsel %vm1840, %v1837, 0
      %v1860 = vsel %vm1840, %v1838, 0
      %v1863 = vsel %vm1840, %v1839, 0
      %1865 = vmatprep.subr.bf16.mxu0 0
      %1866 = vmatpush1.bf16.msra.mxu0 %v1778
      %1867 = vmatprep.subr.bf16.mxu0 0
      %1868 = vmatpush1.bf16.msra.mxu0 %v1779
      %1869 = vmatprep.subr.bf16.mxu0 0
      %1870 = vmatpush1.bf16.msra.mxu0 %v1780
      %1871 = vmatprep.subr.bf16.mxu0 0
      %1872 = vmatpush1.bf16.msra.mxu0 %v1781
      %1873 = vmatprep.subr.bf16.mxu0 0
      %1874 = vmatpush1.bf16.msra.mxu0 %v1782
      %1875 = vmatprep.subr.bf16.mxu0 0
      %1876 = vmatpush1.bf16.msra.mxu0 %v1783
      %1877 = vmatprep.subr.bf16.mxu0 0
      %1878 = vmatpush1.bf16.msra.mxu0 0
      %1879 = vmatprep.subr.bf16.mxu0 0
      %1880 = vmatpush1.bf16.msra.mxu0 0
      %1881 = vmatprep.subr.bf16.mxu0 0
      %1882 = vmatpush1.bf16.msra.mxu0 0
      %1883 = vmatprep.subr.bf16.mxu0 0
      %1884 = vmatpush1.bf16.msra.mxu0 0
      %1885 = vmatprep.subr.bf16.mxu0 0
      %1886 = vmatpush1.bf16.msra.mxu0 0
      %1887 = vmatprep.subr.bf16.mxu0 0
      %1888 = vmatpush1.bf16.msra.mxu0 0
      %1889 = vmatprep.subr.bf16.mxu0 0
      %1890 = vmatpush1.bf16.msra.mxu0 0
      %1891 = vmatprep.subr.bf16.mxu0 0
      %1892 = vmatpush1.bf16.msra.mxu0 0
      %1893 = vmatprep.subr.bf16.mxu0 0
      %1894 = vmatpush1.bf16.msra.mxu0 0
      %1895 = vmatprep.subr.bf16.mxu0 0
      %1896 = vmatpush1.bf16.msra.mxu0 0
      %1897 = vmatprep.mubr.bf16.mxu0 0
      %1898 = vmatmul.mubr.bf16.gmra.mrb[0].mxu0 %v1842
      %v1899 = vpop.f32.mrb[0].mxu0
      %v1900 = vadd.f32 0.0, %v1899
      %v1901 = vpop.f32.mrb[0].mxu0
      %v1902 = vpop.f32.mrb[0].mxu0
      %v1903 = vadd.f32 0.0, %v1902
      %v1904 = vpop.f32.mrb[0].mxu0
      %1905 = vmatprep.mubr.bf16.mxu0 0
      %1906 = vmatmul.mubr.bf16.gmra.mrb[0].mxu0 %v1845
      %v1907 = vpop.f32.mrb[0].mxu0
      %v1908 = vadd.f32 0.0, %v1907
      %v1909 = vpop.f32.mrb[0].mxu0
      %v1910 = vpop.f32.mrb[0].mxu0
      %v1911 = vadd.f32 0.0, %v1910
      %v1912 = vpop.f32.mrb[0].mxu0
      %1913 = vmatprep.mubr.bf16.mxu0 0
      %1914 = vmatmul.mubr.bf16.gmra.mrb[0].mxu0 %v1848
      %v1915 = vpop.f32.mrb[0].mxu0
      %v1916 = vadd.f32 0.0, %v1915
      %v1917 = vpop.f32.mrb[0].mxu0
      %v1918 = vpop.f32.mrb[0].mxu0
      %v1919 = vadd.f32 0.0, %v1918
      %v1920 = vpop.f32.mrb[0].mxu0
      %1921 = vmatprep.mubr.bf16.mxu0 0
      %1922 = vmatmul.mubr.bf16.gmra.mrb[0].mxu0 %v1851
      %v1923 = vpop.f32.mrb[0].mxu0
      %v1924 = vadd.f32 0.0, %v1923
      %v1925 = vpop.f32.mrb[0].mxu0
      %v1926 = vpop.f32.mrb[0].mxu0
      %v1927 = vadd.f32 0.0, %v1926
      %v1928 = vpop.f32.mrb[0].mxu0
      %1929 = vmatprep.mubr.bf16.mxu0 0
      %1930 = vmatmul.mubr.bf16.gmra.mrb[0].mxu0 %v1854
      %v1931 = vpop.f32.mrb[0].mxu0
      %v1932 = vadd.f32 0.0, %v1931
      %v1933 = vpop.f32.mrb[0].mxu0
      %v1934 = vpop.f32.mrb[0].mxu0
      %v1935 = vadd.f32 0.0, %v1934
      %v1936 = vpop.f32.mrb[0].mxu0
      %1937 = vmatprep.mubr.bf16.mxu0 0
      %1938 = vmatmul.mubr.bf16.gmra.mrb[0].mxu0 %v1857
      %v1939 = vpop.f32.mrb[0].mxu0
      %v1940 = vadd.f32 0.0, %v1939
      %v1941 = vpop.f32.mrb[0].mxu0
      %v1942 = vpop.f32.mrb[0].mxu0
      %v1943 = vadd.f32 0.0, %v1942
      %v1944 = vpop.f32.mrb[0].mxu0
      %1945 = vmatprep.mubr.bf16.mxu0 0
      %1946 = vmatmul.mubr.bf16.gmra.mrb[0].mxu0 %v1860
      %v1947 = vpop.f32.mrb[0].mxu0
      %v1948 = vadd.f32 0.0, %v1947
      %v1949 = vpop.f32.mrb[0].mxu0
      %v1950 = vpop.f32.mrb[0].mxu0
      %v1951 = vadd.f32 0.0, %v1950
      %v1952 = vpop.f32.mrb[0].mxu0
      %1953 = vmatprep.mubr.bf16.mxu0 0
      %1954 = vmatmul.mubr.bf16.gmra.mrb[0].mxu0 %v1863
      %v1955 = vpop.f32.mrb[0].mxu0
      %v1956 = vadd.f32 0.0, %v1955
      %v1957 = vpop.f32.mrb[0].mxu0
      %v1958 = vpop.f32.mrb[0].mxu0
      %v1959 = vadd.f32 0.0, %v1958
      %v1960 = vpop.f32.mrb[0].mxu0
      %1961 = vdwg.mxu0
      %1962 = vrot.lane.b32.xlu0 %v1191, 2
      %v1963 = vpop.permute.xlu0 %1962
      %1964 = vrot.lane.b32.xlu0 %v1192, 2
      %v1965 = vpop.permute.xlu0 %1964
      %1966 = vrot.lane.b32.xlu0 %v1193, 2
      %v1967 = vpop.permute.xlu0 %1966
      %1968 = vrot.lane.b32.xlu0 %v1194, 2
      %v1969 = vpop.permute.xlu0 %1968
      %v1970 = vsel %vm1748, 1, 0
      %vm1971 = vcmp.eq.s32.totalorder %v1970, 1
      %v1972 = vsel %vm1971, %v1963, 0.0
      %v1973 = vsel %vm1971, %v1965, 0.0
      %v1974 = vsel %vm1971, %v1967, 0.0
      %v1975 = vsel %vm1971, %v1969, 0.0
      %1976 = vrot.lane.b32.xlu0 %v1191, 126
      %v1977 = vpop.permute.xlu0 %1976
      %1978 = vrot.lane.b32.xlu0 %v1192, 126
      %v1979 = vpop.permute.xlu0 %1978
      %1980 = vrot.lane.b32.xlu0 %v1193, 126
      %v1981 = vpop.permute.xlu0 %1980
      %1982 = vrot.lane.b32.xlu0 %v1194, 126
      %v1983 = vpop.permute.xlu0 %1982
      %v1984 = vsel %vm1749, 1, 0
      %vm1985 = vcmp.eq.s32.totalorder %v1984, 1
      %v1986 = vsel %vm1985, %v1977, 0.0
      %v1987 = vsel %vm1985, %v1979, 0.0
      %v1988 = vsel %vm1985, %v1981, 0.0
      %v1989 = vsel %vm1985, %v1983, 0.0
      %v1990 = vpack.c.bf16 %v1973, %v1972
      %v1991 = vpack.c.bf16 %v1975, %v1974
      %v1992 = vpack.c.bf16 %v1987, %v1986
      %v1993 = vpack.c.bf16 %v1989, %v1988
      %s1994 = scalar_lea.vmem %s19, 64
      %v1995 = vld [vmem:[%s1994] sm:$0xf]
      %v1996 = vld [vmem:[%s1994 + $0x4] sm:$0xf]
      %v1997 = vld [vmem:[%s1994 + $0x8] sm:$0xf]
      %v1998 = vld [vmem:[%s1994 + $0xc] sm:$0xf]
      %v1999 = vld [vmem:[%s1994 + $0x10] sm:$0xf]
      %v2000 = vld [vmem:[%s1994 + $0x14] sm:$0xf]
      %v2001 = vld [vmem:[%s1994 + $0x18] sm:$0xf]
      %v2002 = vld [vmem:[%s1994 + $0x1c] sm:$0xf]
      %v2003 = vld [vmem:[%s1994 + $0x20] sm:$0xf]
      %v2004 = vld [vmem:[%s1994 + $0x24] sm:$0xf]
      %v2005 = vld [vmem:[%s1994 + $0x28] sm:$0xf]
      %v2006 = vld [vmem:[%s1994 + $0x2c] sm:$0xf]
      %v2007 = vld [vmem:[%s1994 + $0x30] sm:$0xf]
      %v2008 = vld [vmem:[%s1994 + $0x34] sm:$0xf]
      %v2009 = vld [vmem:[%s1994 + $0x38] sm:$0xf]
      %v2010 = vld [vmem:[%s1994 + $0x3c] sm:$0xf]
      %v2027 = vunpack.c.l.b16 %v1995
      %v2028 = vunpack.c.l.b16 %v1996
      %v2029 = vunpack.c.l.b16 %v1997
      %v2030 = vunpack.c.l.b16 %v1998
      %v2031 = vunpack.c.l.b16 %v1999
      %v2032 = vunpack.c.l.b16 %v2000
      %v2033 = vunpack.c.l.b16 %v2001
      %v2034 = vunpack.c.l.b16 %v2002
      %v2035 = vunpack.c.l.b16 %v2003
      %v2036 = vunpack.c.l.b16 %v2004
      %v2037 = vunpack.c.l.b16 %v2005
      %v2038 = vunpack.c.l.b16 %v2006
      %v2039 = vunpack.c.l.b16 %v2007
      %v2040 = vunpack.c.l.b16 %v2008
      %v2041 = vunpack.c.l.b16 %v2009
      %v2042 = vunpack.c.l.b16 %v2010
      %v2043 = vpack.c.b16 %v2028, %v2027
      %v2044 = vpack.c.b16 %v2030, %v2029
      %v2045 = vpack.c.b16 %v2032, %v2031
      %v2046 = vpack.c.b16 %v2034, %v2033
      %v2047 = vpack.c.b16 %v2036, %v2035
      %v2048 = vpack.c.b16 %v2038, %v2037
      %v2049 = vpack.c.b16 %v2040, %v2039
      %v2050 = vpack.c.b16 %v2042, %v2041
      %v2052 = vsel %vm1840, %v2043, 0
      %v2055 = vsel %vm1840, %v2044, 0
      %v2058 = vsel %vm1840, %v2045, 0
      %v2061 = vsel %vm1840, %v2046, 0
      %v2064 = vsel %vm1840, %v2047, 0
      %v2067 = vsel %vm1840, %v2048, 0
      %v2070 = vsel %vm1840, %v2049, 0
      %v2073 = vsel %vm1840, %v2050, 0
      %2075 = vmatprep.subr.bf16.mxu0 0
      %2076 = vmatpush1.bf16.msra.mxu0 %v1990
      %2077 = vmatprep.subr.bf16.mxu0 0
      %2078 = vmatpush1.bf16.msra.mxu0 %v1991
      %2079 = vmatprep.subr.bf16.mxu0 0
      %2080 = vmatpush1.bf16.msra.mxu0 %v1780
      %2081 = vmatprep.subr.bf16.mxu0 0
      %2082 = vmatpush1.bf16.msra.mxu0 %v1781
      %2083 = vmatprep.subr.bf16.mxu0 0
      %2084 = vmatpush1.bf16.msra.mxu0 %v1992
      %2085 = vmatprep.subr.bf16.mxu0 0
      %2086 = vmatpush1.bf16.msra.mxu0 %v1993
      %2087 = vmatprep.subr.bf16.mxu0 0
      %2088 = vmatpush1.bf16.msra.mxu0 0
      %2089 = vmatprep.subr.bf16.mxu0 0
      %2090 = vmatpush1.bf16.msra.mxu0 0
      %2091 = vmatprep.subr.bf16.mxu0 0
      %2092 = vmatpush1.bf16.msra.mxu0 0
      %2093 = vmatprep.subr.bf16.mxu0 0
      %2094 = vmatpush1.bf16.msra.mxu0 0
      %2095 = vmatprep.subr.bf16.mxu0 0
      %2096 = vmatpush1.bf16.msra.mxu0 0
      %2097 = vmatprep.subr.bf16.mxu0 0
      %2098 = vmatpush1.bf16.msra.mxu0 0
      %2099 = vmatprep.subr.bf16.mxu0 0
      %2100 = vmatpush1.bf16.msra.mxu0 0
      %2101 = vmatprep.subr.bf16.mxu0 0
      %2102 = vmatpush1.bf16.msra.mxu0 0
      %2103 = vmatprep.subr.bf16.mxu0 0
      %2104 = vmatpush1.bf16.msra.mxu0 0
      %2105 = vmatprep.subr.bf16.mxu0 0
      %2106 = vmatpush1.bf16.msra.mxu0 0
      %2107 = vmatprep.mubr.bf16.mxu0 0
      %2108 = vmatmul.mubr.bf16.gmra.mrb[0].mxu0 %v2052
      %v2109 = vpop.f32.mrb[0].mxu0
      %v2110 = vadd.f32 0.0, %v2109
      %v2111 = vpop.f32.mrb[0].mxu0
      %v2112 = vpop.f32.mrb[0].mxu0
      %v2113 = vadd.f32 0.0, %v2112
      %v2114 = vpop.f32.mrb[0].mxu0
      %2115 = vmatprep.mubr.bf16.mxu0 0
      %2116 = vmatmul.mubr.bf16.gmra.mrb[0].mxu0 %v2055
      %v2117 = vpop.f32.mrb[0].mxu0
      %v2118 = vadd.f32 0.0, %v2117
      %v2119 = vpop.f32.mrb[0].mxu0
      %v2120 = vpop.f32.mrb[0].mxu0
      %v2121 = vadd.f32 0.0, %v2120
      %v2122 = vpop.f32.mrb[0].mxu0
      %2123 = vmatprep.mubr.bf16.mxu0 0
      %2124 = vmatmul.mubr.bf16.gmra.mrb[0].mxu0 %v2058
      %v2125 = vpop.f32.mrb[0].mxu0
      %v2126 = vadd.f32 0.0, %v2125
      %v2127 = vpop.f32.mrb[0].mxu0
      %v2128 = vpop.f32.mrb[0].mxu0
      %v2129 = vadd.f32 0.0, %v2128
      %v2130 = vpop.f32.mrb[0].mxu0
      %2131 = vmatprep.mubr.bf16.mxu0 0
      %2132 = vmatmul.mubr.bf16.gmra.mrb[0].mxu0 %v2061
      %v2133 = vpop.f32.mrb[0].mxu0
      %v2134 = vadd.f32 0.0, %v2133
      %v2135 = vpop.f32.mrb[0].mxu0
      %v2136 = vpop.f32.mrb[0].mxu0
      %v2137 = vadd.f32 0.0, %v2136
      %v2138 = vpop.f32.mrb[0].mxu0
      %2139 = vmatprep.mubr.bf16.mxu0 0
      %2140 = vmatmul.mubr.bf16.gmra.mrb[0].mxu0 %v2064
      %v2141 = vpop.f32.mrb[0].mxu0
      %v2142 = vadd.f32 0.0, %v2141
      %v2143 = vpop.f32.mrb[0].mxu0
      %v2144 = vpop.f32.mrb[0].mxu0
      %v2145 = vadd.f32 0.0, %v2144
      %v2146 = vpop.f32.mrb[0].mxu0
      %2147 = vmatprep.mubr.bf16.mxu0 0
      %2148 = vmatmul.mubr.bf16.gmra.mrb[0].mxu0 %v2067
      %v2149 = vpop.f32.mrb[0].mxu0
      %v2150 = vadd.f32 0.0, %v2149
      %v2151 = vpop.f32.mrb[0].mxu0
      %v2152 = vpop.f32.mrb[0].mxu0
      %v2153 = vadd.f32 0.0, %v2152
      %v2154 = vpop.f32.mrb[0].mxu0
      %2155 = vmatprep.mubr.bf16.mxu0 0
      %2156 = vmatmul.mubr.bf16.gmra.mrb[0].mxu0 %v2070
      %v2157 = vpop.f32.mrb[0].mxu0
      %v2158 = vadd.f32 0.0, %v2157
      %v2159 = vpop.f32.mrb[0].mxu0
      %v2160 = vpop.f32.mrb[0].mxu0
      %v2161 = vadd.f32 0.0, %v2160
      %v2162 = vpop.f32.mrb[0].mxu0
      %2163 = vmatprep.mubr.bf16.mxu0 0
      %2164 = vmatmul.mubr.bf16.gmra.mrb[0].mxu0 %v2073
      %v2165 = vpop.f32.mrb[0].mxu0
      %v2166 = vadd.f32 0.0, %v2165
      %v2167 = vpop.f32.mrb[0].mxu0
      %v2168 = vpop.f32.mrb[0].mxu0
      %v2169 = vadd.f32 0.0, %v2168
      %v2170 = vpop.f32.mrb[0].mxu0
      %2171 = vdwg.mxu0
      %2173 = vset.pattern.permute.xlu0 0
      %2174 = vperm.xlu0 %2173, %v1728
      %v2175 = vpop.permute.xlu0 %2174
      %2178 = vset.pattern.permute.xlu0 0
      %2179 = vperm.xlu0 %2178, %v1729
      %v2180 = vpop.permute.xlu0 %2179
      %2183 = vset.pattern.permute.xlu0 0
      %2184 = vperm.xlu0 %2183, %v1730
      %v2185 = vpop.permute.xlu0 %2184
      %2188 = vset.pattern.permute.xlu0 0
      %2189 = vperm.xlu0 %2188, %v1731
      %v2190 = vpop.permute.xlu0 %2189
      %v2192 = vadd.f32 %v985, %v2175
      %v2193 = vadd.f32 %v986, %v2180
      %v2194 = vadd.f32 %v987, %v2185
      %v2195 = vadd.f32 %v988, %v2190
      %2196 = vrot.lane.b32.xlu0 %v2192, 1
      %v2197 = vpop.permute.xlu0 %2196
      %2198 = vrot.lane.b32.xlu0 %v2193, 1
      %v2199 = vpop.permute.xlu0 %2198
      %2200 = vrot.lane.b32.xlu0 %v2194, 1
      %v2201 = vpop.permute.xlu0 %2200
      %2202 = vrot.lane.b32.xlu0 %v2195, 1
      %v2203 = vpop.permute.xlu0 %2202
      %v2204 = vsel %vm1759, %v2197, 0.0
      %v2205 = vsel %vm1759, %v2199, 0.0
      %v2206 = vsel %vm1759, %v2201, 0.0
      %v2207 = vsel %vm1759, %v2203, 0.0
      %2208 = vrot.lane.b32.xlu0 %v2192, 127
      %v2209 = vpop.permute.xlu0 %2208
      %2210 = vrot.lane.b32.xlu0 %v2193, 127
      %v2211 = vpop.permute.xlu0 %2210
      %2212 = vrot.lane.b32.xlu0 %v2194, 127
      %v2213 = vpop.permute.xlu0 %2212
      %2214 = vrot.lane.b32.xlu0 %v2195, 127
      %v2215 = vpop.permute.xlu0 %2214
      %v2216 = vsel %vm1773, %v2209, 0.0
      %v2217 = vsel %vm1773, %v2211, 0.0
      %v2218 = vsel %vm1773, %v2213, 0.0
      %v2219 = vsel %vm1773, %v2215, 0.0
      %v2220 = vpack.c.bf16 %v2205, %v2204
      %v2221 = vpack.c.bf16 %v2207, %v2206
      %v2222 = vpack.c.bf16 %v2193, %v2192
      %v2223 = vpack.c.bf16 %v2195, %v2194
      %v2224 = vpack.c.bf16 %v2217, %v2216
      %v2225 = vpack.c.bf16 %v2219, %v2218
      %v2226 = vld [vmem:[%s18] sm:$0xf]
      %v2227 = vld [vmem:[%s18 + $0x4] sm:$0xf]
      %v2228 = vld [vmem:[%s18 + $0x8] sm:$0xf]
      %v2229 = vld [vmem:[%s18 + $0xc] sm:$0xf]
      %v2230 = vld [vmem:[%s18 + $0x10] sm:$0xf]
      %v2231 = vld [vmem:[%s18 + $0x14] sm:$0xf]
      %v2232 = vld [vmem:[%s18 + $0x18] sm:$0xf]
      %v2233 = vld [vmem:[%s18 + $0x1c] sm:$0xf]
      %v2242 = vunpack.c.l.b16 %v2226
      %v2243 = vunpack.c.l.b16 %v2227
      %v2244 = vunpack.c.l.b16 %v2228
      %v2245 = vunpack.c.l.b16 %v2229
      %v2246 = vunpack.c.l.b16 %v2230
      %v2247 = vunpack.c.l.b16 %v2231
      %v2248 = vunpack.c.l.b16 %v2232
      %v2249 = vunpack.c.l.b16 %v2233
      %v2250 = vpack.c.b16 %v2243, %v2242
      %v2251 = vpack.c.b16 %v2245, %v2244
      %v2252 = vpack.c.b16 %v2247, %v2246
      %v2253 = vpack.c.b16 %v2249, %v2248
      %v2255 = vsel %vm1840, %v2250, 0
      %v2258 = vsel %vm1840, %v2251, 0
      %v2261 = vsel %vm1840, %v2252, 0
      %v2264 = vsel %vm1840, %v2253, 0
      %2266 = vmatprep.subr.bf16.mxu0 0
      %2267 = vmatpush1.bf16.msra.mxu0 %v2220
      %2268 = vmatprep.subr.bf16.mxu0 0
      %2269 = vmatpush1.bf16.msra.mxu0 %v2221
      %2270 = vmatprep.subr.bf16.mxu0 0
      %2271 = vmatpush1.bf16.msra.mxu0 %v2222
      %2272 = vmatprep.subr.bf16.mxu0 0
      %2273 = vmatpush1.bf16.msra.mxu0 %v2223
      %2274 = vmatprep.subr.bf16.mxu0 0
      %2275 = vmatpush1.bf16.msra.mxu0 %v2224
      %2276 = vmatprep.subr.bf16.mxu0 0
      %2277 = vmatpush1.bf16.msra.mxu0 %v2225
      %2278 = vmatprep.subr.bf16.mxu0 0
      %2279 = vmatpush1.bf16.msra.mxu0 0
      %2280 = vmatprep.subr.bf16.mxu0 0
      %2281 = vmatpush1.bf16.msra.mxu0 0
      %2282 = vmatprep.subr.bf16.mxu0 0
      %2283 = vmatpush1.bf16.msra.mxu0 0
      %2284 = vmatprep.subr.bf16.mxu0 0
      %2285 = vmatpush1.bf16.msra.mxu0 0
      %2286 = vmatprep.subr.bf16.mxu0 0
      %2287 = vmatpush1.bf16.msra.mxu0 0
      %2288 = vmatprep.subr.bf16.mxu0 0
      %2289 = vmatpush1.bf16.msra.mxu0 0
      %2290 = vmatprep.subr.bf16.mxu0 0
      %2291 = vmatpush1.bf16.msra.mxu0 0
      %2292 = vmatprep.subr.bf16.mxu0 0
      %2293 = vmatpush1.bf16.msra.mxu0 0
      %2294 = vmatprep.subr.bf16.mxu0 0
      %2295 = vmatpush1.bf16.msra.mxu0 0
      %2296 = vmatprep.subr.bf16.mxu0 0
      %2297 = vmatpush1.bf16.msra.mxu0 0
      %2298 = vmatprep.mubr.bf16.mxu0 0
      %2299 = vmatmul.mubr.bf16.gmra.mrb[0].mxu0 %v2255
      %v2300 = vpop.f32.mrb[0].mxu0
      %v2301 = vadd.f32 %v1900, %v2300
      %v2302 = vpop.f32.mrb[0].mxu0
      %v2303 = vpop.f32.mrb[0].mxu0
      %v2304 = vadd.f32 %v1903, %v2303
      %v2305 = vpop.f32.mrb[0].mxu0
      %2306 = vmatprep.mubr.bf16.mxu0 0
      %2307 = vmatmul.mubr.bf16.gmra.mrb[0].mxu0 %v2258
      %v2308 = vpop.f32.mrb[0].mxu0
      %v2309 = vadd.f32 %v1908, %v2308
      %v2310 = vpop.f32.mrb[0].mxu0
      %v2311 = vpop.f32.mrb[0].mxu0
      %v2312 = vadd.f32 %v1911, %v2311
      %v2313 = vpop.f32.mrb[0].mxu0
      %2314 = vmatprep.mubr.bf16.mxu0 0
      %2315 = vmatmul.mubr.bf16.gmra.mrb[0].mxu0 %v2261
      %v2316 = vpop.f32.mrb[0].mxu0
      %v2317 = vadd.f32 %v1916, %v2316
      %v2318 = vpop.f32.mrb[0].mxu0
      %v2319 = vpop.f32.mrb[0].mxu0
      %v2320 = vadd.f32 %v1919, %v2319
      %v2321 = vpop.f32.mrb[0].mxu0
      %2322 = vmatprep.mubr.bf16.mxu0 0
      %2323 = vmatmul.mubr.bf16.gmra.mrb[0].mxu0 %v2264
      %v2324 = vpop.f32.mrb[0].mxu0
      %v2325 = vadd.f32 %v1924, %v2324
      %v2326 = vpop.f32.mrb[0].mxu0
      %v2327 = vpop.f32.mrb[0].mxu0
      %v2328 = vadd.f32 %v1927, %v2327
      %v2329 = vpop.f32.mrb[0].mxu0
      %2330 = vdwg.mxu0
      %v2331 = vld [vmem:[%s20] sm:$0xff]
      %v2332 = vld [vmem:[%s20 + $0x8] sm:$0xff]
      %v2333 = vld [vmem:[%s20 + $0x10] sm:$0xff]
      %v2334 = vld [vmem:[%s20 + $0x18] sm:$0xff]
      %v2335 = vld [vmem:[%s20 + $0x20] sm:$0xff]
      %v2336 = vld [vmem:[%s20 + $0x28] sm:$0xff]
      %v2337 = vld [vmem:[%s20 + $0x30] sm:$0xff]
      %v2338 = vld [vmem:[%s20 + $0x38] sm:$0xff]
      %2340 = vset.pattern.permute.xlu0 0
      %2341 = vperm.xlu0 %2340, %v2331
      %v2342 = vpop.permute.xlu0 %2341
      %2345 = vset.pattern.permute.xlu0 0
      %2346 = vperm.xlu0 %2345, %v2332
      %v2347 = vpop.permute.xlu0 %2346
      %2350 = vset.pattern.permute.xlu0 0
      %2351 = vperm.xlu0 %2350, %v2333
      %v2352 = vpop.permute.xlu0 %2351
      %2355 = vset.pattern.permute.xlu0 0
      %2356 = vperm.xlu0 %2355, %v2334
      %v2357 = vpop.permute.xlu0 %2356
      %2360 = vset.pattern.permute.xlu0 0
      %2361 = vperm.xlu0 %2360, %v2335
      %v2362 = vpop.permute.xlu0 %2361
      %2365 = vset.pattern.permute.xlu0 0
      %2366 = vperm.xlu0 %2365, %v2336
      %v2367 = vpop.permute.xlu0 %2366
      %2370 = vset.pattern.permute.xlu0 0
      %2371 = vperm.xlu0 %2370, %v2337
      %v2372 = vpop.permute.xlu0 %2371
      %2375 = vset.pattern.permute.xlu0 0
      %2376 = vperm.xlu0 %2375, %v2338
      %v2377 = vpop.permute.xlu0 %2376
      %v2379 = vadd.f32 %v2301, %v2342
      %v2380 = vadd.f32 %v2304, %v2347
      %v2381 = vadd.f32 %v2309, %v2352
      %v2382 = vadd.f32 %v2312, %v2357
      %v2383 = vadd.f32 %v2317, %v2362
      %v2384 = vadd.f32 %v2320, %v2367
      %v2385 = vadd.f32 %v2325, %v2372
      %v2386 = vadd.f32 %v2328, %v2377
      %v2387 = vpack.c.bf16 %v2380, %v2379
      %v2388 = vpack.c.bf16 %v2382, %v2381
      %v2389 = vpack.c.bf16 %v2384, %v2383
      %v2390 = vpack.c.bf16 %v2386, %v2385
      %v2391 = vxor.u32 %v2387, 2147516416
      %v2392 = vxor.u32 %v2388, 2147516416
      %v2394 = vmul.bf16 %v2391, 1069105081
      %v2395 = vpow.bf16.pop %v2394
      %v2397 = vmul.bf16 %v2392, 1069105081
      %v2398 = vpow.bf16.pop %v2397
      %v2399 = vadd.bf16 %v2395, 1065369472
      %v2400 = vadd.bf16 %v2398, 1065369472
      %v2401 = vrcp.bf16.pop %v2399
      %v2402 = vmul.bf16 1065369472, %v2401
      %v2403 = vrcp.bf16.pop %v2400
      %v2404 = vmul.bf16 1065369472, %v2403
      %v2405 = vtanh.bf16.pop %v2389
      %v2406 = vtanh.bf16.pop %v2390
      %v2407 = vmul.bf16 %v2402, %v2405
      %v2408 = vmul.bf16 %v2404, %v2406
      %v2409 = vld [vmem:[%s21] sm:$0xf]
      %v2410 = vld [vmem:[%s21 + $0x4] sm:$0xf]
      %v2411 = vld [vmem:[%s21 + $0x8] sm:$0xf]
      %v2412 = vld [vmem:[%s21 + $0xc] sm:$0xf]
      %v2413 = vld [vmem:[%s21 + $0x10] sm:$0xf]
      %v2414 = vld [vmem:[%s21 + $0x14] sm:$0xf]
      %v2415 = vld [vmem:[%s21 + $0x18] sm:$0xf]
      %v2416 = vld [vmem:[%s21 + $0x1c] sm:$0xf]
      %v2417 = vld [vmem:[%s22] sm:$0xff]
      %v2418 = vld [vmem:[%s22 + $0x8] sm:$0xff]
      %v2419 = vld [vmem:[%s22 + $0x10] sm:$0xff]
      %v2420 = vld [vmem:[%s22 + $0x18] sm:$0xff]
      %v2421 = vld [vmem:[%s22 + $0x20] sm:$0xff]
      %v2422 = vld [vmem:[%s22 + $0x28] sm:$0xff]
      %v2423 = vld [vmem:[%s22 + $0x30] sm:$0xff]
      %v2424 = vld [vmem:[%s22 + $0x38] sm:$0xff]
      %2426 = vset.pattern.permute.xlu0 0
      %2427 = vperm.xlu0 %2426, %v2417
      %v2428 = vpop.permute.xlu0 %2427
      %2431 = vset.pattern.permute.xlu0 0
      %2432 = vperm.xlu0 %2431, %v2418
      %v2433 = vpop.permute.xlu0 %2432
      %2436 = vset.pattern.permute.xlu0 0
      %2437 = vperm.xlu0 %2436, %v2419
      %v2438 = vpop.permute.xlu0 %2437
      %2441 = vset.pattern.permute.xlu0 0
      %2442 = vperm.xlu0 %2441, %v2420
      %v2443 = vpop.permute.xlu0 %2442
      %2446 = vset.pattern.permute.xlu0 0
      %2447 = vperm.xlu0 %2446, %v2421
      %v2448 = vpop.permute.xlu0 %2447
      %2451 = vset.pattern.permute.xlu0 0
      %2452 = vperm.xlu0 %2451, %v2422
      %v2453 = vpop.permute.xlu0 %2452
      %2456 = vset.pattern.permute.xlu0 0
      %2457 = vperm.xlu0 %2456, %v2423
      %v2458 = vpop.permute.xlu0 %2457
      %2461 = vset.pattern.permute.xlu0 0
      %2462 = vperm.xlu0 %2461, %v2424
      %v2463 = vpop.permute.xlu0 %2462
      %v2473 = vunpack.c.l.b16 %v2409
      %v2474 = vunpack.c.l.b16 %v2410
      %v2475 = vunpack.c.l.b16 %v2411
      %v2476 = vunpack.c.l.b16 %v2412
      %v2477 = vunpack.c.l.b16 %v2413
      %v2478 = vunpack.c.l.b16 %v2414
      %v2479 = vunpack.c.l.b16 %v2415
      %v2480 = vunpack.c.l.b16 %v2416
      %v2481 = vpack.c.b16 %v2474, %v2473
      %v2482 = vpack.c.b16 %v2476, %v2475
      %v2483 = vpack.c.b16 %v2478, %v2477
      %v2484 = vpack.c.b16 %v2480, %v2479
      %v2486 = vsel %vm1444, %v2481, 0
      %v2489 = vsel %vm1444, %v2482, 0
      %v2492 = vsel %vm1444, %v2483, 0
      %v2495 = vsel %vm1444, %v2484, 0
      %2497 = vmatprep.subr.bf16.mxu0 0
      %2498 = vmatpush1.bf16.msra.mxu0 %v2407
      %2499 = vmatprep.subr.bf16.mxu0 0
      %2500 = vmatpush1.bf16.msra.mxu0 %v2408
      %2501 = vmatprep.subr.bf16.mxu0 0
      %2502 = vmatpush1.bf16.msra.mxu0 0
      %2503 = vmatprep.subr.bf16.mxu0 0
      %2504 = vmatpush1.bf16.msra.mxu0 0
      %2505 = vmatprep.subr.bf16.mxu0 0
      %2506 = vmatpush1.bf16.msra.mxu0 0
      %2507 = vmatprep.subr.bf16.mxu0 0
      %2508 = vmatpush1.bf16.msra.mxu0 0
      %2509 = vmatprep.subr.bf16.mxu0 0
      %2510 = vmatpush1.bf16.msra.mxu0 0
      %2511 = vmatprep.subr.bf16.mxu0 0
      %2512 = vmatpush1.bf16.msra.mxu0 0
      %2513 = vmatprep.subr.bf16.mxu0 0
      %2514 = vmatpush1.bf16.msra.mxu0 0
      %2515 = vmatprep.subr.bf16.mxu0 0
      %2516 = vmatpush1.bf16.msra.mxu0 0
      %2517 = vmatprep.subr.bf16.mxu0 0
      %2518 = vmatpush1.bf16.msra.mxu0 0
      %2519 = vmatprep.subr.bf16.mxu0 0
      %2520 = vmatpush1.bf16.msra.mxu0 0
      %2521 = vmatprep.subr.bf16.mxu0 0
      %2522 = vmatpush1.bf16.msra.mxu0 0
      %2523 = vmatprep.subr.bf16.mxu0 0
      %2524 = vmatpush1.bf16.msra.mxu0 0
      %2525 = vmatprep.subr.bf16.mxu0 0
      %2526 = vmatpush1.bf16.msra.mxu0 0
      %2527 = vmatprep.subr.bf16.mxu0 0
      %2528 = vmatpush1.bf16.msra.mxu0 0
      %2529 = vmatprep.mubr.bf16.mxu0 0
      %2530 = vmatmul.mubr.bf16.gmra.mrb[0].mxu0 %v2486
      %v2531 = vpop.f32.mrb[0].mxu0
      %v2532 = vadd.f32 %v2428, %v2531
      %v2533 = vpop.f32.mrb[0].mxu0
      %v2534 = vpop.f32.mrb[0].mxu0
      %v2535 = vadd.f32 %v2433, %v2534
      %v2536 = vpop.f32.mrb[0].mxu0
      %2537 = vmatprep.mubr.bf16.mxu0 0
      %2538 = vmatmul.mubr.bf16.gmra.mrb[0].mxu0 %v2489
      %v2539 = vpop.f32.mrb[0].mxu0
      %v2540 = vadd.f32 %v2438, %v2539
      %v2541 = vpop.f32.mrb[0].mxu0
      %v2542 = vpop.f32.mrb[0].mxu0
      %v2543 = vadd.f32 %v2443, %v2542
      %v2544 = vpop.f32.mrb[0].mxu0
      %2545 = vmatprep.mubr.bf16.mxu0 0
      %2546 = vmatmul.mubr.bf16.gmra.mrb[0].mxu0 %v2492
      %v2547 = vpop.f32.mrb[0].mxu0
      %v2548 = vadd.f32 %v2448, %v2547
      %v2549 = vpop.f32.mrb[0].mxu0
      %v2550 = vpop.f32.mrb[0].mxu0
      %v2551 = vadd.f32 %v2453, %v2550
      %v2552 = vpop.f32.mrb[0].mxu0
      %2553 = vmatprep.mubr.bf16.mxu0 0
      %2554 = vmatmul.mubr.bf16.gmra.mrb[0].mxu0 %v2495
      %v2555 = vpop.f32.mrb[0].mxu0
      %v2556 = vadd.f32 %v2458, %v2555
      %v2557 = vpop.f32.mrb[0].mxu0
      %v2558 = vpop.f32.mrb[0].mxu0
      %v2559 = vadd.f32 %v2463, %v2558
      %v2560 = vpop.f32.mrb[0].mxu0
      %2561 = vdwg.mxu0
      %v2562 = vadd.f32 %v985, %v2532
      %v2563 = vadd.f32 %v986, %v2535
      %v2564 = vadd.f32 %v987, %v2540
      %v2565 = vadd.f32 %v988, %v2543
      %v2566 = vmul.f32 %v2562, 0.70710677
      %v2567 = vmul.f32 %v2563, 0.70710677
      %v2568 = vmul.f32 %v2564, 0.70710677
      %v2569 = vmul.f32 %v2565, 0.70710677
      %v2570 = vadd.f32 %v2548, 0.0
      %v2571 = vadd.f32 %v2551, 0.0
      %v2572 = vadd.f32 %v2556, 0.0
      %v2573 = vadd.f32 %v2559, 0.0
      %2575 = vset.pattern.permute.xlu0 0
      %2576 = vperm.xlu0 %2575, %v1732
      %v2577 = vpop.permute.xlu0 %2576
      %2580 = vset.pattern.permute.xlu0 0
      %2581 = vperm.xlu0 %2580, %v1733
      %v2582 = vpop.permute.xlu0 %2581
      %2585 = vset.pattern.permute.xlu0 0
      %2586 = vperm.xlu0 %2585, %v1734
      %v2587 = vpop.permute.xlu0 %2586
      %2590 = vset.pattern.permute.xlu0 0
      %2591 = vperm.xlu0 %2590, %v1735
      %v2592 = vpop.permute.xlu0 %2591
      %v2594 = vadd.f32 %v2566, %v2577
      %v2595 = vadd.f32 %v2567, %v2582
      %v2596 = vadd.f32 %v2568, %v2587
      %v2597 = vadd.f32 %v2569, %v2592
      %2598 = vrot.lane.b32.xlu0 %v2594, 2
      %v2599 = vpop.permute.xlu0 %2598
      %2600 = vrot.lane.b32.xlu0 %v2595, 2
      %v2601 = vpop.permute.xlu0 %2600
      %2602 = vrot.lane.b32.xlu0 %v2596, 2
      %v2603 = vpop.permute.xlu0 %2602
      %2604 = vrot.lane.b32.xlu0 %v2597, 2
      %v2605 = vpop.permute.xlu0 %2604
      %v2606 = vsel %vm1971, %v2599, 0.0
      %v2607 = vsel %vm1971, %v2601, 0.0
      %v2608 = vsel %vm1971, %v2603, 0.0
      %v2609 = vsel %vm1971, %v2605, 0.0
      %2610 = vrot.lane.b32.xlu0 %v2594, 126
      %v2611 = vpop.permute.xlu0 %2610
      %2612 = vrot.lane.b32.xlu0 %v2595, 126
      %v2613 = vpop.permute.xlu0 %2612
      %2614 = vrot.lane.b32.xlu0 %v2596, 126
      %v2615 = vpop.permute.xlu0 %2614
      %2616 = vrot.lane.b32.xlu0 %v2597, 126
      %v2617 = vpop.permute.xlu0 %2616
      %v2618 = vsel %vm1985, %v2611, 0.0
      %v2619 = vsel %vm1985, %v2613, 0.0
      %v2620 = vsel %vm1985, %v2615, 0.0
      %v2621 = vsel %vm1985, %v2617, 0.0
      %v2622 = vpack.c.bf16 %v2607, %v2606
      %v2623 = vpack.c.bf16 %v2609, %v2608
      %v2624 = vpack.c.bf16 %v2595, %v2594
      %v2625 = vpack.c.bf16 %v2597, %v2596
      %v2626 = vpack.c.bf16 %v2619, %v2618
      %v2627 = vpack.c.bf16 %v2621, %v2620
      %s2628 = scalar_lea.vmem %s18, 32
      %v2629 = vld [vmem:[%s2628] sm:$0xf]
      %v2630 = vld [vmem:[%s2628 + $0x4] sm:$0xf]
      %v2631 = vld [vmem:[%s2628 + $0x8] sm:$0xf]
      %v2632 = vld [vmem:[%s2628 + $0xc] sm:$0xf]
      %v2633 = vld [vmem:[%s2628 + $0x10] sm:$0xf]
      %v2634 = vld [vmem:[%s2628 + $0x14] sm:$0xf]
      %v2635 = vld [vmem:[%s2628 + $0x18] sm:$0xf]
      %v2636 = vld [vmem:[%s2628 + $0x1c] sm:$0xf]
      %v2645 = vunpack.c.l.b16 %v2629
      %v2646 = vunpack.c.l.b16 %v2630
      %v2647 = vunpack.c.l.b16 %v2631
      %v2648 = vunpack.c.l.b16 %v2632
      %v2649 = vunpack.c.l.b16 %v2633
      %v2650 = vunpack.c.l.b16 %v2634
      %v2651 = vunpack.c.l.b16 %v2635
      %v2652 = vunpack.c.l.b16 %v2636
      %v2653 = vpack.c.b16 %v2646, %v2645
      %v2654 = vpack.c.b16 %v2648, %v2647
      %v2655 = vpack.c.b16 %v2650, %v2649
      %v2656 = vpack.c.b16 %v2652, %v2651
      %v2658 = vsel %vm1840, %v2653, 0
      %v2661 = vsel %vm1840, %v2654, 0
      %v2664 = vsel %vm1840, %v2655, 0
      %v2667 = vsel %vm1840, %v2656, 0
      %2669 = vmatprep.subr.bf16.mxu0 0
      %2670 = vmatpush1.bf16.msra.mxu0 %v2622
      %2671 = vmatprep.subr.bf16.mxu0 0
      %2672 = vmatpush1.bf16.msra.mxu0 %v2623
      %2673 = vmatprep.subr.bf16.mxu0 0
      %2674 = vmatpush1.bf16.msra.mxu0 %v2624
      %2675 = vmatprep.subr.bf16.mxu0 0
      %2676 = vmatpush1.bf16.msra.mxu0 %v2625
      %2677 = vmatprep.subr.bf16.mxu0 0
      %2678 = vmatpush1.bf16.msra.mxu0 %v2626
      %2679 = vmatprep.subr.bf16.mxu0 0
      %2680 = vmatpush1.bf16.msra.mxu0 %v2627
      %2681 = vmatprep.subr.bf16.mxu0 0
      %2682 = vmatpush1.bf16.msra.mxu0 0
      %2683 = vmatprep.subr.bf16.mxu0 0
      %2684 = vmatpush1.bf16.msra.mxu0 0
      %2685 = vmatprep.subr.bf16.mxu0 0
      %2686 = vmatpush1.bf16.msra.mxu0 0
      %2687 = vmatprep.subr.bf16.mxu0 0
      %2688 = vmatpush1.bf16.msra.mxu0 0
      %2689 = vmatprep.subr.bf16.mxu0 0
      %2690 = vmatpush1.bf16.msra.mxu0 0
      %2691 = vmatprep.subr.bf16.mxu0 0
      %2692 = vmatpush1.bf16.msra.mxu0 0
      %2693 = vmatprep.subr.bf16.mxu0 0
      %2694 = vmatpush1.bf16.msra.mxu0 0
      %2695 = vmatprep.subr.bf16.mxu0 0
      %2696 = vmatpush1.bf16.msra.mxu0 0
      %2697 = vmatprep.subr.bf16.mxu0 0
      %2698 = vmatpush1.bf16.msra.mxu0 0
      %2699 = vmatprep.subr.bf16.mxu0 0
      %2700 = vmatpush1.bf16.msra.mxu0 0
      %2701 = vmatprep.mubr.bf16.mxu0 0
      %2702 = vmatmul.mubr.bf16.gmra.mrb[0].mxu0 %v2658
      %v2703 = vpop.f32.mrb[0].mxu0
      %v2704 = vadd.f32 %v2110, %v2703
      %v2705 = vpop.f32.mrb[0].mxu0
      %v2706 = vpop.f32.mrb[0].mxu0
      %v2707 = vadd.f32 %v2113, %v2706
      %v2708 = vpop.f32.mrb[0].mxu0
      %2709 = vmatprep.mubr.bf16.mxu0 0
      %2710 = vmatmul.mubr.bf16.gmra.mrb[0].mxu0 %v2661
      %v2711 = vpop.f32.mrb[0].mxu0
      %v2712 = vadd.f32 %v2118, %v2711
      %v2713 = vpop.f32.mrb[0].mxu0
      %v2714 = vpop.f32.mrb[0].mxu0
      %v2715 = vadd.f32 %v2121, %v2714
      %v2716 = vpop.f32.mrb[0].mxu0
      %2717 = vmatprep.mubr.bf16.mxu0 0
      %2718 = vmatmul.mubr.bf16.gmra.mrb[0].mxu0 %v2664
      %v2719 = vpop.f32.mrb[0].mxu0
      %v2720 = vadd.f32 %v2126, %v2719
      %v2721 = vpop.f32.mrb[0].mxu0
      %v2722 = vpop.f32.mrb[0].mxu0
      %v2723 = vadd.f32 %v2129, %v2722
      %v2724 = vpop.f32.mrb[0].mxu0
      %2725 = vmatprep.mubr.bf16.mxu0 0
      %2726 = vmatmul.mubr.bf16.gmra.mrb[0].mxu0 %v2667
      %v2727 = vpop.f32.mrb[0].mxu0
      %v2728 = vadd.f32 %v2134, %v2727
      %v2729 = vpop.f32.mrb[0].mxu0
      %v2730 = vpop.f32.mrb[0].mxu0
      %v2731 = vadd.f32 %v2137, %v2730
      %v2732 = vpop.f32.mrb[0].mxu0
      %2733 = vdwg.mxu0
      %s2734 = scalar_lea.vmem %s20, 64
      %v2735 = vld [vmem:[%s2734] sm:$0xff]
      %v2736 = vld [vmem:[%s2734 + $0x8] sm:$0xff]
      %v2737 = vld [vmem:[%s2734 + $0x10] sm:$0xff]
      %v2738 = vld [vmem:[%s2734 + $0x18] sm:$0xff]
      %v2739 = vld [vmem:[%s2734 + $0x20] sm:$0xff]
      %v2740 = vld [vmem:[%s2734 + $0x28] sm:$0xff]
      %v2741 = vld [vmem:[%s2734 + $0x30] sm:$0xff]
      %v2742 = vld [vmem:[%s2734 + $0x38] sm:$0xff]
      %2744 = vset.pattern.permute.xlu0 0
      %2745 = vperm.xlu0 %2744, %v2735
      %v2746 = vpop.permute.xlu0 %2745
      %2749 = vset.pattern.permute.xlu0 0
      %2750 = vperm.xlu0 %2749, %v2736
      %v2751 = vpop.permute.xlu0 %2750
      %2754 = vset.pattern.permute.xlu0 0
      %2755 = vperm.xlu0 %2754, %v2737
      %v2756 = vpop.permute.xlu0 %2755
      %2759 = vset.pattern.permute.xlu0 0
      %2760 = vperm.xlu0 %2759, %v2738
      %v2761 = vpop.permute.xlu0 %2760
      %2764 = vset.pattern.permute.xlu0 0
      %2765 = vperm.xlu0 %2764, %v2739
      %v2766 = vpop.permute.xlu0 %2765
      %2769 = vset.pattern.permute.xlu0 0
      %2770 = vperm.xlu0 %2769, %v2740
      %v2771 = vpop.permute.xlu0 %2770
      %2774 = vset.pattern.permute.xlu0 0
      %2775 = vperm.xlu0 %2774, %v2741
      %v2776 = vpop.permute.xlu0 %2775
      %2779 = vset.pattern.permute.xlu0 0
      %2780 = vperm.xlu0 %2779, %v2742
      %v2781 = vpop.permute.xlu0 %2780
      %v2783 = vadd.f32 %v2704, %v2746
      %v2784 = vadd.f32 %v2707, %v2751
      %v2785 = vadd.f32 %v2712, %v2756
      %v2786 = vadd.f32 %v2715, %v2761
      %v2787 = vadd.f32 %v2720, %v2766
      %v2788 = vadd.f32 %v2723, %v2771
      %v2789 = vadd.f32 %v2728, %v2776
      %v2790 = vadd.f32 %v2731, %v2781
      %v2791 = vpack.c.bf16 %v2784, %v2783
      %v2792 = vpack.c.bf16 %v2786, %v2785
      %v2793 = vpack.c.bf16 %v2788, %v2787
      %v2794 = vpack.c.bf16 %v2790, %v2789
      %v2795 = vxor.u32 %v2791, 2147516416
      %v2796 = vxor.u32 %v2792, 2147516416
      %v2798 = vmul.bf16 %v2795, 1069105081
      %v2799 = vpow.bf16.pop %v2798
      %v2801 = vmul.bf16 %v2796, 1069105081
      %v2802 = vpow.bf16.pop %v2801
      %v2803 = vadd.bf16 %v2799, 1065369472
      %v2804 = vadd.bf16 %v2802, 1065369472
      %v2805 = vrcp.bf16.pop %v2803
      %v2806 = vmul.bf16 1065369472, %v2805
      %v2807 = vrcp.bf16.pop %v2804
      %v2808 = vmul.bf16 1065369472, %v2807
      %v2809 = vtanh.bf16.pop %v2793
      %v2810 = vtanh.bf16.pop %v2794
      %v2811 = vmul.bf16 %v2806, %v2809
      %v2812 = vmul.bf16 %v2808, %v2810
      %s2813 = scalar_lea.vmem %s21, 32
      %v2814 = vld [vmem:[%s2813] sm:$0xf]
      %v2815 = vld [vmem:[%s2813 + $0x4] sm:$0xf]
      %v2816 = vld [vmem:[%s2813 + $0x8] sm:$0xf]
      %v2817 = vld [vmem:[%s2813 + $0xc] sm:$0xf]
      %v2818 = vld [vmem:[%s2813 + $0x10] sm:$0xf]
      %v2819 = vld [vmem:[%s2813 + $0x14] sm:$0xf]
      %v2820 = vld [vmem:[%s2813 + $0x18] sm:$0xf]
      %v2821 = vld [vmem:[%s2813 + $0x1c] sm:$0xf]
      %s2822 = scalar_lea.vmem %s22, 64
      %v2823 = vld [vmem:[%s2822] sm:$0xff]
      %v2824 = vld [vmem:[%s2822 + $0x8] sm:$0xff]
      %v2825 = vld [vmem:[%s2822 + $0x10] sm:$0xff]
      %v2826 = vld [vmem:[%s2822 + $0x18] sm:$0xff]
      %v2827 = vld [vmem:[%s2822 + $0x20] sm:$0xff]
      %v2828 = vld [vmem:[%s2822 + $0x28] sm:$0xff]
      %v2829 = vld [vmem:[%s2822 + $0x30] sm:$0xff]
      %v2830 = vld [vmem:[%s2822 + $0x38] sm:$0xff]
      %2832 = vset.pattern.permute.xlu0 0
      %2833 = vperm.xlu0 %2832, %v2823
      %v2834 = vpop.permute.xlu0 %2833
      %2837 = vset.pattern.permute.xlu0 0
      %2838 = vperm.xlu0 %2837, %v2824
      %v2839 = vpop.permute.xlu0 %2838
      %2842 = vset.pattern.permute.xlu0 0
      %2843 = vperm.xlu0 %2842, %v2825
      %v2844 = vpop.permute.xlu0 %2843
      %2847 = vset.pattern.permute.xlu0 0
      %2848 = vperm.xlu0 %2847, %v2826
      %v2849 = vpop.permute.xlu0 %2848
      %2852 = vset.pattern.permute.xlu0 0
      %2853 = vperm.xlu0 %2852, %v2827
      %v2854 = vpop.permute.xlu0 %2853
      %2857 = vset.pattern.permute.xlu0 0
      %2858 = vperm.xlu0 %2857, %v2828
      %v2859 = vpop.permute.xlu0 %2858
      %2862 = vset.pattern.permute.xlu0 0
      %2863 = vperm.xlu0 %2862, %v2829
      %v2864 = vpop.permute.xlu0 %2863
      %2867 = vset.pattern.permute.xlu0 0
      %2868 = vperm.xlu0 %2867, %v2830
      %v2869 = vpop.permute.xlu0 %2868
      %v2879 = vunpack.c.l.b16 %v2814
      %v2880 = vunpack.c.l.b16 %v2815
      %v2881 = vunpack.c.l.b16 %v2816
      %v2882 = vunpack.c.l.b16 %v2817
      %v2883 = vunpack.c.l.b16 %v2818
      %v2884 = vunpack.c.l.b16 %v2819
      %v2885 = vunpack.c.l.b16 %v2820
      %v2886 = vunpack.c.l.b16 %v2821
      %v2887 = vpack.c.b16 %v2880, %v2879
      %v2888 = vpack.c.b16 %v2882, %v2881
      %v2889 = vpack.c.b16 %v2884, %v2883
      %v2890 = vpack.c.b16 %v2886, %v2885
      %v2892 = vsel %vm1444, %v2887, 0
      %v2895 = vsel %vm1444, %v2888, 0
      %v2898 = vsel %vm1444, %v2889, 0
      %v2901 = vsel %vm1444, %v2890, 0
      %2903 = vmatprep.subr.bf16.mxu0 0
      %2904 = vmatpush1.bf16.msra.mxu0 %v2811
      %2905 = vmatprep.subr.bf16.mxu0 0
      %2906 = vmatpush1.bf16.msra.mxu0 %v2812
      %2907 = vmatprep.subr.bf16.mxu0 0
      %2908 = vmatpush1.bf16.msra.mxu0 0
      %2909 = vmatprep.subr.bf16.mxu0 0
      %2910 = vmatpush1.bf16.msra.mxu0 0
      %2911 = vmatprep.subr.bf16.mxu0 0
      %2912 = vmatpush1.bf16.msra.mxu0 0
      %2913 = vmatprep.subr.bf16.mxu0 0
      %2914 = vmatpush1.bf16.msra.mxu0 0
      %2915 = vmatprep.subr.bf16.mxu0 0
      %2916 = vmatpush1.bf16.msra.mxu0 0
      %2917 = vmatprep.subr.bf16.mxu0 0
      %2918 = vmatpush1.bf16.msra.mxu0 0
      %2919 = vmatprep.subr.bf16.mxu0 0
      %2920 = vmatpush1.bf16.msra.mxu0 0
      %2921 = vmatprep.subr.bf16.mxu0 0
      %2922 = vmatpush1.bf16.msra.mxu0 0
      %2923 = vmatprep.subr.bf16.mxu0 0
      %2924 = vmatpush1.bf16.msra.mxu0 0
      %2925 = vmatprep.subr.bf16.mxu0 0
      %2926 = vmatpush1.bf16.msra.mxu0 0
      %2927 = vmatprep.subr.bf16.mxu0 0
      %2928 = vmatpush1.bf16.msra.mxu0 0
      %2929 = vmatprep.subr.bf16.mxu0 0
      %2930 = vmatpush1.bf16.msra.mxu0 0
      %2931 = vmatprep.subr.bf16.mxu0 0
      %2932 = vmatpush1.bf16.msra.mxu0 0
      %2933 = vmatprep.subr.bf16.mxu0 0
      %2934 = vmatpush1.bf16.msra.mxu0 0
      %2935 = vmatprep.mubr.bf16.mxu0 0
      %2936 = vmatmul.mubr.bf16.gmra.mrb[0].mxu0 %v2892
      %v2937 = vpop.f32.mrb[0].mxu0
      %v2938 = vadd.f32 %v2834, %v2937
      %v2939 = vpop.f32.mrb[0].mxu0
      %v2940 = vpop.f32.mrb[0].mxu0
      %v2941 = vadd.f32 %v2839, %v2940
      %v2942 = vpop.f32.mrb[0].mxu0
      %2943 = vmatprep.mubr.bf16.mxu0 0
      %2944 = vmatmul.mubr.bf16.gmra.mrb[0].mxu0 %v2895
      %v2945 = vpop.f32.mrb[0].mxu0
      %v2946 = vadd.f32 %v2844, %v2945
      %v2947 = vpop.f32.mrb[0].mxu0
      %v2948 = vpop.f32.mrb[0].mxu0
      %v2949 = vadd.f32 %v2849, %v2948
      %v2950 = vpop.f32.mrb[0].mxu0
      %2951 = vmatprep.mubr.bf16.mxu0 0
      %2952 = vmatmul.mubr.bf16.gmra.mrb[0].mxu0 %v2898
      %v2953 = vpop.f32.mrb[0].mxu0
      %v2954 = vadd.f32 %v2854, %v2953
      %v2955 = vpop.f32.mrb[0].mxu0
      %v2956 = vpop.f32.mrb[0].mxu0
      %v2957 = vadd.f32 %v2859, %v2956
      %v2958 = vpop.f32.mrb[0].mxu0
      %2959 = vmatprep.mubr.bf16.mxu0 0
      %2960 = vmatmul.mubr.bf16.gmra.mrb[0].mxu0 %v2901
      %v2961 = vpop.f32.mrb[0].mxu0
      %v2962 = vadd.f32 %v2864, %v2961
      %v2963 = vpop.f32.mrb[0].mxu0
      %v2964 = vpop.f32.mrb[0].mxu0
      %v2965 = vadd.f32 %v2869, %v2964
      %v2966 = vpop.f32.mrb[0].mxu0
      %2967 = vdwg.mxu0
      %v2968 = vadd.f32 %v2566, %v2938
      %v2969 = vadd.f32 %v2567, %v2941
      %v2970 = vadd.f32 %v2568, %v2946
      %v2971 = vadd.f32 %v2569, %v2949
      %v2972 = vmul.f32 %v2968, 0.70710677
      %v2973 = vmul.f32 %v2969, 0.70710677
      %v2974 = vmul.f32 %v2970, 0.70710677
      %v2975 = vmul.f32 %v2971, 0.70710677
      %v2976 = vadd.f32 %v2570, %v2954
      %v2977 = vadd.f32 %v2571, %v2957
      %v2978 = vadd.f32 %v2572, %v2962
      %v2979 = vadd.f32 %v2573, %v2965
      %2981 = vset.pattern.permute.xlu0 0
      %2982 = vperm.xlu0 %2981, %v1736
      %v2983 = vpop.permute.xlu0 %2982
      %2986 = vset.pattern.permute.xlu0 0
      %2987 = vperm.xlu0 %2986, %v1737
      %v2988 = vpop.permute.xlu0 %2987
      %2991 = vset.pattern.permute.xlu0 0
      %2992 = vperm.xlu0 %2991, %v1738
      %v2993 = vpop.permute.xlu0 %2992
      %2996 = vset.pattern.permute.xlu0 0
      %2997 = vperm.xlu0 %2996, %v1739
      %v2998 = vpop.permute.xlu0 %2997
      %v3000 = vadd.f32 %v2972, %v2983
      %v3001 = vadd.f32 %v2973, %v2988
      %v3002 = vadd.f32 %v2974, %v2993
      %v3003 = vadd.f32 %v2975, %v2998
      %3004 = vrot.lane.b32.xlu0 %v3000, 1
      %v3005 = vpop.permute.xlu0 %3004
      %3006 = vrot.lane.b32.xlu0 %v3001, 1
      %v3007 = vpop.permute.xlu0 %3006
      %3008 = vrot.lane.b32.xlu0 %v3002, 1
      %v3009 = vpop.permute.xlu0 %3008
      %3010 = vrot.lane.b32.xlu0 %v3003, 1
      %v3011 = vpop.permute.xlu0 %3010
      %v3012 = vsel %vm1759, %v3005, 0.0
      %v3013 = vsel %vm1759, %v3007, 0.0
      %v3014 = vsel %vm1759, %v3009, 0.0
      %v3015 = vsel %vm1759, %v3011, 0.0
      %3016 = vrot.lane.b32.xlu0 %v3000, 127
      %v3017 = vpop.permute.xlu0 %3016
      %3018 = vrot.lane.b32.xlu0 %v3001, 127
      %v3019 = vpop.permute.xlu0 %3018
      %3020 = vrot.lane.b32.xlu0 %v3002, 127
      %v3021 = vpop.permute.xlu0 %3020
      %3022 = vrot.lane.b32.xlu0 %v3003, 127
      %v3023 = vpop.permute.xlu0 %3022
      %v3024 = vsel %vm1773, %v3017, 0.0
      %v3025 = vsel %vm1773, %v3019, 0.0
      %v3026 = vsel %vm1773, %v3021, 0.0
      %v3027 = vsel %vm1773, %v3023, 0.0
      %v3028 = vpack.c.bf16 %v3013, %v3012
      %v3029 = vpack.c.bf16 %v3015, %v3014
      %v3030 = vpack.c.bf16 %v3001, %v3000
      %v3031 = vpack.c.bf16 %v3003, %v3002
      %v3032 = vpack.c.bf16 %v3025, %v3024
      %v3033 = vpack.c.bf16 %v3027, %v3026
      %s3034 = scalar_lea.vmem %s18, 64
      %v3035 = vld [vmem:[%s3034] sm:$0xf]
      %v3036 = vld [vmem:[%s3034 + $0x4] sm:$0xf]
      %v3037 = vld [vmem:[%s3034 + $0x8] sm:$0xf]
      %v3038 = vld [vmem:[%s3034 + $0xc] sm:$0xf]
      %v3039 = vld [vmem:[%s3034 + $0x10] sm:$0xf]
      %v3040 = vld [vmem:[%s3034 + $0x14] sm:$0xf]
      %v3041 = vld [vmem:[%s3034 + $0x18] sm:$0xf]
      %v3042 = vld [vmem:[%s3034 + $0x1c] sm:$0xf]
      %v3051 = vunpack.c.l.b16 %v3035
      %v3052 = vunpack.c.l.b16 %v3036
      %v3053 = vunpack.c.l.b16 %v3037
      %v3054 = vunpack.c.l.b16 %v3038
      %v3055 = vunpack.c.l.b16 %v3039
      %v3056 = vunpack.c.l.b16 %v3040
      %v3057 = vunpack.c.l.b16 %v3041
      %v3058 = vunpack.c.l.b16 %v3042
      %v3059 = vpack.c.b16 %v3052, %v3051
      %v3060 = vpack.c.b16 %v3054, %v3053
      %v3061 = vpack.c.b16 %v3056, %v3055
      %v3062 = vpack.c.b16 %v3058, %v3057
      %v3064 = vsel %vm1840, %v3059, 0
      %v3067 = vsel %vm1840, %v3060, 0
      %v3070 = vsel %vm1840, %v3061, 0
      %v3073 = vsel %vm1840, %v3062, 0
      %3075 = vmatprep.subr.bf16.mxu0 0
      %3076 = vmatpush1.bf16.msra.mxu0 %v3028
      %3077 = vmatprep.subr.bf16.mxu0 0
      %3078 = vmatpush1.bf16.msra.mxu0 %v3029
      %3079 = vmatprep.subr.bf16.mxu0 0
      %3080 = vmatpush1.bf16.msra.mxu0 %v3030
      %3081 = vmatprep.subr.bf16.mxu0 0
      %3082 = vmatpush1.bf16.msra.mxu0 %v3031
      %3083 = vmatprep.subr.bf16.mxu0 0
      %3084 = vmatpush1.bf16.msra.mxu0 %v3032
      %3085 = vmatprep.subr.bf16.mxu0 0
      %3086 = vmatpush1.bf16.msra.mxu0 %v3033
      %3087 = vmatprep.subr.bf16.mxu0 0
      %3088 = vmatpush1.bf16.msra.mxu0 0
      %3089 = vmatprep.subr.bf16.mxu0 0
      %3090 = vmatpush1.bf16.msra.mxu0 0
      %3091 = vmatprep.subr.bf16.mxu0 0
      %3092 = vmatpush1.bf16.msra.mxu0 0
      %3093 = vmatprep.subr.bf16.mxu0 0
      %3094 = vmatpush1.bf16.msra.mxu0 0
      %3095 = vmatprep.subr.bf16.mxu0 0
      %3096 = vmatpush1.bf16.msra.mxu0 0
      %3097 = vmatprep.subr.bf16.mxu0 0
      %3098 = vmatpush1.bf16.msra.mxu0 0
      %3099 = vmatprep.subr.bf16.mxu0 0
      %3100 = vmatpush1.bf16.msra.mxu0 0
      %3101 = vmatprep.subr.bf16.mxu0 0
      %3102 = vmatpush1.bf16.msra.mxu0 0
      %3103 = vmatprep.subr.bf16.mxu0 0
      %3104 = vmatpush1.bf16.msra.mxu0 0
      %3105 = vmatprep.subr.bf16.mxu0 0
      %3106 = vmatpush1.bf16.msra.mxu0 0
      %3107 = vmatprep.mubr.bf16.mxu0 0
      %3108 = vmatmul.mubr.bf16.gmra.mrb[0].mxu0 %v3064
      %v3109 = vpop.f32.mrb[0].mxu0
      %v3110 = vadd.f32 %v1932, %v3109
      %v3111 = vpop.f32.mrb[0].mxu0
      %v3112 = vpop.f32.mrb[0].mxu0
      %v3113 = vadd.f32 %v1935, %v3112
      %v3114 = vpop.f32.mrb[0].mxu0
      %3115 = vmatprep.mubr.bf16.mxu0 0
      %3116 = vmatmul.mubr.bf16.gmra.mrb[0].mxu0 %v3067
      %v3117 = vpop.f32.mrb[0].mxu0
      %v3118 = vadd.f32 %v1940, %v3117
      %v3119 = vpop.f32.mrb[0].mxu0
      %v3120 = vpop.f32.mrb[0].mxu0
      %v3121 = vadd.f32 %v1943, %v3120
      %v3122 = vpop.f32.mrb[0].mxu0
      %3123 = vmatprep.mubr.bf16.mxu0 0
      %3124 = vmatmul.mubr.bf16.gmra.mrb[0].mxu0 %v3070
      %v3125 = vpop.f32.mrb[0].mxu0
      %v3126 = vadd.f32 %v1948, %v3125
      %v3127 = vpop.f32.mrb[0].mxu0
      %v3128 = vpop.f32.mrb[0].mxu0
      %v3129 = vadd.f32 %v1951, %v3128
      %v3130 = vpop.f32.mrb[0].mxu0
      %3131 = vmatprep.mubr.bf16.mxu0 0
      %3132 = vmatmul.mubr.bf16.gmra.mrb[0].mxu0 %v3073
      %v3133 = vpop.f32.mrb[0].mxu0
      %v3134 = vadd.f32 %v1956, %v3133
      %v3135 = vpop.f32.mrb[0].mxu0
      %v3136 = vpop.f32.mrb[0].mxu0
      %v3137 = vadd.f32 %v1959, %v3136
      %v3138 = vpop.f32.mrb[0].mxu0
      %3139 = vdwg.mxu0
      %s3140 = scalar_lea.vmem %s20, 128
      %v3141 = vld [vmem:[%s3140] sm:$0xff]
      %v3142 = vld [vmem:[%s3140 + $0x8] sm:$0xff]
      %v3143 = vld [vmem:[%s3140 + $0x10] sm:$0xff]
      %v3144 = vld [vmem:[%s3140 + $0x18] sm:$0xff]
      %v3145 = vld [vmem:[%s3140 + $0x20] sm:$0xff]
      %v3146 = vld [vmem:[%s3140 + $0x28] sm:$0xff]
      %v3147 = vld [vmem:[%s3140 + $0x30] sm:$0xff]
      %v3148 = vld [vmem:[%s3140 + $0x38] sm:$0xff]
      %3150 = vset.pattern.permute.xlu0 0
      %3151 = vperm.xlu0 %3150, %v3141
      %v3152 = vpop.permute.xlu0 %3151
      %3155 = vset.pattern.permute.xlu0 0
      %3156 = vperm.xlu0 %3155, %v3142
      %v3157 = vpop.permute.xlu0 %3156
      %3160 = vset.pattern.permute.xlu0 0
      %3161 = vperm.xlu0 %3160, %v3143
      %v3162 = vpop.permute.xlu0 %3161
      %3165 = vset.pattern.permute.xlu0 0
      %3166 = vperm.xlu0 %3165, %v3144
      %v3167 = vpop.permute.xlu0 %3166
      %3170 = vset.pattern.permute.xlu0 0
      %3171 = vperm.xlu0 %3170, %v3145
      %v3172 = vpop.permute.xlu0 %3171
      %3175 = vset.pattern.permute.xlu0 0
      %3176 = vperm.xlu0 %3175, %v3146
      %v3177 = vpop.permute.xlu0 %3176
      %3180 = vset.pattern.permute.xlu0 0
      %3181 = vperm.xlu0 %3180, %v3147
      %v3182 = vpop.permute.xlu0 %3181
      %3185 = vset.pattern.permute.xlu0 0
      %3186 = vperm.xlu0 %3185, %v3148
      %v3187 = vpop.permute.xlu0 %3186
      %v3189 = vadd.f32 %v3110, %v3152
      %v3190 = vadd.f32 %v3113, %v3157
      %v3191 = vadd.f32 %v3118, %v3162
      %v3192 = vadd.f32 %v3121, %v3167
      %v3193 = vadd.f32 %v3126, %v3172
      %v3194 = vadd.f32 %v3129, %v3177
      %v3195 = vadd.f32 %v3134, %v3182
      %v3196 = vadd.f32 %v3137, %v3187
      %v3197 = vpack.c.bf16 %v3190, %v3189
      %v3198 = vpack.c.bf16 %v3192, %v3191
      %v3199 = vpack.c.bf16 %v3194, %v3193
      %v3200 = vpack.c.bf16 %v3196, %v3195
      %v3201 = vxor.u32 %v3197, 2147516416
      %v3202 = vxor.u32 %v3198, 2147516416
      %v3204 = vmul.bf16 %v3201, 1069105081
      %v3205 = vpow.bf16.pop %v3204
      %v3207 = vmul.bf16 %v3202, 1069105081
      %v3208 = vpow.bf16.pop %v3207
      %v3209 = vadd.bf16 %v3205, 1065369472
      %v3210 = vadd.bf16 %v3208, 1065369472
      %v3211 = vrcp.bf16.pop %v3209
      %v3212 = vmul.bf16 1065369472, %v3211
      %v3213 = vrcp.bf16.pop %v3210
      %v3214 = vmul.bf16 1065369472, %v3213
      %v3215 = vtanh.bf16.pop %v3199
      %v3216 = vtanh.bf16.pop %v3200
      %v3217 = vmul.bf16 %v3212, %v3215
      %v3218 = vmul.bf16 %v3214, %v3216
      %s3219 = scalar_lea.vmem %s21, 64
      %v3220 = vld [vmem:[%s3219] sm:$0xf]
      %v3221 = vld [vmem:[%s3219 + $0x4] sm:$0xf]
      %v3222 = vld [vmem:[%s3219 + $0x8] sm:$0xf]
      %v3223 = vld [vmem:[%s3219 + $0xc] sm:$0xf]
      %v3224 = vld [vmem:[%s3219 + $0x10] sm:$0xf]
      %v3225 = vld [vmem:[%s3219 + $0x14] sm:$0xf]
      %v3226 = vld [vmem:[%s3219 + $0x18] sm:$0xf]
      %v3227 = vld [vmem:[%s3219 + $0x1c] sm:$0xf]
      %s3228 = scalar_lea.vmem %s22, 128
      %v3229 = vld [vmem:[%s3228] sm:$0xff]
      %v3230 = vld [vmem:[%s3228 + $0x8] sm:$0xff]
      %v3231 = vld [vmem:[%s3228 + $0x10] sm:$0xff]
      %v3232 = vld [vmem:[%s3228 + $0x18] sm:$0xff]
      %v3233 = vld [vmem:[%s3228 + $0x20] sm:$0xff]
      %v3234 = vld [vmem:[%s3228 + $0x28] sm:$0xff]
      %v3235 = vld [vmem:[%s3228 + $0x30] sm:$0xff]
      %v3236 = vld [vmem:[%s3228 + $0x38] sm:$0xff]
      %3238 = vset.pattern.permute.xlu0 0
      %3239 = vperm.xlu0 %3238, %v3229
      %v3240 = vpop.permute.xlu0 %3239
      %3243 = vset.pattern.permute.xlu0 0
      %3244 = vperm.xlu0 %3243, %v3230
      %v3245 = vpop.permute.xlu0 %3244
      %3248 = vset.pattern.permute.xlu0 0
      %3249 = vperm.xlu0 %3248, %v3231
      %v3250 = vpop.permute.xlu0 %3249
      %3253 = vset.pattern.permute.xlu0 0
      %3254 = vperm.xlu0 %3253, %v3232
      %v3255 = vpop.permute.xlu0 %3254
      %3258 = vset.pattern.permute.xlu0 0
      %3259 = vperm.xlu0 %3258, %v3233
      %v3260 = vpop.permute.xlu0 %3259
      %3263 = vset.pattern.permute.xlu0 0
      %3264 = vperm.xlu0 %3263, %v3234
      %v3265 = vpop.permute.xlu0 %3264
      %3268 = vset.pattern.permute.xlu0 0
      %3269 = vperm.xlu0 %3268, %v3235
      %v3270 = vpop.permute.xlu0 %3269
      %3273 = vset.pattern.permute.xlu0 0
      %3274 = vperm.xlu0 %3273, %v3236
      %v3275 = vpop.permute.xlu0 %3274
      %v3285 = vunpack.c.l.b16 %v3220
      %v3286 = vunpack.c.l.b16 %v3221
      %v3287 = vunpack.c.l.b16 %v3222
      %v3288 = vunpack.c.l.b16 %v3223
      %v3289 = vunpack.c.l.b16 %v3224
      %v3290 = vunpack.c.l.b16 %v3225
      %v3291 = vunpack.c.l.b16 %v3226
      %v3292 = vunpack.c.l.b16 %v3227
      %v3293 = vpack.c.b16 %v3286, %v3285
      %v3294 = vpack.c.b16 %v3288, %v3287
      %v3295 = vpack.c.b16 %v3290, %v3289
      %v3296 = vpack.c.b16 %v3292, %v3291
      %v3298 = vsel %vm1444, %v3293, 0
      %v3301 = vsel %vm1444, %v3294, 0
      %v3304 = vsel %vm1444, %v3295, 0
      %v3307 = vsel %vm1444, %v3296, 0
      %3309 = vmatprep.subr.bf16.mxu0 0
      %3310 = vmatpush1.bf16.msra.mxu0 %v3217
      %3311 = vmatprep.subr.bf16.mxu0 0
      %3312 = vmatpush1.bf16.msra.mxu0 %v3218
      %3313 = vmatprep.subr.bf16.mxu0 0
      %3314 = vmatpush1.bf16.msra.mxu0 0
      %3315 = vmatprep.subr.bf16.mxu0 0
      %3316 = vmatpush1.bf16.msra.mxu0 0
      %3317 = vmatprep.subr.bf16.mxu0 0
      %3318 = vmatpush1.bf16.msra.mxu0 0
      %3319 = vmatprep.subr.bf16.mxu0 0
      %3320 = vmatpush1.bf16.msra.mxu0 0
      %3321 = vmatprep.subr.bf16.mxu0 0
      %3322 = vmatpush1.bf16.msra.mxu0 0
      %3323 = vmatprep.subr.bf16.mxu0 0
      %3324 = vmatpush1.bf16.msra.mxu0 0
      %3325 = vmatprep.subr.bf16.mxu0 0
      %3326 = vmatpush1.bf16.msra.mxu0 0
      %3327 = vmatprep.subr.bf16.mxu0 0
      %3328 = vmatpush1.bf16.msra.mxu0 0
      %3329 = vmatprep.subr.bf16.mxu0 0
      %3330 = vmatpush1.bf16.msra.mxu0 0
      %3331 = vmatprep.subr.bf16.mxu0 0
      %3332 = vmatpush1.bf16.msra.mxu0 0
      %3333 = vmatprep.subr.bf16.mxu0 0
      %3334 = vmatpush1.bf16.msra.mxu0 0
      %3335 = vmatprep.subr.bf16.mxu0 0
      %3336 = vmatpush1.bf16.msra.mxu0 0
      %3337 = vmatprep.subr.bf16.mxu0 0
      %3338 = vmatpush1.bf16.msra.mxu0 0
      %3339 = vmatprep.subr.bf16.mxu0 0
      %3340 = vmatpush1.bf16.msra.mxu0 0
      %3341 = vmatprep.mubr.bf16.mxu0 0
      %3342 = vmatmul.mubr.bf16.gmra.mrb[0].mxu0 %v3298
      %v3343 = vpop.f32.mrb[0].mxu0
      %v3344 = vadd.f32 %v3240, %v3343
      %v3345 = vpop.f32.mrb[0].mxu0
      %v3346 = vpop.f32.mrb[0].mxu0
      %v3347 = vadd.f32 %v3245, %v3346
      %v3348 = vpop.f32.mrb[0].mxu0
      %3349 = vmatprep.mubr.bf16.mxu0 0
      %3350 = vmatmul.mubr.bf16.gmra.mrb[0].mxu0 %v3301
      %v3351 = vpop.f32.mrb[0].mxu0
      %v3352 = vadd.f32 %v3250, %v3351
      %v3353 = vpop.f32.mrb[0].mxu0
      %v3354 = vpop.f32.mrb[0].mxu0
      %v3355 = vadd.f32 %v3255, %v3354
      %v3356 = vpop.f32.mrb[0].mxu0
      %3357 = vmatprep.mubr.bf16.mxu0 0
      %3358 = vmatmul.mubr.bf16.gmra.mrb[0].mxu0 %v3304
      %v3359 = vpop.f32.mrb[0].mxu0
      %v3360 = vadd.f32 %v3260, %v3359
      %v3361 = vpop.f32.mrb[0].mxu0
      %v3362 = vpop.f32.mrb[0].mxu0
      %v3363 = vadd.f32 %v3265, %v3362
      %v3364 = vpop.f32.mrb[0].mxu0
      %3365 = vmatprep.mubr.bf16.mxu0 0
      %3366 = vmatmul.mubr.bf16.gmra.mrb[0].mxu0 %v3307
      %v3367 = vpop.f32.mrb[0].mxu0
      %v3368 = vadd.f32 %v3270, %v3367
      %v3369 = vpop.f32.mrb[0].mxu0
      %v3370 = vpop.f32.mrb[0].mxu0
      %v3371 = vadd.f32 %v3275, %v3370
      %v3372 = vpop.f32.mrb[0].mxu0
      %3373 = vdwg.mxu0
      %v3374 = vadd.f32 %v2972, %v3344
      %v3375 = vadd.f32 %v2973, %v3347
      %v3376 = vadd.f32 %v2974, %v3352
      %v3377 = vadd.f32 %v2975, %v3355
      %v3378 = vmul.f32 %v3374, 0.70710677
      %v3379 = vmul.f32 %v3375, 0.70710677
      %v3380 = vmul.f32 %v3376, 0.70710677
      %v3381 = vmul.f32 %v3377, 0.70710677
      %v3382 = vadd.f32 %v2976, %v3360
      %v3383 = vadd.f32 %v2977, %v3363
      %v3384 = vadd.f32 %v2978, %v3368
      %v3385 = vadd.f32 %v2979, %v3371
      %3387 = vset.pattern.permute.xlu0 0
      %3388 = vperm.xlu0 %3387, %v1740
      %v3389 = vpop.permute.xlu0 %3388
      %3392 = vset.pattern.permute.xlu0 0
      %3393 = vperm.xlu0 %3392, %v1741
      %v3394 = vpop.permute.xlu0 %3393
      %3397 = vset.pattern.permute.xlu0 0
      %3398 = vperm.xlu0 %3397, %v1742
      %v3399 = vpop.permute.xlu0 %3398
      %3402 = vset.pattern.permute.xlu0 0
      %3403 = vperm.xlu0 %3402, %v1743
      %v3404 = vpop.permute.xlu0 %3403
      %v3406 = vadd.f32 %v3378, %v3389
      %v3407 = vadd.f32 %v3379, %v3394
      %v3408 = vadd.f32 %v3380, %v3399
      %v3409 = vadd.f32 %v3381, %v3404
      %3410 = vrot.lane.b32.xlu0 %v3406, 2
      %v3411 = vpop.permute.xlu0 %3410
      %3412 = vrot.lane.b32.xlu0 %v3407, 2
      %v3413 = vpop.permute.xlu0 %3412
      %3414 = vrot.lane.b32.xlu0 %v3408, 2
      %v3415 = vpop.permute.xlu0 %3414
      %3416 = vrot.lane.b32.xlu0 %v3409, 2
      %v3417 = vpop.permute.xlu0 %3416
      %v3418 = vsel %vm1971, %v3411, 0.0
      %v3419 = vsel %vm1971, %v3413, 0.0
      %v3420 = vsel %vm1971, %v3415, 0.0
      %v3421 = vsel %vm1971, %v3417, 0.0
      %3422 = vrot.lane.b32.xlu0 %v3406, 126
      %v3423 = vpop.permute.xlu0 %3422
      %3424 = vrot.lane.b32.xlu0 %v3407, 126
      %v3425 = vpop.permute.xlu0 %3424
      %3426 = vrot.lane.b32.xlu0 %v3408, 126
      %v3427 = vpop.permute.xlu0 %3426
      %3428 = vrot.lane.b32.xlu0 %v3409, 126
      %v3429 = vpop.permute.xlu0 %3428
      %v3430 = vsel %vm1985, %v3423, 0.0
      %v3431 = vsel %vm1985, %v3425, 0.0
      %v3432 = vsel %vm1985, %v3427, 0.0
      %v3433 = vsel %vm1985, %v3429, 0.0
      %v3434 = vpack.c.bf16 %v3419, %v3418
      %v3435 = vpack.c.bf16 %v3421, %v3420
      %v3436 = vpack.c.bf16 %v3407, %v3406
      %v3437 = vpack.c.bf16 %v3409, %v3408
      %v3438 = vpack.c.bf16 %v3431, %v3430
      %v3439 = vpack.c.bf16 %v3433, %v3432
      %s3440 = scalar_lea.vmem %s18, 96
      %v3441 = vld [vmem:[%s3440] sm:$0xf]
      %v3442 = vld [vmem:[%s3440 + $0x4] sm:$0xf]
      %v3443 = vld [vmem:[%s3440 + $0x8] sm:$0xf]
      %v3444 = vld [vmem:[%s3440 + $0xc] sm:$0xf]
      %v3445 = vld [vmem:[%s3440 + $0x10] sm:$0xf]
      %v3446 = vld [vmem:[%s3440 + $0x14] sm:$0xf]
      %v3447 = vld [vmem:[%s3440 + $0x18] sm:$0xf]
      %v3448 = vld [vmem:[%s3440 + $0x1c] sm:$0xf]
      %v3457 = vunpack.c.l.b16 %v3441
      %v3458 = vunpack.c.l.b16 %v3442
      %v3459 = vunpack.c.l.b16 %v3443
      %v3460 = vunpack.c.l.b16 %v3444
      %v3461 = vunpack.c.l.b16 %v3445
      %v3462 = vunpack.c.l.b16 %v3446
      %v3463 = vunpack.c.l.b16 %v3447
      %v3464 = vunpack.c.l.b16 %v3448
      %v3465 = vpack.c.b16 %v3458, %v3457
      %v3466 = vpack.c.b16 %v3460, %v3459
      %v3467 = vpack.c.b16 %v3462, %v3461
      %v3468 = vpack.c.b16 %v3464, %v3463
      %v3470 = vsel %vm1840, %v3465, 0
      %v3473 = vsel %vm1840, %v3466, 0
      %v3476 = vsel %vm1840, %v3467, 0
      %v3479 = vsel %vm1840, %v3468, 0
      %3481 = vmatprep.subr.bf16.mxu0 0
      %3482 = vmatpush1.bf16.msra.mxu0 %v3434
      %3483 = vmatprep.subr.bf16.mxu0 0
      %3484 = vmatpush1.bf16.msra.mxu0 %v3435
      %3485 = vmatprep.subr.bf16.mxu0 0
      %3486 = vmatpush1.bf16.msra.mxu0 %v3436
      %3487 = vmatprep.subr.bf16.mxu0 0
      %3488 = vmatpush1.bf16.msra.mxu0 %v3437
      %3489 = vmatprep.subr.bf16.mxu0 0
      %3490 = vmatpush1.bf16.msra.mxu0 %v3438
      %3491 = vmatprep.subr.bf16.mxu0 0
      %3492 = vmatpush1.bf16.msra.mxu0 %v3439
      %3493 = vmatprep.subr.bf16.mxu0 0
      %3494 = vmatpush1.bf16.msra.mxu0 0
      %3495 = vmatprep.subr.bf16.mxu0 0
      %3496 = vmatpush1.bf16.msra.mxu0 0
      %3497 = vmatprep.subr.bf16.mxu0 0
      %3498 = vmatpush1.bf16.msra.mxu0 0
      %3499 = vmatprep.subr.bf16.mxu0 0
      %3500 = vmatpush1.bf16.msra.mxu0 0
      %3501 = vmatprep.subr.bf16.mxu0 0
      %3502 = vmatpush1.bf16.msra.mxu0 0
      %3503 = vmatprep.subr.bf16.mxu0 0
      %3504 = vmatpush1.bf16.msra.mxu0 0
      %3505 = vmatprep.subr.bf16.mxu0 0
      %3506 = vmatpush1.bf16.msra.mxu0 0
      %3507 = vmatprep.subr.bf16.mxu0 0
      %3508 = vmatpush1.bf16.msra.mxu0 0
      %3509 = vmatprep.subr.bf16.mxu0 0
      %3510 = vmatpush1.bf16.msra.mxu0 0
      %3511 = vmatprep.subr.bf16.mxu0 0
      %3512 = vmatpush1.bf16.msra.mxu0 0
      %3513 = vmatprep.mubr.bf16.mxu0 0
      %3514 = vmatmul.mubr.bf16.gmra.mrb[0].mxu0 %v3470
      %v3515 = vpop.f32.mrb[0].mxu0
      %v3516 = vadd.f32 %v2142, %v3515
      %v3517 = vpop.f32.mrb[0].mxu0
      %v3518 = vpop.f32.mrb[0].mxu0
      %v3519 = vadd.f32 %v2145, %v3518
      %v3520 = vpop.f32.mrb[0].mxu0
      %3521 = vmatprep.mubr.bf16.mxu0 0
      %3522 = vmatmul.mubr.bf16.gmra.mrb[0].mxu0 %v3473
      %v3523 = vpop.f32.mrb[0].mxu0
      %v3524 = vadd.f32 %v2150, %v3523
      %v3525 = vpop.f32.mrb[0].mxu0
      %v3526 = vpop.f32.mrb[0].mxu0
      %v3527 = vadd.f32 %v2153, %v3526
      %v3528 = vpop.f32.mrb[0].mxu0
      %3529 = vmatprep.mubr.bf16.mxu0 0
      %3530 = vmatmul.mubr.bf16.gmra.mrb[0].mxu0 %v3476
      %v3531 = vpop.f32.mrb[0].mxu0
      %v3532 = vadd.f32 %v2158, %v3531
      %v3533 = vpop.f32.mrb[0].mxu0
      %v3534 = vpop.f32.mrb[0].mxu0
      %v3535 = vadd.f32 %v2161, %v3534
      %v3536 = vpop.f32.mrb[0].mxu0
      %3537 = vmatprep.mubr.bf16.mxu0 0
      %3538 = vmatmul.mubr.bf16.gmra.mrb[0].mxu0 %v3479
      %v3539 = vpop.f32.mrb[0].mxu0
      %v3540 = vadd.f32 %v2166, %v3539
      %v3541 = vpop.f32.mrb[0].mxu0
      %v3542 = vpop.f32.mrb[0].mxu0
      %v3543 = vadd.f32 %v2169, %v3542
      %v3544 = vpop.f32.mrb[0].mxu0
      %3545 = vdwg.mxu0
      %s3546 = scalar_lea.vmem %s20, 192
      %v3547 = vld [vmem:[%s3546] sm:$0xff]
      %v3548 = vld [vmem:[%s3546 + $0x8] sm:$0xff]
      %v3549 = vld [vmem:[%s3546 + $0x10] sm:$0xff]
      %v3550 = vld [vmem:[%s3546 + $0x18] sm:$0xff]
      %v3551 = vld [vmem:[%s3546 + $0x20] sm:$0xff]
      %v3552 = vld [vmem:[%s3546 + $0x28] sm:$0xff]
      %v3553 = vld [vmem:[%s3546 + $0x30] sm:$0xff]
      %v3554 = vld [vmem:[%s3546 + $0x38] sm:$0xff]
      %3556 = vset.pattern.permute.xlu0 0
      %3557 = vperm.xlu0 %3556, %v3547
      %v3558 = vpop.permute.xlu0 %3557
      %3561 = vset.pattern.permute.xlu0 0
      %3562 = vperm.xlu0 %3561, %v3548
      %v3563 = vpop.permute.xlu0 %3562
      %3566 = vset.pattern.permute.xlu0 0
      %3567 = vperm.xlu0 %3566, %v3549
      %v3568 = vpop.permute.xlu0 %3567
      %3571 = vset.pattern.permute.xlu0 0
      %3572 = vperm.xlu0 %3571, %v3550
      %v3573 = vpop.permute.xlu0 %3572
      %3576 = vset.pattern.permute.xlu0 0
      %3577 = vperm.xlu0 %3576, %v3551
      %v3578 = vpop.permute.xlu0 %3577
      %3581 = vset.pattern.permute.xlu0 0
      %3582 = vperm.xlu0 %3581, %v3552
      %v3583 = vpop.permute.xlu0 %3582
      %3586 = vset.pattern.permute.xlu0 0
      %3587 = vperm.xlu0 %3586, %v3553
      %v3588 = vpop.permute.xlu0 %3587
      %3591 = vset.pattern.permute.xlu0 0
      %3592 = vperm.xlu0 %3591, %v3554
      %v3593 = vpop.permute.xlu0 %3592
      %v3595 = vadd.f32 %v3516, %v3558
      %v3596 = vadd.f32 %v3519, %v3563
      %v3597 = vadd.f32 %v3524, %v3568
      %v3598 = vadd.f32 %v3527, %v3573
      %v3599 = vadd.f32 %v3532, %v3578
      %v3600 = vadd.f32 %v3535, %v3583
      %v3601 = vadd.f32 %v3540, %v3588
      %v3602 = vadd.f32 %v3543, %v3593
      %v3603 = vpack.c.bf16 %v3596, %v3595
      %v3604 = vpack.c.bf16 %v3598, %v3597
      %v3605 = vpack.c.bf16 %v3600, %v3599
      %v3606 = vpack.c.bf16 %v3602, %v3601
      %v3607 = vxor.u32 %v3603, 2147516416
      %v3608 = vxor.u32 %v3604, 2147516416
      %v3610 = vmul.bf16 %v3607, 1069105081
      %v3611 = vpow.bf16.pop %v3610
      %v3613 = vmul.bf16 %v3608, 1069105081
      %v3614 = vpow.bf16.pop %v3613
      %v3615 = vadd.bf16 %v3611, 1065369472
      %v3616 = vadd.bf16 %v3614, 1065369472
      %v3617 = vrcp.bf16.pop %v3615
      %v3618 = vmul.bf16 1065369472, %v3617
      %v3619 = vrcp.bf16.pop %v3616
      %v3620 = vmul.bf16 1065369472, %v3619
      %v3621 = vtanh.bf16.pop %v3605
      %v3622 = vtanh.bf16.pop %v3606
      %v3623 = vmul.bf16 %v3618, %v3621
      %v3624 = vmul.bf16 %v3620, %v3622
      %s3625 = scalar_lea.vmem %s21, 96
      %v3626 = vld [vmem:[%s3625] sm:$0xf]
      %v3627 = vld [vmem:[%s3625 + $0x4] sm:$0xf]
      %v3628 = vld [vmem:[%s3625 + $0x8] sm:$0xf]
      %v3629 = vld [vmem:[%s3625 + $0xc] sm:$0xf]
      %v3630 = vld [vmem:[%s3625 + $0x10] sm:$0xf]
      %v3631 = vld [vmem:[%s3625 + $0x14] sm:$0xf]
      %v3632 = vld [vmem:[%s3625 + $0x18] sm:$0xf]
      %v3633 = vld [vmem:[%s3625 + $0x1c] sm:$0xf]
      %s3634 = scalar_lea.vmem %s22, 192
      %v3635 = vld [vmem:[%s3634] sm:$0xff]
      %v3636 = vld [vmem:[%s3634 + $0x8] sm:$0xff]
      %v3637 = vld [vmem:[%s3634 + $0x10] sm:$0xff]
      %v3638 = vld [vmem:[%s3634 + $0x18] sm:$0xff]
      %v3639 = vld [vmem:[%s3634 + $0x20] sm:$0xff]
      %v3640 = vld [vmem:[%s3634 + $0x28] sm:$0xff]
      %v3641 = vld [vmem:[%s3634 + $0x30] sm:$0xff]
      %v3642 = vld [vmem:[%s3634 + $0x38] sm:$0xff]
      %3644 = vset.pattern.permute.xlu0 0
      %3645 = vperm.xlu0 %3644, %v3635
      %v3646 = vpop.permute.xlu0 %3645
      %3648 = vset.pattern.permute.xlu0 0
      %3649 = vperm.xlu0 %3648, %v3636
      %v3650 = vpop.permute.xlu0 %3649
      %3652 = vset.pattern.permute.xlu0 0
      %3653 = vperm.xlu0 %3652, %v3637
      %v3654 = vpop.permute.xlu0 %3653
      %3656 = vset.pattern.permute.xlu0 0
      %3657 = vperm.xlu0 %3656, %v3638
      %v3658 = vpop.permute.xlu0 %3657
      %3660 = vset.pattern.permute.xlu0 0
      %3661 = vperm.xlu0 %3660, %v3639
      %v3662 = vpop.permute.xlu0 %3661
      %3665 = vset.pattern.permute.xlu0 0
      %3666 = vperm.xlu0 %3665, %v3640
      %v3667 = vpop.permute.xlu0 %3666
      %3670 = vset.pattern.permute.xlu0 0
      %3671 = vperm.xlu0 %3670, %v3641
      %v3672 = vpop.permute.xlu0 %3671
      %3675 = vset.pattern.permute.xlu0 0
      %3676 = vperm.xlu0 %3675, %v3642
      %v3677 = vpop.permute.xlu0 %3676
      %v3687 = vunpack.c.l.b16 %v3626
      %v3688 = vunpack.c.l.b16 %v3627
      %v3689 = vunpack.c.l.b16 %v3628
      %v3690 = vunpack.c.l.b16 %v3629
      %v3691 = vunpack.c.l.b16 %v3630
      %v3692 = vunpack.c.l.b16 %v3631
      %v3693 = vunpack.c.l.b16 %v3632
      %v3694 = vunpack.c.l.b16 %v3633
      %v3695 = vpack.c.b16 %v3688, %v3687
      %v3696 = vpack.c.b16 %v3690, %v3689
      %v3697 = vpack.c.b16 %v3692, %v3691
      %v3698 = vpack.c.b16 %v3694, %v3693
      %v3700 = vsel %vm1444, %v3695, 0
      %v3703 = vsel %vm1444, %v3696, 0
      %v3706 = vsel %vm1444, %v3697, 0
      %v3709 = vsel %vm1444, %v3698, 0
      %3711 = vmatprep.subr.bf16.mxu0 0
      %3712 = vmatpush1.bf16.msra.mxu0 %v3623
      %3713 = vmatprep.subr.bf16.mxu0 0
      %3714 = vmatpush1.bf16.msra.mxu0 %v3624
      %3715 = vmatprep.subr.bf16.mxu0 0
      %3716 = vmatpush1.bf16.msra.mxu0 0
      %3717 = vmatprep.subr.bf16.mxu0 0
      %3718 = vmatpush1.bf16.msra.mxu0 0
      %3719 = vmatprep.subr.bf16.mxu0 0
      %3720 = vmatpush1.bf16.msra.mxu0 0
      %3721 = vmatprep.subr.bf16.mxu0 0
      %3722 = vmatpush1.bf16.msra.mxu0 0
      %3723 = vmatprep.subr.bf16.mxu0 0
      %3724 = vmatpush1.bf16.msra.mxu0 0
      %3725 = vmatprep.subr.bf16.mxu0 0
      %3726 = vmatpush1.bf16.msra.mxu0 0
      %3727 = vmatprep.subr.bf16.mxu0 0
      %3728 = vmatpush1.bf16.msra.mxu0 0
      %3729 = vmatprep.subr.bf16.mxu0 0
      %3730 = vmatpush1.bf16.msra.mxu0 0
      %3731 = vmatprep.subr.bf16.mxu0 0
      %3732 = vmatpush1.bf16.msra.mxu0 0
      %3733 = vmatprep.subr.bf16.mxu0 0
      %3734 = vmatpush1.bf16.msra.mxu0 0
      %3735 = vmatprep.subr.bf16.mxu0 0
      %3736 = vmatpush1.bf16.msra.mxu0 0
      %3737 = vmatprep.subr.bf16.mxu0 0
      %3738 = vmatpush1.bf16.msra.mxu0 0
      %3739 = vmatprep.subr.bf16.mxu0 0
      %3740 = vmatpush1.bf16.msra.mxu0 0
      %3741 = vmatprep.subr.bf16.mxu0 0
      %3742 = vmatpush1.bf16.msra.mxu0 0
      %3743 = vmatprep.mubr.bf16.mxu0 0
      %3744 = vmatmul.mubr.bf16.gmra.mrb[0].mxu0 %v3700
      %v3745 = vpop.f32.mrb[0].mxu0
      %v3746 = vpop.f32.mrb[0].mxu0
      %v3747 = vpop.f32.mrb[0].mxu0
      %v3748 = vpop.f32.mrb[0].mxu0
      %3749 = vmatprep.mubr.bf16.mxu0 0
      %3750 = vmatmul.mubr.bf16.gmra.mrb[0].mxu0 %v3703
      %v3751 = vpop.f32.mrb[0].mxu0
      %v3752 = vpop.f32.mrb[0].mxu0
      %v3753 = vpop.f32.mrb[0].mxu0
      %v3754 = vpop.f32.mrb[0].mxu0
      %3755 = vmatprep.mubr.bf16.mxu0 0
      %3756 = vmatmul.mubr.bf16.gmra.mrb[0].mxu0 %v3706
      %v3757 = vpop.f32.mrb[0].mxu0
      %v3758 = vadd.f32 %v3662, %v3757
      %v3759 = vpop.f32.mrb[0].mxu0
      %v3760 = vpop.f32.mrb[0].mxu0
      %v3761 = vadd.f32 %v3667, %v3760
      %v3762 = vpop.f32.mrb[0].mxu0
      %3763 = vmatprep.mubr.bf16.mxu0 0
      %3764 = vmatmul.mubr.bf16.gmra.mrb[0].mxu0 %v3709
      %v3765 = vpop.f32.mrb[0].mxu0
      %v3766 = vadd.f32 %v3672, %v3765
      %v3767 = vpop.f32.mrb[0].mxu0
      %v3768 = vpop.f32.mrb[0].mxu0
      %v3769 = vadd.f32 %v3677, %v3768
      %v3770 = vpop.f32.mrb[0].mxu0
      %3771 = vdwg.mxu0
      %v3772 = vadd.f32 %v3382, %v3758
      %v3773 = vadd.f32 %v3383, %v3761
      %v3774 = vadd.f32 %v3384, %v3766
      %v3775 = vadd.f32 %v3385, %v3769
      %v3776 = vmul.f32 %v3772, 0.5
      %v3777 = vmul.f32 %v3773, 0.5
      %v3778 = vmul.f32 %v3774, 0.5
      %v3779 = vmul.f32 %v3775, 0.5
      %v3780 = vpack.c.bf16 %v3777, %v3776
      %v3781 = vpack.c.bf16 %v3779, %v3778
      %v3782 = vld [vmem:[%s23] sm:$0xf]
      %v3783 = vld [vmem:[%s23 + $0x4] sm:$0xf]
      %v3784 = vld [vmem:[%s23 + $0x8] sm:$0xf]
      %v3785 = vld [vmem:[%s23 + $0xc] sm:$0xf]
      %v3786 = vld [vmem:[%s24] sm:$0xff]
      %v3787 = vld [vmem:[%s24 + $0x8] sm:$0xff]
      %v3788 = vld [vmem:[%s24 + $0x10] sm:$0xff]
      %v3789 = vld [vmem:[%s24 + $0x18] sm:$0xff]
      %3791 = vset.pattern.permute.xlu0 0
      %3792 = vperm.xlu0 %3791, %v3786
      %v3793 = vpop.permute.xlu0 %3792
      %3796 = vset.pattern.permute.xlu0 0
      %3797 = vperm.xlu0 %3796, %v3787
      %v3798 = vpop.permute.xlu0 %3797
      %3801 = vset.pattern.permute.xlu0 0
      %3802 = vperm.xlu0 %3801, %v3788
      %v3803 = vpop.permute.xlu0 %3802
      %3806 = vset.pattern.permute.xlu0 0
      %3807 = vperm.xlu0 %3806, %v3789
      %v3808 = vpop.permute.xlu0 %3807
      %v3814 = vunpack.c.l.b16 %v3782
      %v3815 = vunpack.c.l.b16 %v3783
      %v3816 = vunpack.c.l.b16 %v3784
      %v3817 = vunpack.c.l.b16 %v3785
      %v3818 = vpack.c.b16 %v3815, %v3814
      %v3819 = vpack.c.b16 %v3817, %v3816
      %v3821 = vsel %vm1444, %v3818, 0
      %v3824 = vsel %vm1444, %v3819, 0
      %3826 = vmatprep.subr.bf16.mxu0 0
      %3827 = vmatpush1.bf16.msra.mxu0 %v3780
      %3828 = vmatprep.subr.bf16.mxu0 0
      %3829 = vmatpush1.bf16.msra.mxu0 %v3781
      %3830 = vmatprep.subr.bf16.mxu0 0
      %3831 = vmatpush1.bf16.msra.mxu0 0
      %3832 = vmatprep.subr.bf16.mxu0 0
      %3833 = vmatpush1.bf16.msra.mxu0 0
      %3834 = vmatprep.subr.bf16.mxu0 0
      %3835 = vmatpush1.bf16.msra.mxu0 0
      %3836 = vmatprep.subr.bf16.mxu0 0
      %3837 = vmatpush1.bf16.msra.mxu0 0
      %3838 = vmatprep.subr.bf16.mxu0 0
      %3839 = vmatpush1.bf16.msra.mxu0 0
      %3840 = vmatprep.subr.bf16.mxu0 0
      %3841 = vmatpush1.bf16.msra.mxu0 0
      %3842 = vmatprep.subr.bf16.mxu0 0
      %3843 = vmatpush1.bf16.msra.mxu0 0
      %3844 = vmatprep.subr.bf16.mxu0 0
      %3845 = vmatpush1.bf16.msra.mxu0 0
      %3846 = vmatprep.subr.bf16.mxu0 0
      %3847 = vmatpush1.bf16.msra.mxu0 0
      %3848 = vmatprep.subr.bf16.mxu0 0
      %3849 = vmatpush1.bf16.msra.mxu0 0
      %3850 = vmatprep.subr.bf16.mxu0 0
      %3851 = vmatpush1.bf16.msra.mxu0 0
      %3852 = vmatprep.subr.bf16.mxu0 0
      %3853 = vmatpush1.bf16.msra.mxu0 0
      %3854 = vmatprep.subr.bf16.mxu0 0
      %3855 = vmatpush1.bf16.msra.mxu0 0
      %3856 = vmatprep.subr.bf16.mxu0 0
      %3857 = vmatpush1.bf16.msra.mxu0 0
      %3858 = vmatprep.mubr.bf16.mxu0 0
      %3859 = vmatmul.mubr.bf16.gmra.mrb[0].mxu0 %v3821
      %v3860 = vpop.f32.mrb[0].mxu0
      %v3861 = vadd.f32 %v3793, %v3860
      %v3862 = vpop.f32.mrb[0].mxu0
      %v3863 = vpop.f32.mrb[0].mxu0
      %v3864 = vadd.f32 %v3798, %v3863
      %v3865 = vpop.f32.mrb[0].mxu0
      %3866 = vmatprep.mubr.bf16.mxu0 0
      %3867 = vmatmul.mubr.bf16.gmra.mrb[0].mxu0 %v3824
      %v3868 = vpop.f32.mrb[0].mxu0
      %v3869 = vadd.f32 %v3803, %v3868
      %v3870 = vpop.f32.mrb[0].mxu0
      %v3871 = vpop.f32.mrb[0].mxu0
      %v3872 = vadd.f32 %v3808, %v3871
      %v3873 = vpop.f32.mrb[0].mxu0
      %3874 = vdwg.mxu0
      %v3875 = vpack.c.bf16 %v3864, %v3861
      %v3876 = vpack.c.bf16 %v3872, %v3869
      %v3877 = vxor.u32 %v3875, 2147516416
      %v3878 = vxor.u32 %v3876, 2147516416
      %v3880 = vmul.bf16 %v3877, 1069105081
      %v3881 = vpow.bf16.pop %v3880
      %v3883 = vmul.bf16 %v3878, 1069105081
      %v3884 = vpow.bf16.pop %v3883
      %v3885 = vadd.bf16 %v3881, 1065369472
      %v3886 = vadd.bf16 %v3884, 1065369472
      %v3887 = vrcp.bf16.pop %v3885
      %v3888 = vmul.bf16 1065369472, %v3887
      %v3889 = vrcp.bf16.pop %v3886
      %v3890 = vmul.bf16 1065369472, %v3889
      %v3891 = vmul.bf16 %v3875, %v3888
      %v3892 = vmul.bf16 %v3876, %v3890
      %v3893 = vunpack.c.l.bf16 %v3891
      %v3894 = vunpack.c.h.bf16 %v3891
      %v3895 = vunpack.c.l.bf16 %v3892
      %v3896 = vunpack.c.h.bf16 %v3892
      %v3897 = vld [vmem:[%s25] sm:$0xff]
      %v3898 = vld [vmem:[%s25 + $0x8] sm:$0xff]
      %v3899 = vld [vmem:[%s25 + $0x10] sm:$0xff]
      %v3900 = vld [vmem:[%s25 + $0x18] sm:$0xff]
      %3902 = vset.pattern.permute.xlu0 0
      %3903 = vperm.xlu0 %3902, %v3897
      %v3904 = vpop.permute.xlu0 %3903
      %3907 = vset.pattern.permute.xlu0 0
      %3908 = vperm.xlu0 %3907, %v3898
      %v3909 = vpop.permute.xlu0 %3908
      %3912 = vset.pattern.permute.xlu0 0
      %3913 = vperm.xlu0 %3912, %v3899
      %v3914 = vpop.permute.xlu0 %3913
      %3917 = vset.pattern.permute.xlu0 0
      %3918 = vperm.xlu0 %3917, %v3900
      %v3919 = vpop.permute.xlu0 %3918
      %v3921 = vmul.f32 %v3904, %v3893
      %v3922 = vmul.f32 %v3909, %v3894
      %v3923 = vmul.f32 %v3914, %v3895
      %v3924 = vmul.f32 %v3919, %v3896
      %v3925 = vadd.f32 %v3921, %v3922
      %v3926 = vadd.f32 %v3925, %v3923
      %v3927 = vadd.f32 %v3926, %v3924
      %v3928 = vrot.slane %v3927, 4
      %v3929 = vadd.f32 %v3927, %v3928
      %v3930 = vrot.slane %v3929, 2
      %v3931 = vadd.f32 %v3929, %v3930
      %v3932 = vrot.slane %v3931, 1
      %v3933 = vadd.f32 %v3931, %v3932
      %v3934 = vld [vmem:[#allocation2] sm:$0x1]
      %3936 = vset.pattern.permute.xlu0 0
      %3937 = vperm.xlu0 %3936, %v3934
      %v3938 = vpop.permute.xlu0 %3937
      %v3940 = vlaneseq
      %v3941 = vshrl.u32 %v3940, 7
      %v3942 = vsub.s32 0, %v3941
      %v3943 = vrot.slane %v3938, %v3942
      %v3944 = vadd.f32 %v3933, %v3943
      %v3945 = vsub.f32 %v3944, %v874
      %v3946 = vand.u32 2147483647, %v3945
      %vm3947 = vcmask 1040384
      %v3948 = vsel %vm3947, %v3946, 0.0
      %3949 = vadd.xlane.f32.xlu0 %v3948
      %v3950 = vpop.xlane.xlu0 %3949
      %v3951 = vrcp.pop 128.0
      %v3952 = vmul.f32 %v3950, %v3951
      %v3953 = vmax.f32 %v3952, 1e-20
      %v3954 = vlog2.pop %v3953
      %v3955 = vmul.f32 %v3954, 0.6931472
      %vm3956 = vcmask 0
      %3957 = vst.msk [vmem:[%s869] sm:$0x1] %vm3956, %v3955
      %p3958 = scmp.lt.s32.totalorder %s40, 1
      %s3959 = scalar_select %p3958, %s40, 1
      %s3960 = scalar_lea.vmem %s27, %s3959
      // Predicated region
      $region129: #{diffnilm_forward_train.1} parent=127 // pred_check
        %p3961 = pneg %p650
      $region130: #{diffnilm_forward_train.1} parent=127 // pred_check_branch
        %3963 = sbr.rel (%p3961) target = $region132
      $region131: #{diffnilm_forward_train.1} parent=127 // pred_region
        _
      $region132: #{diffnilm_forward_train.1} parent=127 // pred_fallthru
        _
    $region128: #{diffnilm_forward_train.1} parent=5 // pred_fallthru
      _
    %p3964 = scmp.le.s32.totalorder 2, %s35
    // Predicated region
    $region133: #{diffnilm_forward_train.1} parent=5 // pred_check
      %p3965 = pneg %p3964
    $region134: #{diffnilm_forward_train.1} parent=5 // pred_check_branch
      %3967 = sbr.rel (%p3965) target = $region136
    $region135: #{diffnilm_forward_train.1} parent=5 // pred_region
      %s3968 = ssub.s32 %s35, 2
      // Predicated region
      $region137: #{diffnilm_forward_train.1} parent=135 // pred_check
        %p3969 = pneg %p656
      $region138: #{diffnilm_forward_train.1} parent=135 // pred_check_branch
        %3971 = sbr.rel (%p3969) target = $region140
      $region139: #{diffnilm_forward_train.1} parent=135 // pred_region
        %p3972 = scmp.lt.s32.totalorder %s41, 1
        %s3973 = scalar_select %p3972, %s41, 1
        %s3974 = scalar_lea.vmem %s27, %s3973
      $region140: #{diffnilm_forward_train.1} parent=135 // pred_fallthru
        _
    $region136: #{diffnilm_forward_train.1} parent=5 // pred_fallthru
      _
  $region6: #{diffnilm_forward_train.1} parent=0 // loop_footer
    %s39 = sadd.s32 1, %s35
  $region7: #{diffnilm_forward_train.1} parent=0 // loop_footer_branch
    %34 = sbr.rel target = $region3
  $region8: #{diffnilm_forward_train.1} parent=0 // loop_exit
    _

</llo_original>
